<compile_context>
chip_gen: v6e
topology: v6e:2x2x1
jax: 0.10.0
libtpu: 0.0.40
codegen_flags: <defaults>
</compile_context>

<pallas_src>
import jax
import jax.numpy as jnp
from jax.experimental import pallas as pl
from jax.experimental.pallas import tpu as pltpu

TILE_B = 128   # rows per grid step (>= MXU height; use 256 on v6e/v7x if desired)
LANE = 128     # lane-dense output slab width


def _leaky_relu(h, slope=0.2):
    return jnp.where(h >= 0.0, h, slope * h)


def discriminator_kernel(x_ref, m1_ref, m2_ref, m3_ref,
                         w1_ref, b1_ref, w2_ref, b2_ref,
                         w3_ref, b3_ref, w4_ref, b4_ref,
                         out_ref):
    # fc1..fc3: bf16 inputs -> MXU, f32 accumulation; elementwise stays f32.
    h = jnp.dot(x_ref[...].astype(jnp.bfloat16), w1_ref[...],
                preferred_element_type=jnp.float32) + b1_ref[...]
    h = _leaky_relu(h) * m1_ref[...]          # inverted dropout (p=0.3)

    h = jnp.dot(h.astype(jnp.bfloat16), w2_ref[...],
                preferred_element_type=jnp.float32) + b2_ref[...]
    h = _leaky_relu(h) * m2_ref[...]

    h = jnp.dot(h.astype(jnp.bfloat16), w3_ref[...],
                preferred_element_type=jnp.float32) + b3_ref[...]
    h = _leaky_relu(h) * m3_ref[...]

    # fc4 (K=256, N=1): VPU multiply + lane reduce instead of a 256x1 MXU matmul.
    logit = jnp.sum(h * w4_ref[...], axis=-1, keepdims=True) + b4_ref[...]
    prob = jax.nn.sigmoid(logit)              # (TILE_B, 1)

    # Lane-dense store: fill a (TILE_B, 128) slab; wrapper slices column 0.
    out_ref[...] = jnp.broadcast_to(prob, out_ref.shape)


@jax.jit
def discriminator_forward(x, m1, m2, m3, w1, b1, w2, b2, w3, b3, w4, b4):
    batch, d_in = x.shape
    h1 = w1.shape[1]
    h2 = w2.shape[1]
    h3 = w3.shape[1]

    # Pad batch up to a multiple of TILE_B so every grid step is full-height.
    b_pad = ((batch + TILE_B - 1) // TILE_B) * TILE_B
    pad = b_pad - batch
    if pad:
        x = jnp.pad(x, ((0, pad), (0, 0)))
        m1 = jnp.pad(m1, ((0, pad), (0, 0)))
        m2 = jnp.pad(m2, ((0, pad), (0, 0)))
        m3 = jnp.pad(m3, ((0, pad), (0, 0)))
    num_tiles = b_pad // TILE_B

    def row_spec(width):          # batch-tiled activations
        return pl.BlockSpec((TILE_B, width), lambda i: (i, 0))

    def const_spec(shape):        # VMEM-resident parameters (DMA'd once)
        return pl.BlockSpec(shape, lambda i: (0, 0))

    out = pl.pallas_call(
        discriminator_kernel,
        out_shape=jax.ShapeDtypeStruct((b_pad, LANE), jnp.float32),
        grid=(num_tiles,),
        in_specs=[
            row_spec(d_in), row_spec(h1), row_spec(h2), row_spec(h3),
            const_spec(w1.shape), const_spec(b1.shape),
            const_spec(w2.shape), const_spec(b2.shape),
            const_spec(w3.shape), const_spec(b3.shape),
            const_spec(w4.shape), const_spec(b4.shape),
        ],
        out_specs=row_spec(LANE),
        compiler_params=pltpu.CompilerParams(
            dimension_semantics=("parallel",)),
    )(x, m1, m2, m3, w1, b1, w2, b2, w3, b3, w4, b4)

    return out[:batch, :1]


def init_linear(key, fan_in, fan_out, w_dtype=jnp.bfloat16):
    """PyTorch nn.Linear default init: U(-1/sqrt(fan_in), 1/sqrt(fan_in)).

    Stored as (in, out) so the kernel computes x @ W; weights are cast to
    bf16 for the MXU path (biases stay f32).
    """
    kw, kb = jax.random.split(key)
    bound = 1.0 / (fan_in ** 0.5)
    w = jax.random.uniform(kw, (fan_in, fan_out), jnp.float32, -bound, bound)
    b = jax.random.uniform(kb, (1, fan_out), jnp.float32, -bound, bound)
    return w.astype(w_dtype), b


def make_dropout_masks(key, batch, dims, p=0.3):
    """Inverted-dropout masks: 0 with prob p, else 1/(1-p)."""
    keys = jax.random.split(key, len(dims))
    scale = 1.0 / (1.0 - p)
    return [jax.random.bernoulli(k, 1.0 - p, (batch, d)).astype(jnp.float32) * scale
            for k, d in zip(keys, dims)]


if __name__ == "__main__":
    d_input_dim = 128      # small flattened-image dim (module works for any d_input_dim)
    batch = 8

    key = jax.random.PRNGKey(0)
    k_x, k1, k2, k3, k4, k_drop = jax.random.split(key, 6)

    x = jax.random.normal(k_x, (batch, d_input_dim), jnp.float32)

    w1, b1 = init_linear(k1, d_input_dim, 1024)
    w2, b2 = init_linear(k2, 1024, 512)
    w3, b3 = init_linear(k3, 512, 256)
    w4_col, b4 = init_linear(k4, 256, 1, w_dtype=jnp.float32)  # VPU path: keep f32
    w4 = w4_col.T                                              # (1, 256) row

    m1, m2, m3 = make_dropout_masks(k_drop, batch, (1024, 512, 256), p=0.3)

    out = discriminator_forward(x, m1, m2, m3, w1, b1, w2, b2, w3, b3, w4, b4)
    out = jax.block_until_ready(out)

    assert out.shape == (batch, 1)
    assert bool(jnp.all((out >= 0.0) & (out <= 1.0)))

    print("KERNEL_OK")
</pallas_src>

<mosaic_0001>
module attributes {stable_mosaic.version = 11 : i64} {
  func.func @discriminator_kernel(%arg0: i32, %arg1: memref<128x128xf32, #tpu.memory_space<vmem>>, %arg2: memref<128x1024xf32, #tpu.memory_space<vmem>>, %arg3: memref<128x512xf32, #tpu.memory_space<vmem>>, %arg4: memref<128x256xf32, #tpu.memory_space<vmem>>, %arg5: memref<128x1024xbf16, #tpu.memory_space<vmem>>, %arg6: memref<1x1024xf32, #tpu.memory_space<vmem>>, %arg7: memref<1024x512xbf16, #tpu.memory_space<vmem>>, %arg8: memref<1x512xf32, #tpu.memory_space<vmem>>, %arg9: memref<512x256xbf16, #tpu.memory_space<vmem>>, %arg10: memref<1x256xf32, #tpu.memory_space<vmem>>, %arg11: memref<1x256xf32, #tpu.memory_space<vmem>>, %arg12: memref<1x1xf32, #tpu.memory_space<vmem>>, %arg13: memref<128x128xf32, #tpu.memory_space<vmem>>) attributes {dimension_semantics = [#tpu.dimension_semantics<parallel>], iteration_bounds = array<i64: 1>, scalar_prefetch = 0 : i64, scratch_operands = 0 : i64, tpu.core_type = #tpu.core_type<tc>, window_params = [{transform_indices = @transform_0, window_bounds = array<i64: 128, 128>}, {transform_indices = @transform_1, window_bounds = array<i64: 128, 1024>}, {transform_indices = @transform_2, window_bounds = array<i64: 128, 512>}, {transform_indices = @transform_3, window_bounds = array<i64: 128, 256>}, {pipeline_mode = #tpu.pipeline_mode<synchronous>, transform_indices = @transform_4, window_bounds = array<i64: 128, 1024>}, {pipeline_mode = #tpu.pipeline_mode<synchronous>, transform_indices = @transform_5, window_bounds = array<i64: 1, 1024>}, {pipeline_mode = #tpu.pipeline_mode<synchronous>, transform_indices = @transform_6, window_bounds = array<i64: 1024, 512>}, {pipeline_mode = #tpu.pipeline_mode<synchronous>, transform_indices = @transform_7, window_bounds = array<i64: 1, 512>}, {pipeline_mode = #tpu.pipeline_mode<synchronous>, transform_indices = @transform_8, window_bounds = array<i64: 512, 256>}, {pipeline_mode = #tpu.pipeline_mode<synchronous>, transform_indices = @transform_9, window_bounds = array<i64: 1, 256>}, {pipeline_mode = #tpu.pipeline_mode<synchronous>, transform_indices = @transform_10, window_bounds = array<i64: 1, 256>}, {pipeline_mode = #tpu.pipeline_mode<synchronous>, transform_indices = @transform_11, window_bounds = array<i64: 1, 1>}, {transform_indices = @transform_12, window_bounds = array<i64: 128, 128>}]} {
    %c0 = arith.constant 0 : index
    %c0_0 = arith.constant 0 : index
    %0 = vector.load %arg1[%c0, %c0_0] : memref<128x128xf32, #tpu.memory_space<vmem>>, vector<128x128xf32>
    %1 = arith.truncf %0 : vector<128x128xf32> to vector<128x128xbf16>
    %c0_1 = arith.constant 0 : index
    %c0_2 = arith.constant 0 : index
    %2 = vector.load %arg5[%c0_1, %c0_2] : memref<128x1024xbf16, #tpu.memory_space<vmem>>, vector<128x1024xbf16>
    %cst = arith.constant dense<0.000000e+00> : vector<128x1024xf32>
    %3 = tpu.matmul %1, %2, %cst {dimension_numbers = #tpu.dot_dimension_numbers<[1], [0], [0], [1], [0, 0, 1, 1], [], []>} : vector<128x128xbf16>, vector<128x1024xbf16>, vector<128x1024xf32> -> vector<128x1024xf32>
    %c0_3 = arith.constant 0 : index
    %c0_4 = arith.constant 0 : index
    %4 = vector.load %arg6[%c0_3, %c0_4] : memref<1x1024xf32, #tpu.memory_space<vmem>>, vector<1x1024xf32>
    %5 = vector.broadcast %4 : vector<1x1024xf32> to vector<128x1024xf32>
    %6 = arith.addf %3, %5 : vector<128x1024xf32>
    %cst_5 = arith.constant 0.000000e+00 : f32
    %7 = vector.broadcast %cst_5 : f32 to vector<128x1024xf32>
    %8 = arith.cmpf oge, %6, %7 : vector<128x1024xf32>
    %cst_6 = arith.constant 2.000000e-01 : f32
    %9 = vector.broadcast %cst_6 : f32 to vector<128x1024xf32>
    %10 = arith.mulf %9, %6 : vector<128x1024xf32>
    %11 = arith.select %8, %6, %10 : vector<128x1024xi1>, vector<128x1024xf32>
    %c0_7 = arith.constant 0 : index
    %c0_8 = arith.constant 0 : index
    %12 = vector.load %arg2[%c0_7, %c0_8] : memref<128x1024xf32, #tpu.memory_space<vmem>>, vector<128x1024xf32>
    %13 = arith.mulf %11, %12 : vector<128x1024xf32>
    %14 = arith.truncf %13 : vector<128x1024xf32> to vector<128x1024xbf16>
    %c0_9 = arith.constant 0 : index
    %c0_10 = arith.constant 0 : index
    %15 = vector.load %arg7[%c0_9, %c0_10] : memref<1024x512xbf16, #tpu.memory_space<vmem>>, vector<1024x512xbf16>
    %cst_11 = arith.constant dense<0.000000e+00> : vector<128x512xf32>
    %16 = tpu.matmul %14, %15, %cst_11 {dimension_numbers = #tpu.dot_dimension_numbers<[1], [0], [0], [1], [0, 0, 1, 1], [], []>} : vector<128x1024xbf16>, vector<1024x512xbf16>, vector<128x512xf32> -> vector<128x512xf32>
    %c0_12 = arith.constant 0 : index
    %c0_13 = arith.constant 0 : index
    %17 = vector.load %arg8[%c0_12, %c0_13] : memref<1x512xf32, #tpu.memory_space<vmem>>, vector<1x512xf32>
    %18 = vector.broadcast %17 : vector<1x512xf32> to vector<128x512xf32>
    %19 = arith.addf %16, %18 : vector<128x512xf32>
    %cst_14 = arith.constant 0.000000e+00 : f32
    %20 = vector.broadcast %cst_14 : f32 to vector<128x512xf32>
    %21 = arith.cmpf oge, %19, %20 : vector<128x512xf32>
    %cst_15 = arith.constant 2.000000e-01 : f32
    %22 = vector.broadcast %cst_15 : f32 to vector<128x512xf32>
    %23 = arith.mulf %22, %19 : vector<128x512xf32>
    %24 = arith.select %21, %19, %23 : vector<128x512xi1>, vector<128x512xf32>
    %c0_16 = arith.constant 0 : index
    %c0_17 = arith.constant 0 : index
    %25 = vector.load %arg3[%c0_16, %c0_17] : memref<128x512xf32, #tpu.memory_space<vmem>>, vector<128x512xf32>
    %26 = arith.mulf %24, %25 : vector<128x512xf32>
    %27 = arith.truncf %26 : vector<128x512xf32> to vector<128x512xbf16>
    %c0_18 = arith.constant 0 : index
    %c0_19 = arith.constant 0 : index
    %28 = vector.load %arg9[%c0_18, %c0_19] : memref<512x256xbf16, #tpu.memory_space<vmem>>, vector<512x256xbf16>
    %cst_20 = arith.constant dense<0.000000e+00> : vector<128x256xf32>
    %29 = tpu.matmul %27, %28, %cst_20 {dimension_numbers = #tpu.dot_dimension_numbers<[1], [0], [0], [1], [0, 0, 1, 1], [], []>} : vector<128x512xbf16>, vector<512x256xbf16>, vector<128x256xf32> -> vector<128x256xf32>
    %c0_21 = arith.constant 0 : index
    %c0_22 = arith.constant 0 : index
    %30 = vector.load %arg10[%c0_21, %c0_22] : memref<1x256xf32, #tpu.memory_space<vmem>>, vector<1x256xf32>
    %31 = vector.broadcast %30 : vector<1x256xf32> to vector<128x256xf32>
    %32 = arith.addf %29, %31 : vector<128x256xf32>
    %cst_23 = arith.constant 0.000000e+00 : f32
    %33 = vector.broadcast %cst_23 : f32 to vector<128x256xf32>
    %34 = arith.cmpf oge, %32, %33 : vector<128x256xf32>
    %cst_24 = arith.constant 2.000000e-01 : f32
    %35 = vector.broadcast %cst_24 : f32 to vector<128x256xf32>
    %36 = arith.mulf %35, %32 : vector<128x256xf32>
    %37 = arith.select %34, %32, %36 : vector<128x256xi1>, vector<128x256xf32>
    %c0_25 = arith.constant 0 : index
    %c0_26 = arith.constant 0 : index
    %38 = vector.load %arg4[%c0_25, %c0_26] : memref<128x256xf32, #tpu.memory_space<vmem>>, vector<128x256xf32>
    %39 = arith.mulf %37, %38 : vector<128x256xf32>
    %c0_27 = arith.constant 0 : index
    %c0_28 = arith.constant 0 : index
    %40 = vector.load %arg11[%c0_27, %c0_28] : memref<1x256xf32, #tpu.memory_space<vmem>>, vector<1x256xf32>
    %41 = vector.broadcast %40 : vector<1x256xf32> to vector<128x256xf32>
    %42 = arith.mulf %39, %41 : vector<128x256xf32>
    %cst_29 = arith.constant dense<0.000000e+00> : vector<128xf32>
    %43 = vector.multi_reduction <add>, %42, %cst_29 [1] : vector<128x256xf32> to vector<128xf32>
    %44 = vector.shape_cast %43 : vector<128xf32> to vector<128x1xf32>
    %c0_30 = arith.constant 0 : index
    %c0_31 = arith.constant 0 : index
    %45 = vector.load %arg12[%c0_30, %c0_31] : memref<1x1xf32, #tpu.memory_space<vmem>>, vector<1x1xf32>
    %46 = vector.broadcast %45 : vector<1x1xf32> to vector<128x1xf32>
    %47 = arith.addf %44, %46 : vector<128x1xf32>
    %48 = arith.negf %47 : vector<128x1xf32>
    %49 = math.exp %48 : vector<128x1xf32>
    %cst_32 = arith.constant 1.000000e+00 : f32
    %50 = vector.broadcast %cst_32 : f32 to vector<128x1xf32>
    %51 = arith.addf %50, %49 : vector<128x1xf32>
    %52 = arith.divf %50, %51 : vector<128x1xf32>
    %53 = vector.shape_cast %52 : vector<128x1xf32> to vector<128x1xf32>
    %54 = vector.broadcast %53 : vector<128x1xf32> to vector<128x128xf32>
    %c0_33 = arith.constant 0 : index
    %c0_34 = arith.constant 0 : index
    %55 = vector.load %arg13[%c0_33, %c0_34] : memref<128x128xf32, #tpu.memory_space<vmem>>, vector<128x128xf32>
    tpu.vector_store %arg13[%c0_33, %c0_34], %54 {strides = array<i32>} : memref<128x128xf32, #tpu.memory_space<vmem>>, vector<128x128xf32>,
    return
  }
  func.func @transform_0(%arg0: i32) -> (i32, i32) {
    %c0_i32 = arith.constant 0 : i32
    %c0_i32_0 = arith.constant 0 : i32
    return %arg0, %c0_i32 : i32, i32
  }
  func.func @transform_1(%arg0: i32) -> (i32, i32) {
    %c0_i32 = arith.constant 0 : i32
    %c0_i32_0 = arith.constant 0 : i32
    return %arg0, %c0_i32 : i32, i32
  }
  func.func @transform_2(%arg0: i32) -> (i32, i32) {
    %c0_i32 = arith.constant 0 : i32
    %c0_i32_0 = arith.constant 0 : i32
    return %arg0, %c0_i32 : i32, i32
  }
  func.func @transform_3(%arg0: i32) -> (i32, i32) {
    %c0_i32 = arith.constant 0 : i32
    %c0_i32_0 = arith.constant 0 : i32
    return %arg0, %c0_i32 : i32, i32
  }
  func.func @transform_4(%arg0: i32) -> (i32, i32) {
    %c0_i32 = arith.constant 0 : i32
    %c0_i32_0 = arith.constant 0 : i32
    %c0_i32_1 = arith.constant 0 : i32
    return %c0_i32, %c0_i32_0 : i32, i32
  }
  func.func @transform_5(%arg0: i32) -> (i32, i32) {
    %c0_i32 = arith.constant 0 : i32
    %c0_i32_0 = arith.constant 0 : i32
    %c0_i32_1 = arith.constant 0 : i32
    return %c0_i32, %c0_i32_0 : i32, i32
  }
  func.func @transform_6(%arg0: i32) -> (i32, i32) {
    %c0_i32 = arith.constant 0 : i32
    %c0_i32_0 = arith.constant 0 : i32
    %c0_i32_1 = arith.constant 0 : i32
    return %c0_i32, %c0_i32_0 : i32, i32
  }
  func.func @transform_7(%arg0: i32) -> (i32, i32) {
    %c0_i32 = arith.constant 0 : i32
    %c0_i32_0 = arith.constant 0 : i32
    %c0_i32_1 = arith.constant 0 : i32
    return %c0_i32, %c0_i32_0 : i32, i32
  }
  func.func @transform_8(%arg0: i32) -> (i32, i32) {
    %c0_i32 = arith.constant 0 : i32
    %c0_i32_0 = arith.constant 0 : i32
    %c0_i32_1 = arith.constant 0 : i32
    return %c0_i32, %c0_i32_0 : i32, i32
  }
  func.func @transform_9(%arg0: i32) -> (i32, i32) {
    %c0_i32 = arith.constant 0 : i32
    %c0_i32_0 = arith.constant 0 : i32
    %c0_i32_1 = arith.constant 0 : i32
    return %c0_i32, %c0_i32_0 : i32, i32
  }
  func.func @transform_10(%arg0: i32) -> (i32, i32) {
    %c0_i32 = arith.constant 0 : i32
    %c0_i32_0 = arith.constant 0 : i32
    %c0_i32_1 = arith.constant 0 : i32
    return %c0_i32, %c0_i32_0 : i32, i32
  }
  func.func @transform_11(%arg0: i32) -> (i32, i32) {
    %c0_i32 = arith.constant 0 : i32
    %c0_i32_0 = arith.constant 0 : i32
    %c0_i32_1 = arith.constant 0 : i32
    return %c0_i32, %c0_i32_0 : i32, i32
  }
  func.func @transform_12(%arg0: i32) -> (i32, i32) {
    %c0_i32 = arith.constant 0 : i32
    %c0_i32_0 = arith.constant 0 : i32
    return %arg0, %c0_i32 : i32, i32
  }
}

</mosaic_0001>

<llo_original>
// kernel: discriminator_forward.1
$region0: #{discriminator_forward.1}
  #allocation0 [shape = 'u32[]', space=smem, size = 0x4, offset = 0x4, fixed_abs, tag = 'smem constant byte address 0x4 - core index']
  #allocation1 [shape = 'u32[144,128]{1,0:T(1,128)}', space=vmem, size = 0x12000, scoped, tag = 'internal scratch']
  #allocation2 [shape = 'f32[1,1]{1,0:T(1,128)S(1)}', space=vmem, size = 0x200, scoped, tag = 'scoped memory for discriminator_forward.1']
  %s0 = inlined_call_operand.vmem [shape: f32[128,128], index: 0, kind: input, shape index: {}]
  %s1 = inlined_call_operand.vmem [shape: f32[128,1024], index: 1, kind: input, shape index: {}]
  %s2 = inlined_call_operand.vmem [shape: f32[128,512], index: 2, kind: input, shape index: {}]
  %s3 = inlined_call_operand.vmem [shape: f32[128,256], index: 3, kind: input, shape index: {}]
  %s4 = inlined_call_operand.hbm [shape: bf16[128,1024], index: 4, kind: input, shape index: {}]
  %s5 = inlined_call_operand.vmem [shape: f32[1,1024], index: 5, kind: input, shape index: {}]
  %s6 = inlined_call_operand.vmem [shape: bf16[1024,512], index: 6, kind: input, shape index: {}]
  %s7 = inlined_call_operand.hbm [shape: f32[1,512], index: 7, kind: input, shape index: {}]
  %s8 = inlined_call_operand.hbm [shape: bf16[512,256], index: 8, kind: input, shape index: {}]
  %s9 = inlined_call_operand.hbm [shape: f32[1,256], index: 9, kind: input, shape index: {}]
  %s10 = inlined_call_operand.hbm [shape: f32[1,256], index: 10, kind: input, shape index: {}]
  %s11 = inlined_call_operand.<no memory space> [shape: f32[1,1], index: 11, kind: input, shape index: {}]
  %s12 = inlined_call_operand.vmem [shape: f32[128,128], index: 12, kind: output, shape index: {}]
  %s13 = sld [smem:[#allocation0]]
  $region78: #{discriminator_forward.1} parent=0
    _
  %s15 = ssub.s32 1, %s13
  %s16 = scalar_select 0, %s15, %s13
  %v17 = vstv %s11
  %18 = vst [vmem:[#allocation2] sm:$0x1] %v17
  $region1: #{discriminator_forward.1} parent=0
    #allocation3 [shape = 'u8[262144]{0}', space=vmem, size = 0x40000, scoped, tag = 'input window, operand 4, single buffered']
    #allocation4 [shape = 's32[1]{0}', space=sflag, size = 0x4, scoped, tag = 'scoped memory for discriminator_forward.1']
    #allocation5 [shape = 'u8[2048]{0}', space=vmem, size = 0x800, scoped, tag = 'input window, operand 7, single buffered']
    #allocation6 [shape = 's32[1]{0}', space=sflag, size = 0x4, scoped, tag = 'scoped memory for discriminator_forward.1']
    #allocation7 [shape = 'u8[262144]{0}', space=vmem, size = 0x40000, scoped, tag = 'input window, operand 8, single buffered']
    #allocation8 [shape = 'u8[1024]{0}', space=vmem, size = 0x400, scoped, tag = 'input window, operand 9, single buffered']
    #allocation9 [shape = 's32[1]{0}', space=sflag, size = 0x4, scoped, tag = 'scoped memory for discriminator_forward.1']
    #allocation10 [shape = 'u8[1024]{0}', space=vmem, size = 0x400, scoped, tag = 'input window, operand 10, single buffered']
    %19 = vsyncpa [#allocation4], 0
    %20 = vsyncpa [#allocation6], 0
    %21 = vsyncpa [#allocation9], 0
    // Predicated region
    $region2: #{discriminator_forward.1} parent=1 // pred_check
      _
    $region3: #{discriminator_forward.1} parent=1 // pred_check_branch
      %23 = sbr.rel (0) target = $region5
    $region4: #{discriminator_forward.1} parent=1 // pred_region
      _
    $region5: #{discriminator_forward.1} parent=1 // pred_fallthru
      _
    // Predicated region
    $region6: #{discriminator_forward.1} parent=1 // pred_check
      _
    $region7: #{discriminator_forward.1} parent=1 // pred_check_branch
      %25 = sbr.rel (0) target = $region9
    $region8: #{discriminator_forward.1} parent=1 // pred_region
      _
    $region9: #{discriminator_forward.1} parent=1 // pred_fallthru
      _
    // Predicated region
    $region10: #{discriminator_forward.1} parent=1 // pred_check
      _
    $region11: #{discriminator_forward.1} parent=1 // pred_check_branch
      %27 = sbr.rel (0) target = $region13
    $region12: #{discriminator_forward.1} parent=1 // pred_region
      _
    $region13: #{discriminator_forward.1} parent=1 // pred_fallthru
      _
    // Predicated region
    $region14: #{discriminator_forward.1} parent=1 // pred_check
      _
    $region15: #{discriminator_forward.1} parent=1 // pred_check_branch
      %29 = sbr.rel (0) target = $region17
    $region16: #{discriminator_forward.1} parent=1 // pred_region
      _
    $region17: #{discriminator_forward.1} parent=1 // pred_fallthru
      _
    // Predicated region
    $region18: #{discriminator_forward.1} parent=1 // pred_check
      _
    $region19: #{discriminator_forward.1} parent=1 // pred_check_branch
      %31 = sbr.rel (0) target = $region21
    $region20: #{discriminator_forward.1} parent=1 // pred_region
      %s33 = ssub.s32 8192, 8192
      %34 = vsyncadd [#allocation4], %s33
      %s35 = sshll.u32 [#allocation3], 4
      %s36 = int_to_ptr.vmem [resolvable:$true] %s35
      %41 = dma.hbm_to_vmem [thread:$0]  %s4, 8192, %s36, [#allocation4], 512, 512, 32
    $region21: #{discriminator_forward.1} parent=1 // pred_fallthru
      _
    // Predicated region
    $region22: #{discriminator_forward.1} parent=1 // pred_check
      _
    $region23: #{discriminator_forward.1} parent=1 // pred_check_branch
      %43 = sbr.rel (0) target = $region25
    $region24: #{discriminator_forward.1} parent=1 // pred_region
      _
    $region25: #{discriminator_forward.1} parent=1 // pred_fallthru
      _
    // Predicated region
    $region26: #{discriminator_forward.1} parent=1 // pred_check
      _
    $region27: #{discriminator_forward.1} parent=1 // pred_check_branch
      %45 = sbr.rel (0) target = $region29
    $region28: #{discriminator_forward.1} parent=1 // pred_region
      _
    $region29: #{discriminator_forward.1} parent=1 // pred_fallthru
      _
    // Predicated region
    $region30: #{discriminator_forward.1} parent=1 // pred_check
      _
    $region31: #{discriminator_forward.1} parent=1 // pred_check_branch
      %47 = sbr.rel (0) target = $region33
    $region32: #{discriminator_forward.1} parent=1 // pred_region
      %s49 = ssub.s32 64, 64
      %50 = vsyncadd [#allocation6], %s49
      %s52 = sshll.u32 [#allocation5], 4
      %s53 = int_to_ptr.vmem [resolvable:$true] %s52
      %55 = dma.hbm_to_vmem [thread:$0]  %s7, 64, %s53, [#allocation6]
    $region33: #{discriminator_forward.1} parent=1 // pred_fallthru
      _
    // Predicated region
    $region34: #{discriminator_forward.1} parent=1 // pred_check
      _
    $region35: #{discriminator_forward.1} parent=1 // pred_check_branch
      %57 = sbr.rel (0) target = $region37
    $region36: #{discriminator_forward.1} parent=1 // pred_region
      %s59 = ssub.s32 8192, 8192
      %60 = vsyncadd [#allocation6], %s59
      %s61 = sshll.u32 [#allocation7], 4
      %s62 = int_to_ptr.vmem [resolvable:$true] %s61
      %67 = dma.hbm_to_vmem [thread:$0]  %s8, 8192, %s62, [#allocation6], 128, 128, 8
    $region37: #{discriminator_forward.1} parent=1 // pred_fallthru
      _
    // Predicated region
    $region38: #{discriminator_forward.1} parent=1 // pred_check
      _
    $region39: #{discriminator_forward.1} parent=1 // pred_check_branch
      %69 = sbr.rel (0) target = $region41
    $region40: #{discriminator_forward.1} parent=1 // pred_region
      %s71 = ssub.s32 32, 32
      %72 = vsyncadd [#allocation9], %s71
      %s74 = sshll.u32 [#allocation8], 4
      %s75 = int_to_ptr.vmem [resolvable:$true] %s74
      %77 = dma.hbm_to_vmem [thread:$0]  %s9, 32, %s75, [#allocation9]
    $region41: #{discriminator_forward.1} parent=1 // pred_fallthru
      _
    // Predicated region
    $region42: #{discriminator_forward.1} parent=1 // pred_check
      _
    $region43: #{discriminator_forward.1} parent=1 // pred_check_branch
      %79 = sbr.rel (0) target = $region45
    $region44: #{discriminator_forward.1} parent=1 // pred_region
      %s81 = ssub.s32 32, 32
      %82 = vsyncadd [#allocation9], %s81
      %s84 = sshll.u32 [#allocation10], 4
      %s85 = int_to_ptr.vmem [resolvable:$true] %s84
      %87 = dma.hbm_to_vmem [thread:$0]  %s10, 32, %s85, [#allocation9]
    $region45: #{discriminator_forward.1} parent=1 // pred_fallthru
      _
    // Predicated region
    $region46: #{discriminator_forward.1} parent=1 // pred_check
      _
    $region47: #{discriminator_forward.1} parent=1 // pred_check_branch
      %89 = sbr.rel (0) target = $region49
    $region48: #{discriminator_forward.1} parent=1 // pred_region
      _
    $region49: #{discriminator_forward.1} parent=1 // pred_fallthru
      _
    // Predicated region
    $region50: #{discriminator_forward.1} parent=1 // pred_check
      _
    $region51: #{discriminator_forward.1} parent=1 // pred_check_branch
      %91 = sbr.rel (0) target = $region53
    $region52: #{discriminator_forward.1} parent=1 // pred_region
      %92 = dma.done [#allocation4], 8192
    $region53: #{discriminator_forward.1} parent=1 // pred_fallthru
      _
    // Predicated region
    $region54: #{discriminator_forward.1} parent=1 // pred_check
      _
    $region55: #{discriminator_forward.1} parent=1 // pred_check_branch
      %94 = sbr.rel (0) target = $region57
    $region56: #{discriminator_forward.1} parent=1 // pred_region
      %95 = dma.done [#allocation6], 64
    $region57: #{discriminator_forward.1} parent=1 // pred_fallthru
      _
    // Predicated region
    $region58: #{discriminator_forward.1} parent=1 // pred_check
      _
    $region59: #{discriminator_forward.1} parent=1 // pred_check_branch
      %97 = sbr.rel (0) target = $region61
    $region60: #{discriminator_forward.1} parent=1 // pred_region
      %98 = dma.done [#allocation6], 8192
    $region61: #{discriminator_forward.1} parent=1 // pred_fallthru
      _
    // Predicated region
    $region62: #{discriminator_forward.1} parent=1 // pred_check
      _
    $region63: #{discriminator_forward.1} parent=1 // pred_check_branch
      %100 = sbr.rel (0) target = $region65
    $region64: #{discriminator_forward.1} parent=1 // pred_region
      %101 = dma.done [#allocation9], 32
    $region65: #{discriminator_forward.1} parent=1 // pred_fallthru
      _
    // Predicated region
    $region66: #{discriminator_forward.1} parent=1 // pred_check
      _
    $region67: #{discriminator_forward.1} parent=1 // pred_check_branch
      %103 = sbr.rel (0) target = $region69
    $region68: #{discriminator_forward.1} parent=1 // pred_region
      %104 = dma.done [#allocation9], 32
    $region69: #{discriminator_forward.1} parent=1 // pred_fallthru
      _
    %v106 = vld [vmem:[%s0] sm:$0xff]
    %v107 = vld [vmem:[%s0 + $0x8] sm:$0xff]
    %v108 = vld [vmem:[%s0 + $0x10] sm:$0xff]
    %v109 = vld [vmem:[%s0 + $0x18] sm:$0xff]
    %v110 = vld [vmem:[%s0 + $0x20] sm:$0xff]
    %v111 = vld [vmem:[%s0 + $0x28] sm:$0xff]
    %v112 = vld [vmem:[%s0 + $0x30] sm:$0xff]
    %v113 = vld [vmem:[%s0 + $0x38] sm:$0xff]
    %v114 = vld [vmem:[%s0 + $0x40] sm:$0xff]
    %v115 = vld [vmem:[%s0 + $0x48] sm:$0xff]
    %v116 = vld [vmem:[%s0 + $0x50] sm:$0xff]
    %v117 = vld [vmem:[%s0 + $0x58] sm:$0xff]
    %v118 = vld [vmem:[%s0 + $0x60] sm:$0xff]
    %v119 = vld [vmem:[%s0 + $0x68] sm:$0xff]
    %v120 = vld [vmem:[%s0 + $0x70] sm:$0xff]
    %v121 = vld [vmem:[%s0 + $0x78] sm:$0xff]
    %v122 = vpack.c.bf16 %v107, %v106
    %v123 = vpack.c.bf16 %v109, %v108
    %v124 = vpack.c.bf16 %v111, %v110
    %v125 = vpack.c.bf16 %v113, %v112
    %v126 = vpack.c.bf16 %v115, %v114
    %v127 = vpack.c.bf16 %v117, %v116
    %v128 = vpack.c.bf16 %v119, %v118
    %v129 = vpack.c.bf16 %v121, %v120
    %v130 = vld [vmem:[#allocation3] sm:$0xff]
    %v131 = vld [vmem:[#allocation3 + $0x8] sm:$0xff]
    %v132 = vld [vmem:[#allocation3 + $0x10] sm:$0xff]
    %v133 = vld [vmem:[#allocation3 + $0x18] sm:$0xff]
    %v134 = vld [vmem:[#allocation3 + $0x20] sm:$0xff]
    %v135 = vld [vmem:[#allocation3 + $0x28] sm:$0xff]
    %v136 = vld [vmem:[#allocation3 + $0x30] sm:$0xff]
    %v137 = vld [vmem:[#allocation3 + $0x38] sm:$0xff]
    %v138 = vld [vmem:[#allocation3 + $0x40] sm:$0xff]
    %v139 = vld [vmem:[#allocation3 + $0x48] sm:$0xff]
    %v140 = vld [vmem:[#allocation3 + $0x50] sm:$0xff]
    %v141 = vld [vmem:[#allocation3 + $0x58] sm:$0xff]
    %v142 = vld [vmem:[#allocation3 + $0x60] sm:$0xff]
    %v143 = vld [vmem:[#allocation3 + $0x68] sm:$0xff]
    %v144 = vld [vmem:[#allocation3 + $0x70] sm:$0xff]
    %v145 = vld [vmem:[#allocation3 + $0x78] sm:$0xff]
    %v146 = vld [vmem:[#allocation3 + $0x80] sm:$0xff]
    %v147 = vld [vmem:[#allocation3 + $0x88] sm:$0xff]
    %v148 = vld [vmem:[#allocation3 + $0x90] sm:$0xff]
    %v149 = vld [vmem:[#allocation3 + $0x98] sm:$0xff]
    %v150 = vld [vmem:[#allocation3 + $0xa0] sm:$0xff]
    %v151 = vld [vmem:[#allocation3 + $0xa8] sm:$0xff]
    %v152 = vld [vmem:[#allocation3 + $0xb0] sm:$0xff]
    %v153 = vld [vmem:[#allocation3 + $0xb8] sm:$0xff]
    %v154 = vld [vmem:[#allocation3 + $0xc0] sm:$0xff]
    %v155 = vld [vmem:[#allocation3 + $0xc8] sm:$0xff]
    %v156 = vld [vmem:[#allocation3 + $0xd0] sm:$0xff]
    %v157 = vld [vmem:[#allocation3 + $0xd8] sm:$0xff]
    %v158 = vld [vmem:[#allocation3 + $0xe0] sm:$0xff]
    %v159 = vld [vmem:[#allocation3 + $0xe8] sm:$0xff]
    %v160 = vld [vmem:[#allocation3 + $0xf0] sm:$0xff]
    %v161 = vld [vmem:[#allocation3 + $0xf8] sm:$0xff]
    %v162 = vld [vmem:[#allocation3 + $0x100] sm:$0xff]
    %v163 = vld [vmem:[#allocation3 + $0x108] sm:$0xff]
    %v164 = vld [vmem:[#allocation3 + $0x110] sm:$0xff]
    %v165 = vld [vmem:[#allocation3 + $0x118] sm:$0xff]
    %v166 = vld [vmem:[#allocation3 + $0x120] sm:$0xff]
    %v167 = vld [vmem:[#allocation3 + $0x128] sm:$0xff]
    %v168 = vld [vmem:[#allocation3 + $0x130] sm:$0xff]
    %v169 = vld [vmem:[#allocation3 + $0x138] sm:$0xff]
    %v170 = vld [vmem:[#allocation3 + $0x140] sm:$0xff]
    %v171 = vld [vmem:[#allocation3 + $0x148] sm:$0xff]
    %v172 = vld [vmem:[#allocation3 + $0x150] sm:$0xff]
    %v173 = vld [vmem:[#allocation3 + $0x158] sm:$0xff]
    %v174 = vld [vmem:[#allocation3 + $0x160] sm:$0xff]
    %v175 = vld [vmem:[#allocation3 + $0x168] sm:$0xff]
    %v176 = vld [vmem:[#allocation3 + $0x170] sm:$0xff]
    %v177 = vld [vmem:[#allocation3 + $0x178] sm:$0xff]
    %v178 = vld [vmem:[#allocation3 + $0x180] sm:$0xff]
    %v179 = vld [vmem:[#allocation3 + $0x188] sm:$0xff]
    %v180 = vld [vmem:[#allocation3 + $0x190] sm:$0xff]
    %v181 = vld [vmem:[#allocation3 + $0x198] sm:$0xff]
    %v182 = vld [vmem:[#allocation3 + $0x1a0] sm:$0xff]
    %v183 = vld [vmem:[#allocation3 + $0x1a8] sm:$0xff]
    %v184 = vld [vmem:[#allocation3 + $0x1b0] sm:$0xff]
    %v185 = vld [vmem:[#allocation3 + $0x1b8] sm:$0xff]
    %v186 = vld [vmem:[#allocation3 + $0x1c0] sm:$0xff]
    %v187 = vld [vmem:[#allocation3 + $0x1c8] sm:$0xff]
    %v188 = vld [vmem:[#allocation3 + $0x1d0] sm:$0xff]
    %v189 = vld [vmem:[#allocation3 + $0x1d8] sm:$0xff]
    %v190 = vld [vmem:[#allocation3 + $0x1e0] sm:$0xff]
    %v191 = vld [vmem:[#allocation3 + $0x1e8] sm:$0xff]
    %v192 = vld [vmem:[#allocation3 + $0x1f0] sm:$0xff]
    %v193 = vld [vmem:[#allocation3 + $0x1f8] sm:$0xff]
    %v194 = vld [vmem:[%s5] sm:$0xff]
    %v196 = vlaneseq
    %v197 = vshrl.u32 %v196, 7
    %v198 = vsub.s32 0, %v197
    %v199 = vrot.slane %v194, %v198
    %v200 = vlaneseq
    %v201 = vshrl.u32 %v200, 7
    %v202 = vsub.s32 1, %v201
    %v203 = vrot.slane %v194, %v202
    %v204 = vlaneseq
    %v205 = vshrl.u32 %v204, 7
    %v206 = vsub.s32 2, %v205
    %v207 = vrot.slane %v194, %v206
    %v208 = vlaneseq
    %v209 = vshrl.u32 %v208, 7
    %v210 = vsub.s32 3, %v209
    %v211 = vrot.slane %v194, %v210
    %v212 = vlaneseq
    %v213 = vshrl.u32 %v212, 7
    %v214 = vsub.s32 4, %v213
    %v215 = vrot.slane %v194, %v214
    %v216 = vlaneseq
    %v217 = vshrl.u32 %v216, 7
    %v218 = vsub.s32 5, %v217
    %v219 = vrot.slane %v194, %v218
    %v220 = vlaneseq
    %v221 = vshrl.u32 %v220, 7
    %v222 = vsub.s32 6, %v221
    %v223 = vrot.slane %v194, %v222
    %v224 = vlaneseq
    %v225 = vshrl.u32 %v224, 7
    %v226 = vsub.s32 7, %v225
    %v227 = vrot.slane %v194, %v226
    %v300 = vunpack.c.l.b16 %v130
    %v301 = vunpack.c.h.b16 %v130
    %v302 = vunpack.c.l.b16 %v131
    %v303 = vunpack.c.h.b16 %v131
    %v304 = vunpack.c.l.b16 %v132
    %v305 = vunpack.c.h.b16 %v132
    %v306 = vunpack.c.l.b16 %v133
    %v307 = vunpack.c.h.b16 %v133
    %v308 = vunpack.c.l.b16 %v134
    %v309 = vunpack.c.h.b16 %v134
    %v310 = vunpack.c.l.b16 %v135
    %v311 = vunpack.c.h.b16 %v135
    %v312 = vunpack.c.l.b16 %v136
    %v313 = vunpack.c.h.b16 %v136
    %v314 = vunpack.c.l.b16 %v137
    %v315 = vunpack.c.h.b16 %v137
    %v316 = vunpack.c.l.b16 %v138
    %v317 = vunpack.c.h.b16 %v138
    %v318 = vunpack.c.l.b16 %v139
    %v319 = vunpack.c.h.b16 %v139
    %v320 = vunpack.c.l.b16 %v140
    %v321 = vunpack.c.h.b16 %v140
    %v322 = vunpack.c.l.b16 %v141
    %v323 = vunpack.c.h.b16 %v141
    %v324 = vunpack.c.l.b16 %v142
    %v325 = vunpack.c.h.b16 %v142
    %v326 = vunpack.c.l.b16 %v143
    %v327 = vunpack.c.h.b16 %v143
    %v328 = vunpack.c.l.b16 %v144
    %v329 = vunpack.c.h.b16 %v144
    %v330 = vunpack.c.l.b16 %v145
    %v331 = vunpack.c.h.b16 %v145
    %v332 = vunpack.c.l.b16 %v146
    %v333 = vunpack.c.h.b16 %v146
    %v334 = vunpack.c.l.b16 %v147
    %v335 = vunpack.c.h.b16 %v147
    %v336 = vunpack.c.l.b16 %v148
    %v337 = vunpack.c.h.b16 %v148
    %v338 = vunpack.c.l.b16 %v149
    %v339 = vunpack.c.h.b16 %v149
    %v340 = vunpack.c.l.b16 %v150
    %v341 = vunpack.c.h.b16 %v150
    %v342 = vunpack.c.l.b16 %v151
    %v343 = vunpack.c.h.b16 %v151
    %v344 = vunpack.c.l.b16 %v152
    %v345 = vunpack.c.h.b16 %v152
    %v346 = vunpack.c.l.b16 %v153
    %v347 = vunpack.c.h.b16 %v153
    %v348 = vunpack.c.l.b16 %v154
    %v349 = vunpack.c.h.b16 %v154
    %v350 = vunpack.c.l.b16 %v155
    %v351 = vunpack.c.h.b16 %v155
    %v352 = vunpack.c.l.b16 %v156
    %v353 = vunpack.c.h.b16 %v156
    %v354 = vunpack.c.l.b16 %v157
    %v355 = vunpack.c.h.b16 %v157
    %v356 = vunpack.c.l.b16 %v158
    %v357 = vunpack.c.h.b16 %v158
    %v358 = vunpack.c.l.b16 %v159
    %v359 = vunpack.c.h.b16 %v159
    %v360 = vunpack.c.l.b16 %v160
    %v361 = vunpack.c.h.b16 %v160
    %v362 = vunpack.c.l.b16 %v161
    %v363 = vunpack.c.h.b16 %v161
    %v364 = vunpack.c.l.b16 %v162
    %v365 = vunpack.c.h.b16 %v162
    %v366 = vunpack.c.l.b16 %v163
    %v367 = vunpack.c.h.b16 %v163
    %v368 = vunpack.c.l.b16 %v164
    %v369 = vunpack.c.h.b16 %v164
    %v370 = vunpack.c.l.b16 %v165
    %v371 = vunpack.c.h.b16 %v165
    %v372 = vunpack.c.l.b16 %v166
    %v373 = vunpack.c.h.b16 %v166
    %v374 = vunpack.c.l.b16 %v167
    %v375 = vunpack.c.h.b16 %v167
    %v376 = vunpack.c.l.b16 %v168
    %v377 = vunpack.c.h.b16 %v168
    %v378 = vunpack.c.l.b16 %v169
    %v379 = vunpack.c.h.b16 %v169
    %v380 = vunpack.c.l.b16 %v170
    %v381 = vunpack.c.h.b16 %v170
    %v382 = vunpack.c.l.b16 %v171
    %v383 = vunpack.c.h.b16 %v171
    %v384 = vunpack.c.l.b16 %v172
    %v385 = vunpack.c.h.b16 %v172
    %v386 = vunpack.c.l.b16 %v173
    %v387 = vunpack.c.h.b16 %v173
    %v388 = vunpack.c.l.b16 %v174
    %v389 = vunpack.c.h.b16 %v174
    %v390 = vunpack.c.l.b16 %v175
    %v391 = vunpack.c.h.b16 %v175
    %v392 = vunpack.c.l.b16 %v176
    %v393 = vunpack.c.h.b16 %v176
    %v394 = vunpack.c.l.b16 %v177
    %v395 = vunpack.c.h.b16 %v177
    %v396 = vunpack.c.l.b16 %v178
    %v397 = vunpack.c.h.b16 %v178
    %v398 = vunpack.c.l.b16 %v179
    %v399 = vunpack.c.h.b16 %v179
    %v400 = vunpack.c.l.b16 %v180
    %v401 = vunpack.c.h.b16 %v180
    %v402 = vunpack.c.l.b16 %v181
    %v403 = vunpack.c.h.b16 %v181
    %v404 = vunpack.c.l.b16 %v182
    %v405 = vunpack.c.h.b16 %v182
    %v406 = vunpack.c.l.b16 %v183
    %v407 = vunpack.c.h.b16 %v183
    %v408 = vunpack.c.l.b16 %v184
    %v409 = vunpack.c.h.b16 %v184
    %v410 = vunpack.c.l.b16 %v185
    %v411 = vunpack.c.h.b16 %v185
    %v412 = vunpack.c.l.b16 %v186
    %v413 = vunpack.c.h.b16 %v186
    %v414 = vunpack.c.l.b16 %v187
    %v415 = vunpack.c.h.b16 %v187
    %v416 = vunpack.c.l.b16 %v188
    %v417 = vunpack.c.h.b16 %v188
    %v418 = vunpack.c.l.b16 %v189
    %v419 = vunpack.c.h.b16 %v189
    %v420 = vunpack.c.l.b16 %v190
    %v421 = vunpack.c.h.b16 %v190
    %v422 = vunpack.c.l.b16 %v191
    %v423 = vunpack.c.h.b16 %v191
    %v424 = vunpack.c.l.b16 %v192
    %v425 = vunpack.c.h.b16 %v192
    %v426 = vunpack.c.l.b16 %v193
    %v427 = vunpack.c.h.b16 %v193
    %v428 = vpack.c.b16 %v308, %v300
    %v429 = vpack.c.b16 %v309, %v301
    %v430 = vpack.c.b16 %v310, %v302
    %v431 = vpack.c.b16 %v311, %v303
    %v432 = vpack.c.b16 %v312, %v304
    %v433 = vpack.c.b16 %v313, %v305
    %v434 = vpack.c.b16 %v314, %v306
    %v435 = vpack.c.b16 %v315, %v307
    %v436 = vpack.c.b16 %v324, %v316
    %v437 = vpack.c.b16 %v325, %v317
    %v438 = vpack.c.b16 %v326, %v318
    %v439 = vpack.c.b16 %v327, %v319
    %v440 = vpack.c.b16 %v328, %v320
    %v441 = vpack.c.b16 %v329, %v321
    %v442 = vpack.c.b16 %v330, %v322
    %v443 = vpack.c.b16 %v331, %v323
    %v444 = vpack.c.b16 %v340, %v332
    %v445 = vpack.c.b16 %v341, %v333
    %v446 = vpack.c.b16 %v342, %v334
    %v447 = vpack.c.b16 %v343, %v335
    %v448 = vpack.c.b16 %v344, %v336
    %v449 = vpack.c.b16 %v345, %v337
    %v450 = vpack.c.b16 %v346, %v338
    %v451 = vpack.c.b16 %v347, %v339
    %v452 = vpack.c.b16 %v356, %v348
    %v453 = vpack.c.b16 %v357, %v349
    %v454 = vpack.c.b16 %v358, %v350
    %v455 = vpack.c.b16 %v359, %v351
    %v456 = vpack.c.b16 %v360, %v352
    %v457 = vpack.c.b16 %v361, %v353
    %v458 = vpack.c.b16 %v362, %v354
    %v459 = vpack.c.b16 %v363, %v355
    %v460 = vpack.c.b16 %v372, %v364
    %v461 = vpack.c.b16 %v373, %v365
    %v462 = vpack.c.b16 %v374, %v366
    %v463 = vpack.c.b16 %v375, %v367
    %v464 = vpack.c.b16 %v376, %v368
    %v465 = vpack.c.b16 %v377, %v369
    %v466 = vpack.c.b16 %v378, %v370
    %v467 = vpack.c.b16 %v379, %v371
    %v468 = vpack.c.b16 %v388, %v380
    %v469 = vpack.c.b16 %v389, %v381
    %v470 = vpack.c.b16 %v390, %v382
    %v471 = vpack.c.b16 %v391, %v383
    %v472 = vpack.c.b16 %v392, %v384
    %v473 = vpack.c.b16 %v393, %v385
    %v474 = vpack.c.b16 %v394, %v386
    %v475 = vpack.c.b16 %v395, %v387
    %v476 = vpack.c.b16 %v404, %v396
    %v477 = vpack.c.b16 %v405, %v397
    %v478 = vpack.c.b16 %v406, %v398
    %v479 = vpack.c.b16 %v407, %v399
    %v480 = vpack.c.b16 %v408, %v400
    %v481 = vpack.c.b16 %v409, %v401
    %v482 = vpack.c.b16 %v410, %v402
    %v483 = vpack.c.b16 %v411, %v403
    %v484 = vpack.c.b16 %v420, %v412
    %v485 = vpack.c.b16 %v421, %v413
    %v486 = vpack.c.b16 %v422, %v414
    %v487 = vpack.c.b16 %v423, %v415
    %v488 = vpack.c.b16 %v424, %v416
    %v489 = vpack.c.b16 %v425, %v417
    %v490 = vpack.c.b16 %v426, %v418
    %v491 = vpack.c.b16 %v427, %v419
    %556 = vmatprep.subr.bf16.mxu0 %v485
    %557 = vmatpush1.bf16.msra.mxu0 %v484
    %558 = vmatprep.subr.bf16.mxu0 %v477
    %559 = vmatpush1.bf16.msra.mxu0 %v476
    %560 = vmatprep.subr.bf16.mxu0 %v469
    %561 = vmatpush1.bf16.msra.mxu0 %v468
    %562 = vmatprep.subr.bf16.mxu0 %v461
    %563 = vmatpush1.bf16.msra.mxu0 %v460
    %564 = vmatprep.subr.bf16.mxu0 %v453
    %565 = vmatpush1.bf16.msra.mxu0 %v452
    %566 = vmatprep.subr.bf16.mxu0 %v445
    %567 = vmatpush1.bf16.msra.mxu0 %v444
    %568 = vmatprep.subr.bf16.mxu0 %v437
    %569 = vmatpush1.bf16.msra.mxu0 %v436
    %570 = vmatprep.subr.bf16.mxu0 %v429
    %571 = vmatpush1.bf16.msra.mxu0 %v428
    %572 = vmatprep.subr.bf16.mxu0 0
    %573 = vmatpush2.bf16.msra.mxu0 0
    %574 = vmatprep.subr.bf16.mxu0 0
    %575 = vmatpush2.bf16.msra.mxu0 0
    %576 = vmatprep.subr.bf16.mxu0 0
    %577 = vmatpush2.bf16.msra.mxu0 0
    %578 = vmatprep.subr.bf16.mxu0 0
    %579 = vmatpush2.bf16.msra.mxu0 0
    %580 = vmatprep.subr.bf16.mxu0 0
    %581 = vmatpush2.bf16.msra.mxu0 0
    %582 = vmatprep.subr.bf16.mxu0 0
    %583 = vmatpush2.bf16.msra.mxu0 0
    %584 = vmatprep.subr.bf16.mxu0 0
    %585 = vmatpush2.bf16.msra.mxu0 0
    %586 = vmatprep.subr.bf16.mxu0 0
    %587 = vmatpush2.bf16.msra.mxu0 0
    %588 = vmatprep.mubr.bf16.mxu0 0
    %589 = vmatmul.mubr.bf16.gmra.mxu0 %v122
    %v590 = vpop.f32.mrf.mxu0
    %v591 = vadd.f32 %v199, %v590
    %v592 = vpop.f32.mrf.mxu0
    %v593 = vadd.f32 %v203, %v592
    %v594 = vpop.f32.mrf.mxu0
    %v595 = vadd.f32 %v199, %v594
    %v596 = vpop.f32.mrf.mxu0
    %v597 = vadd.f32 %v203, %v596
    %598 = vmatprep.mubr.bf16.mxu0 0
    %599 = vmatmul.mubr.bf16.gmra.mxu0 %v123
    %v600 = vpop.f32.mrf.mxu0
    %v601 = vadd.f32 %v199, %v600
    %v602 = vpop.f32.mrf.mxu0
    %v603 = vadd.f32 %v203, %v602
    %v604 = vpop.f32.mrf.mxu0
    %v605 = vadd.f32 %v199, %v604
    %v606 = vpop.f32.mrf.mxu0
    %v607 = vadd.f32 %v203, %v606
    %608 = vmatprep.mubr.bf16.mxu0 0
    %609 = vmatmul.mubr.bf16.gmra.mxu0 %v124
    %v610 = vpop.f32.mrf.mxu0
    %v611 = vadd.f32 %v199, %v610
    %v612 = vpop.f32.mrf.mxu0
    %v613 = vadd.f32 %v203, %v612
    %v614 = vpop.f32.mrf.mxu0
    %v615 = vadd.f32 %v199, %v614
    %v616 = vpop.f32.mrf.mxu0
    %v617 = vadd.f32 %v203, %v616
    %618 = vmatprep.mubr.bf16.mxu0 0
    %619 = vmatmul.mubr.bf16.gmra.mxu0 %v125
    %v620 = vpop.f32.mrf.mxu0
    %v621 = vadd.f32 %v199, %v620
    %v622 = vpop.f32.mrf.mxu0
    %v623 = vadd.f32 %v203, %v622
    %v624 = vpop.f32.mrf.mxu0
    %v625 = vadd.f32 %v199, %v624
    %v626 = vpop.f32.mrf.mxu0
    %v627 = vadd.f32 %v203, %v626
    %628 = vmatprep.mubr.bf16.mxu0 0
    %629 = vmatmul.mubr.bf16.gmra.mxu0 %v126
    %v630 = vpop.f32.mrf.mxu0
    %v631 = vadd.f32 %v199, %v630
    %v632 = vpop.f32.mrf.mxu0
    %v633 = vadd.f32 %v203, %v632
    %v634 = vpop.f32.mrf.mxu0
    %v635 = vadd.f32 %v199, %v634
    %v636 = vpop.f32.mrf.mxu0
    %v637 = vadd.f32 %v203, %v636
    %638 = vmatprep.mubr.bf16.mxu0 0
    %639 = vmatmul.mubr.bf16.gmra.mxu0 %v127
    %v640 = vpop.f32.mrf.mxu0
    %v641 = vadd.f32 %v199, %v640
    %v642 = vpop.f32.mrf.mxu0
    %v643 = vadd.f32 %v203, %v642
    %v644 = vpop.f32.mrf.mxu0
    %v645 = vadd.f32 %v199, %v644
    %v646 = vpop.f32.mrf.mxu0
    %v647 = vadd.f32 %v203, %v646
    %648 = vmatprep.mubr.bf16.mxu0 0
    %649 = vmatmul.mubr.bf16.gmra.mxu0 %v128
    %v650 = vpop.f32.mrf.mxu0
    %v651 = vadd.f32 %v199, %v650
    %v652 = vpop.f32.mrf.mxu0
    %v653 = vadd.f32 %v203, %v652
    %v654 = vpop.f32.mrf.mxu0
    %v655 = vadd.f32 %v199, %v654
    %v656 = vpop.f32.mrf.mxu0
    %v657 = vadd.f32 %v203, %v656
    %658 = vmatprep.mubr.bf16.mxu0 0
    %659 = vmatmul.mubr.bf16.gmra.mxu0 %v129
    %v660 = vpop.f32.mrf.mxu0
    %v661 = vadd.f32 %v199, %v660
    %v662 = vpop.f32.mrf.mxu0
    %v663 = vadd.f32 %v203, %v662
    %v664 = vpop.f32.mrf.mxu0
    %v665 = vadd.f32 %v199, %v664
    %v666 = vpop.f32.mrf.mxu0
    %v667 = vadd.f32 %v203, %v666
    %668 = vdwg.mxu0
    %669 = vmatprep.subr.bf16.mxu0 %v487
    %670 = vmatpush1.bf16.msra.mxu0 %v486
    %671 = vmatprep.subr.bf16.mxu0 %v479
    %672 = vmatpush1.bf16.msra.mxu0 %v478
    %673 = vmatprep.subr.bf16.mxu0 %v471
    %674 = vmatpush1.bf16.msra.mxu0 %v470
    %675 = vmatprep.subr.bf16.mxu0 %v463
    %676 = vmatpush1.bf16.msra.mxu0 %v462
    %677 = vmatprep.subr.bf16.mxu0 %v455
    %678 = vmatpush1.bf16.msra.mxu0 %v454
    %679 = vmatprep.subr.bf16.mxu0 %v447
    %680 = vmatpush1.bf16.msra.mxu0 %v446
    %681 = vmatprep.subr.bf16.mxu0 %v439
    %682 = vmatpush1.bf16.msra.mxu0 %v438
    %683 = vmatprep.subr.bf16.mxu0 %v431
    %684 = vmatpush1.bf16.msra.mxu0 %v430
    %685 = vmatprep.subr.bf16.mxu0 0
    %686 = vmatpush2.bf16.msra.mxu0 0
    %687 = vmatprep.subr.bf16.mxu0 0
    %688 = vmatpush2.bf16.msra.mxu0 0
    %689 = vmatprep.subr.bf16.mxu0 0
    %690 = vmatpush2.bf16.msra.mxu0 0
    %691 = vmatprep.subr.bf16.mxu0 0
    %692 = vmatpush2.bf16.msra.mxu0 0
    %693 = vmatprep.subr.bf16.mxu0 0
    %694 = vmatpush2.bf16.msra.mxu0 0
    %695 = vmatprep.subr.bf16.mxu0 0
    %696 = vmatpush2.bf16.msra.mxu0 0
    %697 = vmatprep.subr.bf16.mxu0 0
    %698 = vmatpush2.bf16.msra.mxu0 0
    %699 = vmatprep.subr.bf16.mxu0 0
    %700 = vmatpush2.bf16.msra.mxu0 0
    %701 = vmatprep.mubr.bf16.mxu0 0
    %702 = vmatmul.mubr.bf16.gmra.mxu0 %v122
    %v703 = vpop.f32.mrf.mxu0
    %v704 = vadd.f32 %v207, %v703
    %v705 = vpop.f32.mrf.mxu0
    %v706 = vadd.f32 %v211, %v705
    %v707 = vpop.f32.mrf.mxu0
    %v708 = vadd.f32 %v207, %v707
    %v709 = vpop.f32.mrf.mxu0
    %v710 = vadd.f32 %v211, %v709
    %711 = vmatprep.mubr.bf16.mxu0 0
    %712 = vmatmul.mubr.bf16.gmra.mxu0 %v123
    %v713 = vpop.f32.mrf.mxu0
    %v714 = vadd.f32 %v207, %v713
    %v715 = vpop.f32.mrf.mxu0
    %v716 = vadd.f32 %v211, %v715
    %v717 = vpop.f32.mrf.mxu0
    %v718 = vadd.f32 %v207, %v717
    %v719 = vpop.f32.mrf.mxu0
    %v720 = vadd.f32 %v211, %v719
    %721 = vmatprep.mubr.bf16.mxu0 0
    %722 = vmatmul.mubr.bf16.gmra.mxu0 %v124
    %v723 = vpop.f32.mrf.mxu0
    %v724 = vadd.f32 %v207, %v723
    %v725 = vpop.f32.mrf.mxu0
    %v726 = vadd.f32 %v211, %v725
    %v727 = vpop.f32.mrf.mxu0
    %v728 = vadd.f32 %v207, %v727
    %v729 = vpop.f32.mrf.mxu0
    %v730 = vadd.f32 %v211, %v729
    %731 = vmatprep.mubr.bf16.mxu0 0
    %732 = vmatmul.mubr.bf16.gmra.mxu0 %v125
    %v733 = vpop.f32.mrf.mxu0
    %v734 = vadd.f32 %v207, %v733
    %v735 = vpop.f32.mrf.mxu0
    %v736 = vadd.f32 %v211, %v735
    %v737 = vpop.f32.mrf.mxu0
    %v738 = vadd.f32 %v207, %v737
    %v739 = vpop.f32.mrf.mxu0
    %v740 = vadd.f32 %v211, %v739
    %741 = vmatprep.mubr.bf16.mxu0 0
    %742 = vmatmul.mubr.bf16.gmra.mxu0 %v126
    %v743 = vpop.f32.mrf.mxu0
    %v744 = vadd.f32 %v207, %v743
    %v745 = vpop.f32.mrf.mxu0
    %v746 = vadd.f32 %v211, %v745
    %v747 = vpop.f32.mrf.mxu0
    %v748 = vadd.f32 %v207, %v747
    %v749 = vpop.f32.mrf.mxu0
    %v750 = vadd.f32 %v211, %v749
    %751 = vmatprep.mubr.bf16.mxu0 0
    %752 = vmatmul.mubr.bf16.gmra.mxu0 %v127
    %v753 = vpop.f32.mrf.mxu0
    %v754 = vadd.f32 %v207, %v753
    %v755 = vpop.f32.mrf.mxu0
    %v756 = vadd.f32 %v211, %v755
    %v757 = vpop.f32.mrf.mxu0
    %v758 = vadd.f32 %v207, %v757
    %v759 = vpop.f32.mrf.mxu0
    %v760 = vadd.f32 %v211, %v759
    %761 = vmatprep.mubr.bf16.mxu0 0
    %762 = vmatmul.mubr.bf16.gmra.mxu0 %v128
    %v763 = vpop.f32.mrf.mxu0
    %v764 = vadd.f32 %v207, %v763
    %v765 = vpop.f32.mrf.mxu0
    %v766 = vadd.f32 %v211, %v765
    %v767 = vpop.f32.mrf.mxu0
    %v768 = vadd.f32 %v207, %v767
    %v769 = vpop.f32.mrf.mxu0
    %v770 = vadd.f32 %v211, %v769
    %771 = vmatprep.mubr.bf16.mxu0 0
    %772 = vmatmul.mubr.bf16.gmra.mxu0 %v129
    %v773 = vpop.f32.mrf.mxu0
    %v774 = vadd.f32 %v207, %v773
    %v775 = vpop.f32.mrf.mxu0
    %v776 = vadd.f32 %v211, %v775
    %v777 = vpop.f32.mrf.mxu0
    %v778 = vadd.f32 %v207, %v777
    %v779 = vpop.f32.mrf.mxu0
    %v780 = vadd.f32 %v211, %v779
    %781 = vdwg.mxu0
    %782 = vmatprep.subr.bf16.mxu0 %v489
    %783 = vmatpush1.bf16.msra.mxu0 %v488
    %784 = vmatprep.subr.bf16.mxu0 %v481
    %785 = vmatpush1.bf16.msra.mxu0 %v480
    %786 = vmatprep.subr.bf16.mxu0 %v473
    %787 = vmatpush1.bf16.msra.mxu0 %v472
    %788 = vmatprep.subr.bf16.mxu0 %v465
    %789 = vmatpush1.bf16.msra.mxu0 %v464
    %790 = vmatprep.subr.bf16.mxu0 %v457
    %791 = vmatpush1.bf16.msra.mxu0 %v456
    %792 = vmatprep.subr.bf16.mxu0 %v449
    %793 = vmatpush1.bf16.msra.mxu0 %v448
    %794 = vmatprep.subr.bf16.mxu0 %v441
    %795 = vmatpush1.bf16.msra.mxu0 %v440
    %796 = vmatprep.subr.bf16.mxu0 %v433
    %797 = vmatpush1.bf16.msra.mxu0 %v432
    %798 = vmatprep.subr.bf16.mxu0 0
    %799 = vmatpush2.bf16.msra.mxu0 0
    %800 = vmatprep.subr.bf16.mxu0 0
    %801 = vmatpush2.bf16.msra.mxu0 0
    %802 = vmatprep.subr.bf16.mxu0 0
    %803 = vmatpush2.bf16.msra.mxu0 0
    %804 = vmatprep.subr.bf16.mxu0 0
    %805 = vmatpush2.bf16.msra.mxu0 0
    %806 = vmatprep.subr.bf16.mxu0 0
    %807 = vmatpush2.bf16.msra.mxu0 0
    %808 = vmatprep.subr.bf16.mxu0 0
    %809 = vmatpush2.bf16.msra.mxu0 0
    %810 = vmatprep.subr.bf16.mxu0 0
    %811 = vmatpush2.bf16.msra.mxu0 0
    %812 = vmatprep.subr.bf16.mxu0 0
    %813 = vmatpush2.bf16.msra.mxu0 0
    %814 = vmatprep.mubr.bf16.mxu0 0
    %815 = vmatmul.mubr.bf16.gmra.mxu0 %v122
    %v816 = vpop.f32.mrf.mxu0
    %v817 = vadd.f32 %v215, %v816
    %v818 = vpop.f32.mrf.mxu0
    %v819 = vadd.f32 %v219, %v818
    %v820 = vpop.f32.mrf.mxu0
    %v821 = vadd.f32 %v215, %v820
    %v822 = vpop.f32.mrf.mxu0
    %v823 = vadd.f32 %v219, %v822
    %824 = vmatprep.mubr.bf16.mxu0 0
    %825 = vmatmul.mubr.bf16.gmra.mxu0 %v123
    %v826 = vpop.f32.mrf.mxu0
    %v827 = vadd.f32 %v215, %v826
    %v828 = vpop.f32.mrf.mxu0
    %v829 = vadd.f32 %v219, %v828
    %v830 = vpop.f32.mrf.mxu0
    %v831 = vadd.f32 %v215, %v830
    %v832 = vpop.f32.mrf.mxu0
    %v833 = vadd.f32 %v219, %v832
    %834 = vmatprep.mubr.bf16.mxu0 0
    %835 = vmatmul.mubr.bf16.gmra.mxu0 %v124
    %v836 = vpop.f32.mrf.mxu0
    %v837 = vadd.f32 %v215, %v836
    %v838 = vpop.f32.mrf.mxu0
    %v839 = vadd.f32 %v219, %v838
    %v840 = vpop.f32.mrf.mxu0
    %v841 = vadd.f32 %v215, %v840
    %v842 = vpop.f32.mrf.mxu0
    %v843 = vadd.f32 %v219, %v842
    %844 = vmatprep.mubr.bf16.mxu0 0
    %845 = vmatmul.mubr.bf16.gmra.mxu0 %v125
    %v846 = vpop.f32.mrf.mxu0
    %v847 = vadd.f32 %v215, %v846
    %v848 = vpop.f32.mrf.mxu0
    %v849 = vadd.f32 %v219, %v848
    %v850 = vpop.f32.mrf.mxu0
    %v851 = vadd.f32 %v215, %v850
    %v852 = vpop.f32.mrf.mxu0
    %v853 = vadd.f32 %v219, %v852
    %854 = vmatprep.mubr.bf16.mxu0 0
    %855 = vmatmul.mubr.bf16.gmra.mxu0 %v126
    %v856 = vpop.f32.mrf.mxu0
    %v857 = vadd.f32 %v215, %v856
    %v858 = vpop.f32.mrf.mxu0
    %v859 = vadd.f32 %v219, %v858
    %v860 = vpop.f32.mrf.mxu0
    %v861 = vadd.f32 %v215, %v860
    %v862 = vpop.f32.mrf.mxu0
    %v863 = vadd.f32 %v219, %v862
    %864 = vmatprep.mubr.bf16.mxu0 0
    %865 = vmatmul.mubr.bf16.gmra.mxu0 %v127
    %v866 = vpop.f32.mrf.mxu0
    %v867 = vadd.f32 %v215, %v866
    %v868 = vpop.f32.mrf.mxu0
    %v869 = vadd.f32 %v219, %v868
    %v870 = vpop.f32.mrf.mxu0
    %v871 = vadd.f32 %v215, %v870
    %v872 = vpop.f32.mrf.mxu0
    %v873 = vadd.f32 %v219, %v872
    %874 = vmatprep.mubr.bf16.mxu0 0
    %875 = vmatmul.mubr.bf16.gmra.mxu0 %v128
    %v876 = vpop.f32.mrf.mxu0
    %v877 = vadd.f32 %v215, %v876
    %v878 = vpop.f32.mrf.mxu0
    %v879 = vadd.f32 %v219, %v878
    %v880 = vpop.f32.mrf.mxu0
    %v881 = vadd.f32 %v215, %v880
    %v882 = vpop.f32.mrf.mxu0
    %v883 = vadd.f32 %v219, %v882
    %884 = vmatprep.mubr.bf16.mxu0 0
    %885 = vmatmul.mubr.bf16.gmra.mxu0 %v129
    %v886 = vpop.f32.mrf.mxu0
    %v887 = vadd.f32 %v215, %v886
    %v888 = vpop.f32.mrf.mxu0
    %v889 = vadd.f32 %v219, %v888
    %v890 = vpop.f32.mrf.mxu0
    %v891 = vadd.f32 %v215, %v890
    %v892 = vpop.f32.mrf.mxu0
    %v893 = vadd.f32 %v219, %v892
    %894 = vdwg.mxu0
    %895 = vmatprep.subr.bf16.mxu0 %v491
    %896 = vmatpush1.bf16.msra.mxu0 %v490
    %897 = vmatprep.subr.bf16.mxu0 %v483
    %898 = vmatpush1.bf16.msra.mxu0 %v482
    %899 = vmatprep.subr.bf16.mxu0 %v475
    %900 = vmatpush1.bf16.msra.mxu0 %v474
    %901 = vmatprep.subr.bf16.mxu0 %v467
    %902 = vmatpush1.bf16.msra.mxu0 %v466
    %903 = vmatprep.subr.bf16.mxu0 %v459
    %904 = vmatpush1.bf16.msra.mxu0 %v458
    %905 = vmatprep.subr.bf16.mxu0 %v451
    %906 = vmatpush1.bf16.msra.mxu0 %v450
    %907 = vmatprep.subr.bf16.mxu0 %v443
    %908 = vmatpush1.bf16.msra.mxu0 %v442
    %909 = vmatprep.subr.bf16.mxu0 %v435
    %910 = vmatpush1.bf16.msra.mxu0 %v434
    %911 = vmatprep.subr.bf16.mxu0 0
    %912 = vmatpush2.bf16.msra.mxu0 0
    %913 = vmatprep.subr.bf16.mxu0 0
    %914 = vmatpush2.bf16.msra.mxu0 0
    %915 = vmatprep.subr.bf16.mxu0 0
    %916 = vmatpush2.bf16.msra.mxu0 0
    %917 = vmatprep.subr.bf16.mxu0 0
    %918 = vmatpush2.bf16.msra.mxu0 0
    %919 = vmatprep.subr.bf16.mxu0 0
    %920 = vmatpush2.bf16.msra.mxu0 0
    %921 = vmatprep.subr.bf16.mxu0 0
    %922 = vmatpush2.bf16.msra.mxu0 0
    %923 = vmatprep.subr.bf16.mxu0 0
    %924 = vmatpush2.bf16.msra.mxu0 0
    %925 = vmatprep.subr.bf16.mxu0 0
    %926 = vmatpush2.bf16.msra.mxu0 0
    %927 = vmatprep.mubr.bf16.mxu0 0
    %928 = vmatmul.mubr.bf16.gmra.mxu0 %v122
    %v929 = vpop.f32.mrf.mxu0
    %v930 = vadd.f32 %v223, %v929
    %v931 = vpop.f32.mrf.mxu0
    %v932 = vadd.f32 %v227, %v931
    %v933 = vpop.f32.mrf.mxu0
    %v934 = vadd.f32 %v223, %v933
    %v935 = vpop.f32.mrf.mxu0
    %v936 = vadd.f32 %v227, %v935
    %937 = vmatprep.mubr.bf16.mxu0 0
    %938 = vmatmul.mubr.bf16.gmra.mxu0 %v123
    %v939 = vpop.f32.mrf.mxu0
    %v940 = vadd.f32 %v223, %v939
    %v941 = vpop.f32.mrf.mxu0
    %v942 = vadd.f32 %v227, %v941
    %v943 = vpop.f32.mrf.mxu0
    %v944 = vadd.f32 %v223, %v943
    %v945 = vpop.f32.mrf.mxu0
    %v946 = vadd.f32 %v227, %v945
    %947 = vmatprep.mubr.bf16.mxu0 0
    %948 = vmatmul.mubr.bf16.gmra.mxu0 %v124
    %v949 = vpop.f32.mrf.mxu0
    %v950 = vadd.f32 %v223, %v949
    %v951 = vpop.f32.mrf.mxu0
    %v952 = vadd.f32 %v227, %v951
    %v953 = vpop.f32.mrf.mxu0
    %v954 = vadd.f32 %v223, %v953
    %v955 = vpop.f32.mrf.mxu0
    %v956 = vadd.f32 %v227, %v955
    %957 = vmatprep.mubr.bf16.mxu0 0
    %958 = vmatmul.mubr.bf16.gmra.mxu0 %v125
    %v959 = vpop.f32.mrf.mxu0
    %v960 = vadd.f32 %v223, %v959
    %v961 = vpop.f32.mrf.mxu0
    %v962 = vadd.f32 %v227, %v961
    %v963 = vpop.f32.mrf.mxu0
    %v964 = vadd.f32 %v223, %v963
    %v965 = vpop.f32.mrf.mxu0
    %v966 = vadd.f32 %v227, %v965
    %967 = vmatprep.mubr.bf16.mxu0 0
    %968 = vmatmul.mubr.bf16.gmra.mxu0 %v126
    %v969 = vpop.f32.mrf.mxu0
    %v970 = vadd.f32 %v223, %v969
    %v971 = vpop.f32.mrf.mxu0
    %v972 = vadd.f32 %v227, %v971
    %v973 = vpop.f32.mrf.mxu0
    %v974 = vadd.f32 %v223, %v973
    %v975 = vpop.f32.mrf.mxu0
    %v976 = vadd.f32 %v227, %v975
    %977 = vmatprep.mubr.bf16.mxu0 0
    %978 = vmatmul.mubr.bf16.gmra.mxu0 %v127
    %v979 = vpop.f32.mrf.mxu0
    %v980 = vadd.f32 %v223, %v979
    %v981 = vpop.f32.mrf.mxu0
    %v982 = vadd.f32 %v227, %v981
    %v983 = vpop.f32.mrf.mxu0
    %v984 = vadd.f32 %v223, %v983
    %v985 = vpop.f32.mrf.mxu0
    %v986 = vadd.f32 %v227, %v985
    %987 = vmatprep.mubr.bf16.mxu0 0
    %988 = vmatmul.mubr.bf16.gmra.mxu0 %v128
    %v989 = vpop.f32.mrf.mxu0
    %v990 = vadd.f32 %v223, %v989
    %v991 = vpop.f32.mrf.mxu0
    %v992 = vadd.f32 %v227, %v991
    %v993 = vpop.f32.mrf.mxu0
    %v994 = vadd.f32 %v223, %v993
    %v995 = vpop.f32.mrf.mxu0
    %v996 = vadd.f32 %v227, %v995
    %997 = vmatprep.mubr.bf16.mxu0 0
    %998 = vmatmul.mubr.bf16.gmra.mxu0 %v129
    %v999 = vpop.f32.mrf.mxu0
    %v1000 = vadd.f32 %v223, %v999
    %v1001 = vpop.f32.mrf.mxu0
    %v1002 = vadd.f32 %v227, %v1001
    %v1003 = vpop.f32.mrf.mxu0
    %v1004 = vadd.f32 %v223, %v1003
    %v1005 = vpop.f32.mrf.mxu0
    %v1006 = vadd.f32 %v227, %v1005
    %1007 = vdwg.mxu0
    %vm1008 = vcmp.ge.f32.partialorder %v591, 0.0
    %vm1009 = vcmp.ge.f32.partialorder %v593, 0.0
    %vm1010 = vcmp.ge.f32.partialorder %v704, 0.0
    %vm1011 = vcmp.ge.f32.partialorder %v706, 0.0
    %vm1012 = vcmp.ge.f32.partialorder %v817, 0.0
    %vm1013 = vcmp.ge.f32.partialorder %v819, 0.0
    %vm1014 = vcmp.ge.f32.partialorder %v930, 0.0
    %vm1015 = vcmp.ge.f32.partialorder %v932, 0.0
    %vm1016 = vcmp.ge.f32.partialorder %v595, 0.0
    %vm1017 = vcmp.ge.f32.partialorder %v597, 0.0
    %vm1018 = vcmp.ge.f32.partialorder %v708, 0.0
    %vm1019 = vcmp.ge.f32.partialorder %v710, 0.0
    %vm1020 = vcmp.ge.f32.partialorder %v821, 0.0
    %vm1021 = vcmp.ge.f32.partialorder %v823, 0.0
    %vm1022 = vcmp.ge.f32.partialorder %v934, 0.0
    %vm1023 = vcmp.ge.f32.partialorder %v936, 0.0
    %vm1024 = vcmp.ge.f32.partialorder %v601, 0.0
    %vm1025 = vcmp.ge.f32.partialorder %v603, 0.0
    %vm1026 = vcmp.ge.f32.partialorder %v714, 0.0
    %vm1027 = vcmp.ge.f32.partialorder %v716, 0.0
    %vm1028 = vcmp.ge.f32.partialorder %v827, 0.0
    %vm1029 = vcmp.ge.f32.partialorder %v829, 0.0
    %vm1030 = vcmp.ge.f32.partialorder %v940, 0.0
    %vm1031 = vcmp.ge.f32.partialorder %v942, 0.0
    %vm1032 = vcmp.ge.f32.partialorder %v605, 0.0
    %vm1033 = vcmp.ge.f32.partialorder %v607, 0.0
    %vm1034 = vcmp.ge.f32.partialorder %v718, 0.0
    %vm1035 = vcmp.ge.f32.partialorder %v720, 0.0
    %vm1036 = vcmp.ge.f32.partialorder %v831, 0.0
    %vm1037 = vcmp.ge.f32.partialorder %v833, 0.0
    %vm1038 = vcmp.ge.f32.partialorder %v944, 0.0
    %vm1039 = vcmp.ge.f32.partialorder %v946, 0.0
    %vm1040 = vcmp.ge.f32.partialorder %v611, 0.0
    %vm1041 = vcmp.ge.f32.partialorder %v613, 0.0
    %vm1042 = vcmp.ge.f32.partialorder %v724, 0.0
    %vm1043 = vcmp.ge.f32.partialorder %v726, 0.0
    %vm1044 = vcmp.ge.f32.partialorder %v837, 0.0
    %vm1045 = vcmp.ge.f32.partialorder %v839, 0.0
    %vm1046 = vcmp.ge.f32.partialorder %v950, 0.0
    %vm1047 = vcmp.ge.f32.partialorder %v952, 0.0
    %vm1048 = vcmp.ge.f32.partialorder %v615, 0.0
    %vm1049 = vcmp.ge.f32.partialorder %v617, 0.0
    %vm1050 = vcmp.ge.f32.partialorder %v728, 0.0
    %vm1051 = vcmp.ge.f32.partialorder %v730, 0.0
    %vm1052 = vcmp.ge.f32.partialorder %v841, 0.0
    %vm1053 = vcmp.ge.f32.partialorder %v843, 0.0
    %vm1054 = vcmp.ge.f32.partialorder %v954, 0.0
    %vm1055 = vcmp.ge.f32.partialorder %v956, 0.0
    %vm1056 = vcmp.ge.f32.partialorder %v621, 0.0
    %vm1057 = vcmp.ge.f32.partialorder %v623, 0.0
    %vm1058 = vcmp.ge.f32.partialorder %v734, 0.0
    %vm1059 = vcmp.ge.f32.partialorder %v736, 0.0
    %vm1060 = vcmp.ge.f32.partialorder %v847, 0.0
    %vm1061 = vcmp.ge.f32.partialorder %v849, 0.0
    %vm1062 = vcmp.ge.f32.partialorder %v960, 0.0
    %vm1063 = vcmp.ge.f32.partialorder %v962, 0.0
    %vm1064 = vcmp.ge.f32.partialorder %v625, 0.0
    %vm1065 = vcmp.ge.f32.partialorder %v627, 0.0
    %vm1066 = vcmp.ge.f32.partialorder %v738, 0.0
    %vm1067 = vcmp.ge.f32.partialorder %v740, 0.0
    %vm1068 = vcmp.ge.f32.partialorder %v851, 0.0
    %vm1069 = vcmp.ge.f32.partialorder %v853, 0.0
    %vm1070 = vcmp.ge.f32.partialorder %v964, 0.0
    %vm1071 = vcmp.ge.f32.partialorder %v966, 0.0
    %vm1072 = vcmp.ge.f32.partialorder %v631, 0.0
    %vm1073 = vcmp.ge.f32.partialorder %v633, 0.0
    %vm1074 = vcmp.ge.f32.partialorder %v744, 0.0
    %vm1075 = vcmp.ge.f32.partialorder %v746, 0.0
    %vm1076 = vcmp.ge.f32.partialorder %v857, 0.0
    %vm1077 = vcmp.ge.f32.partialorder %v859, 0.0
    %vm1078 = vcmp.ge.f32.partialorder %v970, 0.0
    %vm1079 = vcmp.ge.f32.partialorder %v972, 0.0
    %vm1080 = vcmp.ge.f32.partialorder %v635, 0.0
    %vm1081 = vcmp.ge.f32.partialorder %v637, 0.0
    %vm1082 = vcmp.ge.f32.partialorder %v748, 0.0
    %vm1083 = vcmp.ge.f32.partialorder %v750, 0.0
    %vm1084 = vcmp.ge.f32.partialorder %v861, 0.0
    %vm1085 = vcmp.ge.f32.partialorder %v863, 0.0
    %vm1086 = vcmp.ge.f32.partialorder %v974, 0.0
    %vm1087 = vcmp.ge.f32.partialorder %v976, 0.0
    %vm1088 = vcmp.ge.f32.partialorder %v641, 0.0
    %vm1089 = vcmp.ge.f32.partialorder %v643, 0.0
    %vm1090 = vcmp.ge.f32.partialorder %v754, 0.0
    %vm1091 = vcmp.ge.f32.partialorder %v756, 0.0
    %vm1092 = vcmp.ge.f32.partialorder %v867, 0.0
    %vm1093 = vcmp.ge.f32.partialorder %v869, 0.0
    %vm1094 = vcmp.ge.f32.partialorder %v980, 0.0
    %vm1095 = vcmp.ge.f32.partialorder %v982, 0.0
    %vm1096 = vcmp.ge.f32.partialorder %v645, 0.0
    %vm1097 = vcmp.ge.f32.partialorder %v647, 0.0
    %vm1098 = vcmp.ge.f32.partialorder %v758, 0.0
    %vm1099 = vcmp.ge.f32.partialorder %v760, 0.0
    %vm1100 = vcmp.ge.f32.partialorder %v871, 0.0
    %vm1101 = vcmp.ge.f32.partialorder %v873, 0.0
    %vm1102 = vcmp.ge.f32.partialorder %v984, 0.0
    %vm1103 = vcmp.ge.f32.partialorder %v986, 0.0
    %vm1104 = vcmp.ge.f32.partialorder %v651, 0.0
    %vm1105 = vcmp.ge.f32.partialorder %v653, 0.0
    %vm1106 = vcmp.ge.f32.partialorder %v764, 0.0
    %vm1107 = vcmp.ge.f32.partialorder %v766, 0.0
    %vm1108 = vcmp.ge.f32.partialorder %v877, 0.0
    %vm1109 = vcmp.ge.f32.partialorder %v879, 0.0
    %vm1110 = vcmp.ge.f32.partialorder %v990, 0.0
    %vm1111 = vcmp.ge.f32.partialorder %v992, 0.0
    %vm1112 = vcmp.ge.f32.partialorder %v655, 0.0
    %vm1113 = vcmp.ge.f32.partialorder %v657, 0.0
    %vm1114 = vcmp.ge.f32.partialorder %v768, 0.0
    %vm1115 = vcmp.ge.f32.partialorder %v770, 0.0
    %vm1116 = vcmp.ge.f32.partialorder %v881, 0.0
    %vm1117 = vcmp.ge.f32.partialorder %v883, 0.0
    %vm1118 = vcmp.ge.f32.partialorder %v994, 0.0
    %vm1119 = vcmp.ge.f32.partialorder %v996, 0.0
    %vm1120 = vcmp.ge.f32.partialorder %v661, 0.0
    %vm1121 = vcmp.ge.f32.partialorder %v663, 0.0
    %vm1122 = vcmp.ge.f32.partialorder %v774, 0.0
    %vm1123 = vcmp.ge.f32.partialorder %v776, 0.0
    %vm1124 = vcmp.ge.f32.partialorder %v887, 0.0
    %vm1125 = vcmp.ge.f32.partialorder %v889, 0.0
    %vm1126 = vcmp.ge.f32.partialorder %v1000, 0.0
    %vm1127 = vcmp.ge.f32.partialorder %v1002, 0.0
    %vm1128 = vcmp.ge.f32.partialorder %v665, 0.0
    %vm1129 = vcmp.ge.f32.partialorder %v667, 0.0
    %vm1130 = vcmp.ge.f32.partialorder %v778, 0.0
    %vm1131 = vcmp.ge.f32.partialorder %v780, 0.0
    %vm1132 = vcmp.ge.f32.partialorder %v891, 0.0
    %vm1133 = vcmp.ge.f32.partialorder %v893, 0.0
    %vm1134 = vcmp.ge.f32.partialorder %v1004, 0.0
    %vm1135 = vcmp.ge.f32.partialorder %v1006, 0.0
    %v1136 = vmul.f32 %v591, 0.2
    %v1137 = vmul.f32 %v593, 0.2
    %v1138 = vmul.f32 %v704, 0.2
    %v1139 = vmul.f32 %v706, 0.2
    %v1140 = vmul.f32 %v817, 0.2
    %v1141 = vmul.f32 %v819, 0.2
    %v1142 = vmul.f32 %v930, 0.2
    %v1143 = vmul.f32 %v932, 0.2
    %v1144 = vmul.f32 %v595, 0.2
    %v1145 = vmul.f32 %v597, 0.2
    %v1146 = vmul.f32 %v708, 0.2
    %v1147 = vmul.f32 %v710, 0.2
    %v1148 = vmul.f32 %v821, 0.2
    %v1149 = vmul.f32 %v823, 0.2
    %v1150 = vmul.f32 %v934, 0.2
    %v1151 = vmul.f32 %v936, 0.2
    %v1152 = vmul.f32 %v601, 0.2
    %v1153 = vmul.f32 %v603, 0.2
    %v1154 = vmul.f32 %v714, 0.2
    %v1155 = vmul.f32 %v716, 0.2
    %v1156 = vmul.f32 %v827, 0.2
    %v1157 = vmul.f32 %v829, 0.2
    %v1158 = vmul.f32 %v940, 0.2
    %v1159 = vmul.f32 %v942, 0.2
    %v1160 = vmul.f32 %v605, 0.2
    %v1161 = vmul.f32 %v607, 0.2
    %v1162 = vmul.f32 %v718, 0.2
    %v1163 = vmul.f32 %v720, 0.2
    %v1164 = vmul.f32 %v831, 0.2
    %v1165 = vmul.f32 %v833, 0.2
    %v1166 = vmul.f32 %v944, 0.2
    %v1167 = vmul.f32 %v946, 0.2
    %v1168 = vmul.f32 %v611, 0.2
    %v1169 = vmul.f32 %v613, 0.2
    %v1170 = vmul.f32 %v724, 0.2
    %v1171 = vmul.f32 %v726, 0.2
    %v1172 = vmul.f32 %v837, 0.2
    %v1173 = vmul.f32 %v839, 0.2
    %v1174 = vmul.f32 %v950, 0.2
    %v1175 = vmul.f32 %v952, 0.2
    %v1176 = vmul.f32 %v615, 0.2
    %v1177 = vmul.f32 %v617, 0.2
    %v1178 = vmul.f32 %v728, 0.2
    %v1179 = vmul.f32 %v730, 0.2
    %v1180 = vmul.f32 %v841, 0.2
    %v1181 = vmul.f32 %v843, 0.2
    %v1182 = vmul.f32 %v954, 0.2
    %v1183 = vmul.f32 %v956, 0.2
    %v1184 = vmul.f32 %v621, 0.2
    %v1185 = vmul.f32 %v623, 0.2
    %v1186 = vmul.f32 %v734, 0.2
    %v1187 = vmul.f32 %v736, 0.2
    %v1188 = vmul.f32 %v847, 0.2
    %v1189 = vmul.f32 %v849, 0.2
    %v1190 = vmul.f32 %v960, 0.2
    %v1191 = vmul.f32 %v962, 0.2
    %v1192 = vmul.f32 %v625, 0.2
    %v1193 = vmul.f32 %v627, 0.2
    %v1194 = vmul.f32 %v738, 0.2
    %v1195 = vmul.f32 %v740, 0.2
    %v1196 = vmul.f32 %v851, 0.2
    %v1197 = vmul.f32 %v853, 0.2
    %v1198 = vmul.f32 %v964, 0.2
    %v1199 = vmul.f32 %v966, 0.2
    %v1200 = vmul.f32 %v631, 0.2
    %v1201 = vmul.f32 %v633, 0.2
    %v1202 = vmul.f32 %v744, 0.2
    %v1203 = vmul.f32 %v746, 0.2
    %v1204 = vmul.f32 %v857, 0.2
    %v1205 = vmul.f32 %v859, 0.2
    %v1206 = vmul.f32 %v970, 0.2
    %v1207 = vmul.f32 %v972, 0.2
    %v1208 = vmul.f32 %v635, 0.2
    %v1209 = vmul.f32 %v637, 0.2
    %v1210 = vmul.f32 %v748, 0.2
    %v1211 = vmul.f32 %v750, 0.2
    %v1212 = vmul.f32 %v861, 0.2
    %v1213 = vmul.f32 %v863, 0.2
    %v1214 = vmul.f32 %v974, 0.2
    %v1215 = vmul.f32 %v976, 0.2
    %v1216 = vmul.f32 %v641, 0.2
    %v1217 = vmul.f32 %v643, 0.2
    %v1218 = vmul.f32 %v754, 0.2
    %v1219 = vmul.f32 %v756, 0.2
    %v1220 = vmul.f32 %v867, 0.2
    %v1221 = vmul.f32 %v869, 0.2
    %v1222 = vmul.f32 %v980, 0.2
    %v1223 = vmul.f32 %v982, 0.2
    %v1224 = vmul.f32 %v645, 0.2
    %v1225 = vmul.f32 %v647, 0.2
    %v1226 = vmul.f32 %v758, 0.2
    %v1227 = vmul.f32 %v760, 0.2
    %v1228 = vmul.f32 %v871, 0.2
    %v1229 = vmul.f32 %v873, 0.2
    %v1230 = vmul.f32 %v984, 0.2
    %v1231 = vmul.f32 %v986, 0.2
    %v1232 = vmul.f32 %v651, 0.2
    %v1233 = vmul.f32 %v653, 0.2
    %v1234 = vmul.f32 %v764, 0.2
    %v1235 = vmul.f32 %v766, 0.2
    %v1236 = vmul.f32 %v877, 0.2
    %v1237 = vmul.f32 %v879, 0.2
    %v1238 = vmul.f32 %v990, 0.2
    %v1239 = vmul.f32 %v992, 0.2
    %v1240 = vmul.f32 %v655, 0.2
    %v1241 = vmul.f32 %v657, 0.2
    %v1242 = vmul.f32 %v768, 0.2
    %v1243 = vmul.f32 %v770, 0.2
    %v1244 = vmul.f32 %v881, 0.2
    %v1245 = vmul.f32 %v883, 0.2
    %v1246 = vmul.f32 %v994, 0.2
    %v1247 = vmul.f32 %v996, 0.2
    %v1248 = vmul.f32 %v661, 0.2
    %v1249 = vmul.f32 %v663, 0.2
    %v1250 = vmul.f32 %v774, 0.2
    %v1251 = vmul.f32 %v776, 0.2
    %v1252 = vmul.f32 %v887, 0.2
    %v1253 = vmul.f32 %v889, 0.2
    %v1254 = vmul.f32 %v1000, 0.2
    %v1255 = vmul.f32 %v1002, 0.2
    %v1256 = vmul.f32 %v665, 0.2
    %v1257 = vmul.f32 %v667, 0.2
    %v1258 = vmul.f32 %v778, 0.2
    %v1259 = vmul.f32 %v780, 0.2
    %v1260 = vmul.f32 %v891, 0.2
    %v1261 = vmul.f32 %v893, 0.2
    %v1262 = vmul.f32 %v1004, 0.2
    %v1263 = vmul.f32 %v1006, 0.2
    %v1264 = vsel %vm1008, %v591, %v1136
    %v1265 = vsel %vm1009, %v593, %v1137
    %v1266 = vsel %vm1010, %v704, %v1138
    %v1267 = vsel %vm1011, %v706, %v1139
    %v1268 = vsel %vm1012, %v817, %v1140
    %v1269 = vsel %vm1013, %v819, %v1141
    %v1270 = vsel %vm1014, %v930, %v1142
    %v1271 = vsel %vm1015, %v932, %v1143
    %v1272 = vsel %vm1016, %v595, %v1144
    %v1273 = vsel %vm1017, %v597, %v1145
    %v1274 = vsel %vm1018, %v708, %v1146
    %v1275 = vsel %vm1019, %v710, %v1147
    %v1276 = vsel %vm1020, %v821, %v1148
    %v1277 = vsel %vm1021, %v823, %v1149
    %v1278 = vsel %vm1022, %v934, %v1150
    %v1279 = vsel %vm1023, %v936, %v1151
    %v1280 = vsel %vm1024, %v601, %v1152
    %v1281 = vsel %vm1025, %v603, %v1153
    %v1282 = vsel %vm1026, %v714, %v1154
    %v1283 = vsel %vm1027, %v716, %v1155
    %v1284 = vsel %vm1028, %v827, %v1156
    %v1285 = vsel %vm1029, %v829, %v1157
    %v1286 = vsel %vm1030, %v940, %v1158
    %v1287 = vsel %vm1031, %v942, %v1159
    %v1288 = vsel %vm1032, %v605, %v1160
    %v1289 = vsel %vm1033, %v607, %v1161
    %v1290 = vsel %vm1034, %v718, %v1162
    %v1291 = vsel %vm1035, %v720, %v1163
    %v1292 = vsel %vm1036, %v831, %v1164
    %v1293 = vsel %vm1037, %v833, %v1165
    %v1294 = vsel %vm1038, %v944, %v1166
    %v1295 = vsel %vm1039, %v946, %v1167
    %v1296 = vsel %vm1040, %v611, %v1168
    %v1297 = vsel %vm1041, %v613, %v1169
    %v1298 = vsel %vm1042, %v724, %v1170
    %v1299 = vsel %vm1043, %v726, %v1171
    %v1300 = vsel %vm1044, %v837, %v1172
    %v1301 = vsel %vm1045, %v839, %v1173
    %v1302 = vsel %vm1046, %v950, %v1174
    %v1303 = vsel %vm1047, %v952, %v1175
    %v1304 = vsel %vm1048, %v615, %v1176
    %v1305 = vsel %vm1049, %v617, %v1177
    %v1306 = vsel %vm1050, %v728, %v1178
    %v1307 = vsel %vm1051, %v730, %v1179
    %v1308 = vsel %vm1052, %v841, %v1180
    %v1309 = vsel %vm1053, %v843, %v1181
    %v1310 = vsel %vm1054, %v954, %v1182
    %v1311 = vsel %vm1055, %v956, %v1183
    %v1312 = vsel %vm1056, %v621, %v1184
    %v1313 = vsel %vm1057, %v623, %v1185
    %v1314 = vsel %vm1058, %v734, %v1186
    %v1315 = vsel %vm1059, %v736, %v1187
    %v1316 = vsel %vm1060, %v847, %v1188
    %v1317 = vsel %vm1061, %v849, %v1189
    %v1318 = vsel %vm1062, %v960, %v1190
    %v1319 = vsel %vm1063, %v962, %v1191
    %v1320 = vsel %vm1064, %v625, %v1192
    %v1321 = vsel %vm1065, %v627, %v1193
    %v1322 = vsel %vm1066, %v738, %v1194
    %v1323 = vsel %vm1067, %v740, %v1195
    %v1324 = vsel %vm1068, %v851, %v1196
    %v1325 = vsel %vm1069, %v853, %v1197
    %v1326 = vsel %vm1070, %v964, %v1198
    %v1327 = vsel %vm1071, %v966, %v1199
    %v1328 = vsel %vm1072, %v631, %v1200
    %v1329 = vsel %vm1073, %v633, %v1201
    %v1330 = vsel %vm1074, %v744, %v1202
    %v1331 = vsel %vm1075, %v746, %v1203
    %v1332 = vsel %vm1076, %v857, %v1204
    %v1333 = vsel %vm1077, %v859, %v1205
    %v1334 = vsel %vm1078, %v970, %v1206
    %v1335 = vsel %vm1079, %v972, %v1207
    %v1336 = vsel %vm1080, %v635, %v1208
    %v1337 = vsel %vm1081, %v637, %v1209
    %v1338 = vsel %vm1082, %v748, %v1210
    %v1339 = vsel %vm1083, %v750, %v1211
    %v1340 = vsel %vm1084, %v861, %v1212
    %v1341 = vsel %vm1085, %v863, %v1213
    %v1342 = vsel %vm1086, %v974, %v1214
    %v1343 = vsel %vm1087, %v976, %v1215
    %v1344 = vsel %vm1088, %v641, %v1216
    %v1345 = vsel %vm1089, %v643, %v1217
    %v1346 = vsel %vm1090, %v754, %v1218
    %v1347 = vsel %vm1091, %v756, %v1219
    %v1348 = vsel %vm1092, %v867, %v1220
    %v1349 = vsel %vm1093, %v869, %v1221
    %v1350 = vsel %vm1094, %v980, %v1222
    %v1351 = vsel %vm1095, %v982, %v1223
    %v1352 = vsel %vm1096, %v645, %v1224
    %v1353 = vsel %vm1097, %v647, %v1225
    %v1354 = vsel %vm1098, %v758, %v1226
    %v1355 = vsel %vm1099, %v760, %v1227
    %v1356 = vsel %vm1100, %v871, %v1228
    %v1357 = vsel %vm1101, %v873, %v1229
    %v1358 = vsel %vm1102, %v984, %v1230
    %v1359 = vsel %vm1103, %v986, %v1231
    %v1360 = vsel %vm1104, %v651, %v1232
    %v1361 = vsel %vm1105, %v653, %v1233
    %v1362 = vsel %vm1106, %v764, %v1234
    %v1363 = vsel %vm1107, %v766, %v1235
    %v1364 = vsel %vm1108, %v877, %v1236
    %v1365 = vsel %vm1109, %v879, %v1237
    %v1366 = vsel %vm1110, %v990, %v1238
    %v1367 = vsel %vm1111, %v992, %v1239
    %v1368 = vsel %vm1112, %v655, %v1240
    %v1369 = vsel %vm1113, %v657, %v1241
    %v1370 = vsel %vm1114, %v768, %v1242
    %v1371 = vsel %vm1115, %v770, %v1243
    %v1372 = vsel %vm1116, %v881, %v1244
    %v1373 = vsel %vm1117, %v883, %v1245
    %v1374 = vsel %vm1118, %v994, %v1246
    %v1375 = vsel %vm1119, %v996, %v1247
    %v1376 = vsel %vm1120, %v661, %v1248
    %v1377 = vsel %vm1121, %v663, %v1249
    %v1378 = vsel %vm1122, %v774, %v1250
    %v1379 = vsel %vm1123, %v776, %v1251
    %v1380 = vsel %vm1124, %v887, %v1252
    %v1381 = vsel %vm1125, %v889, %v1253
    %v1382 = vsel %vm1126, %v1000, %v1254
    %v1383 = vsel %vm1127, %v1002, %v1255
    %v1384 = vsel %vm1128, %v665, %v1256
    %v1385 = vsel %vm1129, %v667, %v1257
    %v1386 = vsel %vm1130, %v778, %v1258
    %v1387 = vsel %vm1131, %v780, %v1259
    %v1388 = vsel %vm1132, %v891, %v1260
    %v1389 = vsel %vm1133, %v893, %v1261
    %v1390 = vsel %vm1134, %v1004, %v1262
    %v1391 = vsel %vm1135, %v1006, %v1263
    %v1392 = vld [vmem:[%s1] sm:$0xff]
    %v1393 = vld [vmem:[%s1 + $0x8] sm:$0xff]
    %v1394 = vld [vmem:[%s1 + $0x10] sm:$0xff]
    %v1395 = vld [vmem:[%s1 + $0x18] sm:$0xff]
    %v1396 = vld [vmem:[%s1 + $0x20] sm:$0xff]
    %v1397 = vld [vmem:[%s1 + $0x28] sm:$0xff]
    %v1398 = vld [vmem:[%s1 + $0x30] sm:$0xff]
    %v1399 = vld [vmem:[%s1 + $0x38] sm:$0xff]
    %v1400 = vld [vmem:[%s1 + $0x40] sm:$0xff]
    %v1401 = vld [vmem:[%s1 + $0x48] sm:$0xff]
    %v1402 = vld [vmem:[%s1 + $0x50] sm:$0xff]
    %v1403 = vld [vmem:[%s1 + $0x58] sm:$0xff]
    %v1404 = vld [vmem:[%s1 + $0x60] sm:$0xff]
    %v1405 = vld [vmem:[%s1 + $0x68] sm:$0xff]
    %v1406 = vld [vmem:[%s1 + $0x70] sm:$0xff]
    %v1407 = vld [vmem:[%s1 + $0x78] sm:$0xff]
    %v1408 = vld [vmem:[%s1 + $0x80] sm:$0xff]
    %v1409 = vld [vmem:[%s1 + $0x88] sm:$0xff]
    %v1410 = vld [vmem:[%s1 + $0x90] sm:$0xff]
    %v1411 = vld [vmem:[%s1 + $0x98] sm:$0xff]
    %v1412 = vld [vmem:[%s1 + $0xa0] sm:$0xff]
    %v1413 = vld [vmem:[%s1 + $0xa8] sm:$0xff]
    %v1414 = vld [vmem:[%s1 + $0xb0] sm:$0xff]
    %v1415 = vld [vmem:[%s1 + $0xb8] sm:$0xff]
    %v1416 = vld [vmem:[%s1 + $0xc0] sm:$0xff]
    %v1417 = vld [vmem:[%s1 + $0xc8] sm:$0xff]
    %v1418 = vld [vmem:[%s1 + $0xd0] sm:$0xff]
    %v1419 = vld [vmem:[%s1 + $0xd8] sm:$0xff]
    %v1420 = vld [vmem:[%s1 + $0xe0] sm:$0xff]
    %v1421 = vld [vmem:[%s1 + $0xe8] sm:$0xff]
    %v1422 = vld [vmem:[%s1 + $0xf0] sm:$0xff]
    %v1423 = vld [vmem:[%s1 + $0xf8] sm:$0xff]
    %v1424 = vld [vmem:[%s1 + $0x100] sm:$0xff]
    %v1425 = vld [vmem:[%s1 + $0x108] sm:$0xff]
    %v1426 = vld [vmem:[%s1 + $0x110] sm:$0xff]
    %v1427 = vld [vmem:[%s1 + $0x118] sm:$0xff]
    %v1428 = vld [vmem:[%s1 + $0x120] sm:$0xff]
    %v1429 = vld [vmem:[%s1 + $0x128] sm:$0xff]
    %v1430 = vld [vmem:[%s1 + $0x130] sm:$0xff]
    %v1431 = vld [vmem:[%s1 + $0x138] sm:$0xff]
    %v1432 = vld [vmem:[%s1 + $0x140] sm:$0xff]
    %v1433 = vld [vmem:[%s1 + $0x148] sm:$0xff]
    %v1434 = vld [vmem:[%s1 + $0x150] sm:$0xff]
    %v1435 = vld [vmem:[%s1 + $0x158] sm:$0xff]
    %v1436 = vld [vmem:[%s1 + $0x160] sm:$0xff]
    %v1437 = vld [vmem:[%s1 + $0x168] sm:$0xff]
    %v1438 = vld [vmem:[%s1 + $0x170] sm:$0xff]
    %v1439 = vld [vmem:[%s1 + $0x178] sm:$0xff]
    %v1440 = vld [vmem:[%s1 + $0x180] sm:$0xff]
    %v1441 = vld [vmem:[%s1 + $0x188] sm:$0xff]
    %v1442 = vld [vmem:[%s1 + $0x190] sm:$0xff]
    %v1443 = vld [vmem:[%s1 + $0x198] sm:$0xff]
    %v1444 = vld [vmem:[%s1 + $0x1a0] sm:$0xff]
    %v1445 = vld [vmem:[%s1 + $0x1a8] sm:$0xff]
    %v1446 = vld [vmem:[%s1 + $0x1b0] sm:$0xff]
    %v1447 = vld [vmem:[%s1 + $0x1b8] sm:$0xff]
    %v1448 = vld [vmem:[%s1 + $0x1c0] sm:$0xff]
    %v1449 = vld [vmem:[%s1 + $0x1c8] sm:$0xff]
    %v1450 = vld [vmem:[%s1 + $0x1d0] sm:$0xff]
    %v1451 = vld [vmem:[%s1 + $0x1d8] sm:$0xff]
    %v1452 = vld [vmem:[%s1 + $0x1e0] sm:$0xff]
    %v1453 = vld [vmem:[%s1 + $0x1e8] sm:$0xff]
    %v1454 = vld [vmem:[%s1 + $0x1f0] sm:$0xff]
    %v1455 = vld [vmem:[%s1 + $0x1f8] sm:$0xff]
    %v1456 = vld [vmem:[%s1 + $0x200] sm:$0xff]
    %v1457 = vld [vmem:[%s1 + $0x208] sm:$0xff]
    %v1458 = vld [vmem:[%s1 + $0x210] sm:$0xff]
    %v1459 = vld [vmem:[%s1 + $0x218] sm:$0xff]
    %v1460 = vld [vmem:[%s1 + $0x220] sm:$0xff]
    %v1461 = vld [vmem:[%s1 + $0x228] sm:$0xff]
    %v1462 = vld [vmem:[%s1 + $0x230] sm:$0xff]
    %v1463 = vld [vmem:[%s1 + $0x238] sm:$0xff]
    %v1464 = vld [vmem:[%s1 + $0x240] sm:$0xff]
    %v1465 = vld [vmem:[%s1 + $0x248] sm:$0xff]
    %v1466 = vld [vmem:[%s1 + $0x250] sm:$0xff]
    %v1467 = vld [vmem:[%s1 + $0x258] sm:$0xff]
    %v1468 = vld [vmem:[%s1 + $0x260] sm:$0xff]
    %v1469 = vld [vmem:[%s1 + $0x268] sm:$0xff]
    %v1470 = vld [vmem:[%s1 + $0x270] sm:$0xff]
    %v1471 = vld [vmem:[%s1 + $0x278] sm:$0xff]
    %v1472 = vld [vmem:[%s1 + $0x280] sm:$0xff]
    %v1473 = vld [vmem:[%s1 + $0x288] sm:$0xff]
    %v1474 = vld [vmem:[%s1 + $0x290] sm:$0xff]
    %v1475 = vld [vmem:[%s1 + $0x298] sm:$0xff]
    %v1476 = vld [vmem:[%s1 + $0x2a0] sm:$0xff]
    %v1477 = vld [vmem:[%s1 + $0x2a8] sm:$0xff]
    %v1478 = vld [vmem:[%s1 + $0x2b0] sm:$0xff]
    %v1479 = vld [vmem:[%s1 + $0x2b8] sm:$0xff]
    %v1480 = vld [vmem:[%s1 + $0x2c0] sm:$0xff]
    %v1481 = vld [vmem:[%s1 + $0x2c8] sm:$0xff]
    %v1482 = vld [vmem:[%s1 + $0x2d0] sm:$0xff]
    %v1483 = vld [vmem:[%s1 + $0x2d8] sm:$0xff]
    %v1484 = vld [vmem:[%s1 + $0x2e0] sm:$0xff]
    %v1485 = vld [vmem:[%s1 + $0x2e8] sm:$0xff]
    %v1486 = vld [vmem:[%s1 + $0x2f0] sm:$0xff]
    %v1487 = vld [vmem:[%s1 + $0x2f8] sm:$0xff]
    %v1488 = vld [vmem:[%s1 + $0x300] sm:$0xff]
    %v1489 = vld [vmem:[%s1 + $0x308] sm:$0xff]
    %v1490 = vld [vmem:[%s1 + $0x310] sm:$0xff]
    %v1491 = vld [vmem:[%s1 + $0x318] sm:$0xff]
    %v1492 = vld [vmem:[%s1 + $0x320] sm:$0xff]
    %v1493 = vld [vmem:[%s1 + $0x328] sm:$0xff]
    %v1494 = vld [vmem:[%s1 + $0x330] sm:$0xff]
    %v1495 = vld [vmem:[%s1 + $0x338] sm:$0xff]
    %v1496 = vld [vmem:[%s1 + $0x340] sm:$0xff]
    %v1497 = vld [vmem:[%s1 + $0x348] sm:$0xff]
    %v1498 = vld [vmem:[%s1 + $0x350] sm:$0xff]
    %v1499 = vld [vmem:[%s1 + $0x358] sm:$0xff]
    %v1500 = vld [vmem:[%s1 + $0x360] sm:$0xff]
    %v1501 = vld [vmem:[%s1 + $0x368] sm:$0xff]
    %v1502 = vld [vmem:[%s1 + $0x370] sm:$0xff]
    %v1503 = vld [vmem:[%s1 + $0x378] sm:$0xff]
    %v1504 = vld [vmem:[%s1 + $0x380] sm:$0xff]
    %v1505 = vld [vmem:[%s1 + $0x388] sm:$0xff]
    %v1506 = vld [vmem:[%s1 + $0x390] sm:$0xff]
    %v1507 = vld [vmem:[%s1 + $0x398] sm:$0xff]
    %v1508 = vld [vmem:[%s1 + $0x3a0] sm:$0xff]
    %v1509 = vld [vmem:[%s1 + $0x3a8] sm:$0xff]
    %v1510 = vld [vmem:[%s1 + $0x3b0] sm:$0xff]
    %v1511 = vld [vmem:[%s1 + $0x3b8] sm:$0xff]
    %v1512 = vld [vmem:[%s1 + $0x3c0] sm:$0xff]
    %v1513 = vld [vmem:[%s1 + $0x3c8] sm:$0xff]
    %v1514 = vld [vmem:[%s1 + $0x3d0] sm:$0xff]
    %v1515 = vld [vmem:[%s1 + $0x3d8] sm:$0xff]
    %v1516 = vld [vmem:[%s1 + $0x3e0] sm:$0xff]
    %v1517 = vld [vmem:[%s1 + $0x3e8] sm:$0xff]
    %v1518 = vld [vmem:[%s1 + $0x3f0] sm:$0xff]
    %v1519 = vld [vmem:[%s1 + $0x3f8] sm:$0xff]
    %v1520 = vmul.f32 %v1264, %v1392
    %v1521 = vmul.f32 %v1265, %v1393
    %v1522 = vmul.f32 %v1266, %v1394
    %v1523 = vmul.f32 %v1267, %v1395
    %v1524 = vmul.f32 %v1268, %v1396
    %v1525 = vmul.f32 %v1269, %v1397
    %v1526 = vmul.f32 %v1270, %v1398
    %v1527 = vmul.f32 %v1271, %v1399
    %v1528 = vmul.f32 %v1272, %v1400
    %v1529 = vmul.f32 %v1273, %v1401
    %v1530 = vmul.f32 %v1274, %v1402
    %v1531 = vmul.f32 %v1275, %v1403
    %v1532 = vmul.f32 %v1276, %v1404
    %v1533 = vmul.f32 %v1277, %v1405
    %v1534 = vmul.f32 %v1278, %v1406
    %v1535 = vmul.f32 %v1279, %v1407
    %v1536 = vmul.f32 %v1280, %v1408
    %v1537 = vmul.f32 %v1281, %v1409
    %v1538 = vmul.f32 %v1282, %v1410
    %v1539 = vmul.f32 %v1283, %v1411
    %v1540 = vmul.f32 %v1284, %v1412
    %v1541 = vmul.f32 %v1285, %v1413
    %v1542 = vmul.f32 %v1286, %v1414
    %v1543 = vmul.f32 %v1287, %v1415
    %v1544 = vmul.f32 %v1288, %v1416
    %v1545 = vmul.f32 %v1289, %v1417
    %v1546 = vmul.f32 %v1290, %v1418
    %v1547 = vmul.f32 %v1291, %v1419
    %v1548 = vmul.f32 %v1292, %v1420
    %v1549 = vmul.f32 %v1293, %v1421
    %v1550 = vmul.f32 %v1294, %v1422
    %v1551 = vmul.f32 %v1295, %v1423
    %v1552 = vmul.f32 %v1296, %v1424
    %v1553 = vmul.f32 %v1297, %v1425
    %v1554 = vmul.f32 %v1298, %v1426
    %v1555 = vmul.f32 %v1299, %v1427
    %v1556 = vmul.f32 %v1300, %v1428
    %v1557 = vmul.f32 %v1301, %v1429
    %v1558 = vmul.f32 %v1302, %v1430
    %v1559 = vmul.f32 %v1303, %v1431
    %v1560 = vmul.f32 %v1304, %v1432
    %v1561 = vmul.f32 %v1305, %v1433
    %v1562 = vmul.f32 %v1306, %v1434
    %v1563 = vmul.f32 %v1307, %v1435
    %v1564 = vmul.f32 %v1308, %v1436
    %v1565 = vmul.f32 %v1309, %v1437
    %v1566 = vmul.f32 %v1310, %v1438
    %v1567 = vmul.f32 %v1311, %v1439
    %v1568 = vmul.f32 %v1312, %v1440
    %v1569 = vmul.f32 %v1313, %v1441
    %v1570 = vmul.f32 %v1314, %v1442
    %v1571 = vmul.f32 %v1315, %v1443
    %v1572 = vmul.f32 %v1316, %v1444
    %v1573 = vmul.f32 %v1317, %v1445
    %v1574 = vmul.f32 %v1318, %v1446
    %v1575 = vmul.f32 %v1319, %v1447
    %v1576 = vmul.f32 %v1320, %v1448
    %v1577 = vmul.f32 %v1321, %v1449
    %v1578 = vmul.f32 %v1322, %v1450
    %v1579 = vmul.f32 %v1323, %v1451
    %v1580 = vmul.f32 %v1324, %v1452
    %v1581 = vmul.f32 %v1325, %v1453
    %v1582 = vmul.f32 %v1326, %v1454
    %v1583 = vmul.f32 %v1327, %v1455
    %v1584 = vmul.f32 %v1328, %v1456
    %v1585 = vmul.f32 %v1329, %v1457
    %v1586 = vmul.f32 %v1330, %v1458
    %v1587 = vmul.f32 %v1331, %v1459
    %v1588 = vmul.f32 %v1332, %v1460
    %v1589 = vmul.f32 %v1333, %v1461
    %v1590 = vmul.f32 %v1334, %v1462
    %v1591 = vmul.f32 %v1335, %v1463
    %v1592 = vmul.f32 %v1336, %v1464
    %v1593 = vmul.f32 %v1337, %v1465
    %v1594 = vmul.f32 %v1338, %v1466
    %v1595 = vmul.f32 %v1339, %v1467
    %v1596 = vmul.f32 %v1340, %v1468
    %v1597 = vmul.f32 %v1341, %v1469
    %v1598 = vmul.f32 %v1342, %v1470
    %v1599 = vmul.f32 %v1343, %v1471
    %v1600 = vmul.f32 %v1344, %v1472
    %v1601 = vmul.f32 %v1345, %v1473
    %v1602 = vmul.f32 %v1346, %v1474
    %v1603 = vmul.f32 %v1347, %v1475
    %v1604 = vmul.f32 %v1348, %v1476
    %v1605 = vmul.f32 %v1349, %v1477
    %v1606 = vmul.f32 %v1350, %v1478
    %v1607 = vmul.f32 %v1351, %v1479
    %v1608 = vmul.f32 %v1352, %v1480
    %v1609 = vmul.f32 %v1353, %v1481
    %v1610 = vmul.f32 %v1354, %v1482
    %v1611 = vmul.f32 %v1355, %v1483
    %v1612 = vmul.f32 %v1356, %v1484
    %v1613 = vmul.f32 %v1357, %v1485
    %v1614 = vmul.f32 %v1358, %v1486
    %v1615 = vmul.f32 %v1359, %v1487
    %v1616 = vmul.f32 %v1360, %v1488
    %v1617 = vmul.f32 %v1361, %v1489
    %v1618 = vmul.f32 %v1362, %v1490
    %v1619 = vmul.f32 %v1363, %v1491
    %v1620 = vmul.f32 %v1364, %v1492
    %v1621 = vmul.f32 %v1365, %v1493
    %v1622 = vmul.f32 %v1366, %v1494
    %v1623 = vmul.f32 %v1367, %v1495
    %v1624 = vmul.f32 %v1368, %v1496
    %v1625 = vmul.f32 %v1369, %v1497
    %v1626 = vmul.f32 %v1370, %v1498
    %v1627 = vmul.f32 %v1371, %v1499
    %v1628 = vmul.f32 %v1372, %v1500
    %v1629 = vmul.f32 %v1373, %v1501
    %v1630 = vmul.f32 %v1374, %v1502
    %v1631 = vmul.f32 %v1375, %v1503
    %v1632 = vmul.f32 %v1376, %v1504
    %v1633 = vmul.f32 %v1377, %v1505
    %v1634 = vmul.f32 %v1378, %v1506
    %v1635 = vmul.f32 %v1379, %v1507
    %v1636 = vmul.f32 %v1380, %v1508
    %v1637 = vmul.f32 %v1381, %v1509
    %v1638 = vmul.f32 %v1382, %v1510
    %v1639 = vmul.f32 %v1383, %v1511
    %v1640 = vmul.f32 %v1384, %v1512
    %v1641 = vmul.f32 %v1385, %v1513
    %v1642 = vmul.f32 %v1386, %v1514
    %v1643 = vmul.f32 %v1387, %v1515
    %v1644 = vmul.f32 %v1388, %v1516
    %v1645 = vmul.f32 %v1389, %v1517
    %v1646 = vmul.f32 %v1390, %v1518
    %v1647 = vmul.f32 %v1391, %v1519
    %v1648 = vpack.c.bf16 %v1528, %v1520
    %v1649 = vpack.c.bf16 %v1529, %v1521
    %v1650 = vpack.c.bf16 %v1530, %v1522
    %v1651 = vpack.c.bf16 %v1531, %v1523
    %v1652 = vpack.c.bf16 %v1532, %v1524
    %v1653 = vpack.c.bf16 %v1533, %v1525
    %v1654 = vpack.c.bf16 %v1534, %v1526
    %v1655 = vpack.c.bf16 %v1535, %v1527
    %v1656 = vpack.c.bf16 %v1544, %v1536
    %v1657 = vpack.c.bf16 %v1545, %v1537
    %v1658 = vpack.c.bf16 %v1546, %v1538
    %v1659 = vpack.c.bf16 %v1547, %v1539
    %v1660 = vpack.c.bf16 %v1548, %v1540
    %v1661 = vpack.c.bf16 %v1549, %v1541
    %v1662 = vpack.c.bf16 %v1550, %v1542
    %v1663 = vpack.c.bf16 %v1551, %v1543
    %v1664 = vpack.c.bf16 %v1560, %v1552
    %v1665 = vpack.c.bf16 %v1561, %v1553
    %v1666 = vpack.c.bf16 %v1562, %v1554
    %v1667 = vpack.c.bf16 %v1563, %v1555
    %v1668 = vpack.c.bf16 %v1564, %v1556
    %v1669 = vpack.c.bf16 %v1565, %v1557
    %v1670 = vpack.c.bf16 %v1566, %v1558
    %v1671 = vpack.c.bf16 %v1567, %v1559
    %v1672 = vpack.c.bf16 %v1576, %v1568
    %v1673 = vpack.c.bf16 %v1577, %v1569
    %v1674 = vpack.c.bf16 %v1578, %v1570
    %v1675 = vpack.c.bf16 %v1579, %v1571
    %v1676 = vpack.c.bf16 %v1580, %v1572
    %v1677 = vpack.c.bf16 %v1581, %v1573
    %v1678 = vpack.c.bf16 %v1582, %v1574
    %v1679 = vpack.c.bf16 %v1583, %v1575
    %v1680 = vpack.c.bf16 %v1592, %v1584
    %v1681 = vpack.c.bf16 %v1593, %v1585
    %v1682 = vpack.c.bf16 %v1594, %v1586
    %v1683 = vpack.c.bf16 %v1595, %v1587
    %v1684 = vpack.c.bf16 %v1596, %v1588
    %v1685 = vpack.c.bf16 %v1597, %v1589
    %v1686 = vpack.c.bf16 %v1598, %v1590
    %v1687 = vpack.c.bf16 %v1599, %v1591
    %v1688 = vpack.c.bf16 %v1608, %v1600
    %v1689 = vpack.c.bf16 %v1609, %v1601
    %v1690 = vpack.c.bf16 %v1610, %v1602
    %v1691 = vpack.c.bf16 %v1611, %v1603
    %v1692 = vpack.c.bf16 %v1612, %v1604
    %v1693 = vpack.c.bf16 %v1613, %v1605
    %v1694 = vpack.c.bf16 %v1614, %v1606
    %v1695 = vpack.c.bf16 %v1615, %v1607
    %v1696 = vpack.c.bf16 %v1624, %v1616
    %v1697 = vpack.c.bf16 %v1625, %v1617
    %v1698 = vpack.c.bf16 %v1626, %v1618
    %v1699 = vpack.c.bf16 %v1627, %v1619
    %v1700 = vpack.c.bf16 %v1628, %v1620
    %v1701 = vpack.c.bf16 %v1629, %v1621
    %v1702 = vpack.c.bf16 %v1630, %v1622
    %v1703 = vpack.c.bf16 %v1631, %v1623
    %v1704 = vpack.c.bf16 %v1640, %v1632
    %v1705 = vpack.c.bf16 %v1641, %v1633
    %v1706 = vpack.c.bf16 %v1642, %v1634
    %v1707 = vpack.c.bf16 %v1643, %v1635
    %v1708 = vpack.c.bf16 %v1644, %v1636
    %v1709 = vpack.c.bf16 %v1645, %v1637
    %v1710 = vpack.c.bf16 %v1646, %v1638
    %v1711 = vpack.c.bf16 %v1647, %v1639
    %v1712 = vld [vmem:[%s6] sm:$0xff]
    %v1713 = vld [vmem:[%s6 + $0x8] sm:$0xff]
    %v1714 = vld [vmem:[%s6 + $0x10] sm:$0xff]
    %v1715 = vld [vmem:[%s6 + $0x18] sm:$0xff]
    %v1716 = vld [vmem:[%s6 + $0x20] sm:$0xff]
    %v1717 = vld [vmem:[%s6 + $0x28] sm:$0xff]
    %v1718 = vld [vmem:[%s6 + $0x30] sm:$0xff]
    %v1719 = vld [vmem:[%s6 + $0x38] sm:$0xff]
    %v1720 = vld [vmem:[%s6 + $0x40] sm:$0xff]
    %v1721 = vld [vmem:[%s6 + $0x48] sm:$0xff]
    %v1722 = vld [vmem:[%s6 + $0x50] sm:$0xff]
    %v1723 = vld [vmem:[%s6 + $0x58] sm:$0xff]
    %v1724 = vld [vmem:[%s6 + $0x60] sm:$0xff]
    %v1725 = vld [vmem:[%s6 + $0x68] sm:$0xff]
    %v1726 = vld [vmem:[%s6 + $0x70] sm:$0xff]
    %v1727 = vld [vmem:[%s6 + $0x78] sm:$0xff]
    %v1728 = vld [vmem:[%s6 + $0x80] sm:$0xff]
    %v1729 = vld [vmem:[%s6 + $0x88] sm:$0xff]
    %v1730 = vld [vmem:[%s6 + $0x90] sm:$0xff]
    %v1731 = vld [vmem:[%s6 + $0x98] sm:$0xff]
    %v1732 = vld [vmem:[%s6 + $0xa0] sm:$0xff]
    %v1733 = vld [vmem:[%s6 + $0xa8] sm:$0xff]
    %v1734 = vld [vmem:[%s6 + $0xb0] sm:$0xff]
    %v1735 = vld [vmem:[%s6 + $0xb8] sm:$0xff]
    %v1736 = vld [vmem:[%s6 + $0xc0] sm:$0xff]
    %v1737 = vld [vmem:[%s6 + $0xc8] sm:$0xff]
    %v1738 = vld [vmem:[%s6 + $0xd0] sm:$0xff]
    %v1739 = vld [vmem:[%s6 + $0xd8] sm:$0xff]
    %v1740 = vld [vmem:[%s6 + $0xe0] sm:$0xff]
    %v1741 = vld [vmem:[%s6 + $0xe8] sm:$0xff]
    %v1742 = vld [vmem:[%s6 + $0xf0] sm:$0xff]
    %v1743 = vld [vmem:[%s6 + $0xf8] sm:$0xff]
    %v1744 = vld [vmem:[%s6 + $0x100] sm:$0xff]
    %v1745 = vld [vmem:[%s6 + $0x108] sm:$0xff]
    %v1746 = vld [vmem:[%s6 + $0x110] sm:$0xff]
    %v1747 = vld [vmem:[%s6 + $0x118] sm:$0xff]
    %v1748 = vld [vmem:[%s6 + $0x120] sm:$0xff]
    %v1749 = vld [vmem:[%s6 + $0x128] sm:$0xff]
    %v1750 = vld [vmem:[%s6 + $0x130] sm:$0xff]
    %v1751 = vld [vmem:[%s6 + $0x138] sm:$0xff]
    %v1752 = vld [vmem:[%s6 + $0x140] sm:$0xff]
    %v1753 = vld [vmem:[%s6 + $0x148] sm:$0xff]
    %v1754 = vld [vmem:[%s6 + $0x150] sm:$0xff]
    %v1755 = vld [vmem:[%s6 + $0x158] sm:$0xff]
    %v1756 = vld [vmem:[%s6 + $0x160] sm:$0xff]
    %v1757 = vld [vmem:[%s6 + $0x168] sm:$0xff]
    %v1758 = vld [vmem:[%s6 + $0x170] sm:$0xff]
    %v1759 = vld [vmem:[%s6 + $0x178] sm:$0xff]
    %v1760 = vld [vmem:[%s6 + $0x180] sm:$0xff]
    %v1761 = vld [vmem:[%s6 + $0x188] sm:$0xff]
    %v1762 = vld [vmem:[%s6 + $0x190] sm:$0xff]
    %v1763 = vld [vmem:[%s6 + $0x198] sm:$0xff]
    %v1764 = vld [vmem:[%s6 + $0x1a0] sm:$0xff]
    %v1765 = vld [vmem:[%s6 + $0x1a8] sm:$0xff]
    %v1766 = vld [vmem:[%s6 + $0x1b0] sm:$0xff]
    %v1767 = vld [vmem:[%s6 + $0x1b8] sm:$0xff]
    %v1768 = vld [vmem:[%s6 + $0x1c0] sm:$0xff]
    %v1769 = vld [vmem:[%s6 + $0x1c8] sm:$0xff]
    %v1770 = vld [vmem:[%s6 + $0x1d0] sm:$0xff]
    %v1771 = vld [vmem:[%s6 + $0x1d8] sm:$0xff]
    %v1772 = vld [vmem:[%s6 + $0x1e0] sm:$0xff]
    %v1773 = vld [vmem:[%s6 + $0x1e8] sm:$0xff]
    %v1774 = vld [vmem:[%s6 + $0x1f0] sm:$0xff]
    %v1775 = vld [vmem:[%s6 + $0x1f8] sm:$0xff]
    %v1776 = vld [vmem:[%s6 + $0x200] sm:$0xff]
    %v1777 = vld [vmem:[%s6 + $0x208] sm:$0xff]
    %v1778 = vld [vmem:[%s6 + $0x210] sm:$0xff]
    %v1779 = vld [vmem:[%s6 + $0x218] sm:$0xff]
    %v1780 = vld [vmem:[%s6 + $0x220] sm:$0xff]
    %v1781 = vld [vmem:[%s6 + $0x228] sm:$0xff]
    %v1782 = vld [vmem:[%s6 + $0x230] sm:$0xff]
    %v1783 = vld [vmem:[%s6 + $0x238] sm:$0xff]
    %v1784 = vld [vmem:[%s6 + $0x240] sm:$0xff]
    %v1785 = vld [vmem:[%s6 + $0x248] sm:$0xff]
    %v1786 = vld [vmem:[%s6 + $0x250] sm:$0xff]
    %v1787 = vld [vmem:[%s6 + $0x258] sm:$0xff]
    %v1788 = vld [vmem:[%s6 + $0x260] sm:$0xff]
    %v1789 = vld [vmem:[%s6 + $0x268] sm:$0xff]
    %v1790 = vld [vmem:[%s6 + $0x270] sm:$0xff]
    %v1791 = vld [vmem:[%s6 + $0x278] sm:$0xff]
    %v1792 = vld [vmem:[%s6 + $0x280] sm:$0xff]
    %v1793 = vld [vmem:[%s6 + $0x288] sm:$0xff]
    %v1794 = vld [vmem:[%s6 + $0x290] sm:$0xff]
    %v1795 = vld [vmem:[%s6 + $0x298] sm:$0xff]
    %v1796 = vld [vmem:[%s6 + $0x2a0] sm:$0xff]
    %v1797 = vld [vmem:[%s6 + $0x2a8] sm:$0xff]
    %v1798 = vld [vmem:[%s6 + $0x2b0] sm:$0xff]
    %v1799 = vld [vmem:[%s6 + $0x2b8] sm:$0xff]
    %v1800 = vld [vmem:[%s6 + $0x2c0] sm:$0xff]
    %v1801 = vld [vmem:[%s6 + $0x2c8] sm:$0xff]
    %v1802 = vld [vmem:[%s6 + $0x2d0] sm:$0xff]
    %v1803 = vld [vmem:[%s6 + $0x2d8] sm:$0xff]
    %v1804 = vld [vmem:[%s6 + $0x2e0] sm:$0xff]
    %v1805 = vld [vmem:[%s6 + $0x2e8] sm:$0xff]
    %v1806 = vld [vmem:[%s6 + $0x2f0] sm:$0xff]
    %v1807 = vld [vmem:[%s6 + $0x2f8] sm:$0xff]
    %v1808 = vld [vmem:[%s6 + $0x300] sm:$0xff]
    %v1809 = vld [vmem:[%s6 + $0x308] sm:$0xff]
    %v1810 = vld [vmem:[%s6 + $0x310] sm:$0xff]
    %v1811 = vld [vmem:[%s6 + $0x318] sm:$0xff]
    %v1812 = vld [vmem:[%s6 + $0x320] sm:$0xff]
    %v1813 = vld [vmem:[%s6 + $0x328] sm:$0xff]
    %v1814 = vld [vmem:[%s6 + $0x330] sm:$0xff]
    %v1815 = vld [vmem:[%s6 + $0x338] sm:$0xff]
    %v1816 = vld [vmem:[%s6 + $0x340] sm:$0xff]
    %v1817 = vld [vmem:[%s6 + $0x348] sm:$0xff]
    %v1818 = vld [vmem:[%s6 + $0x350] sm:$0xff]
    %v1819 = vld [vmem:[%s6 + $0x358] sm:$0xff]
    %v1820 = vld [vmem:[%s6 + $0x360] sm:$0xff]
    %v1821 = vld [vmem:[%s6 + $0x368] sm:$0xff]
    %v1822 = vld [vmem:[%s6 + $0x370] sm:$0xff]
    %v1823 = vld [vmem:[%s6 + $0x378] sm:$0xff]
    %v1824 = vld [vmem:[%s6 + $0x380] sm:$0xff]
    %v1825 = vld [vmem:[%s6 + $0x388] sm:$0xff]
    %v1826 = vld [vmem:[%s6 + $0x390] sm:$0xff]
    %v1827 = vld [vmem:[%s6 + $0x398] sm:$0xff]
    %v1828 = vld [vmem:[%s6 + $0x3a0] sm:$0xff]
    %v1829 = vld [vmem:[%s6 + $0x3a8] sm:$0xff]
    %v1830 = vld [vmem:[%s6 + $0x3b0] sm:$0xff]
    %v1831 = vld [vmem:[%s6 + $0x3b8] sm:$0xff]
    %v1832 = vld [vmem:[%s6 + $0x3c0] sm:$0xff]
    %v1833 = vld [vmem:[%s6 + $0x3c8] sm:$0xff]
    %v1834 = vld [vmem:[%s6 + $0x3d0] sm:$0xff]
    %v1835 = vld [vmem:[%s6 + $0x3d8] sm:$0xff]
    %v1836 = vld [vmem:[%s6 + $0x3e0] sm:$0xff]
    %v1837 = vld [vmem:[%s6 + $0x3e8] sm:$0xff]
    %v1838 = vld [vmem:[%s6 + $0x3f0] sm:$0xff]
    %v1839 = vld [vmem:[%s6 + $0x3f8] sm:$0xff]
    %v1840 = vld [vmem:[%s6 + $0x400] sm:$0xff]
    %v1841 = vld [vmem:[%s6 + $0x408] sm:$0xff]
    %v1842 = vld [vmem:[%s6 + $0x410] sm:$0xff]
    %v1843 = vld [vmem:[%s6 + $0x418] sm:$0xff]
    %v1844 = vld [vmem:[%s6 + $0x420] sm:$0xff]
    %v1845 = vld [vmem:[%s6 + $0x428] sm:$0xff]
    %v1846 = vld [vmem:[%s6 + $0x430] sm:$0xff]
    %v1847 = vld [vmem:[%s6 + $0x438] sm:$0xff]
    %v1848 = vld [vmem:[%s6 + $0x440] sm:$0xff]
    %v1849 = vld [vmem:[%s6 + $0x448] sm:$0xff]
    %v1850 = vld [vmem:[%s6 + $0x450] sm:$0xff]
    %v1851 = vld [vmem:[%s6 + $0x458] sm:$0xff]
    %v1852 = vld [vmem:[%s6 + $0x460] sm:$0xff]
    %v1853 = vld [vmem:[%s6 + $0x468] sm:$0xff]
    %v1854 = vld [vmem:[%s6 + $0x470] sm:$0xff]
    %v1855 = vld [vmem:[%s6 + $0x478] sm:$0xff]
    %v1856 = vld [vmem:[%s6 + $0x480] sm:$0xff]
    %v1857 = vld [vmem:[%s6 + $0x488] sm:$0xff]
    %v1858 = vld [vmem:[%s6 + $0x490] sm:$0xff]
    %v1859 = vld [vmem:[%s6 + $0x498] sm:$0xff]
    %v1860 = vld [vmem:[%s6 + $0x4a0] sm:$0xff]
    %v1861 = vld [vmem:[%s6 + $0x4a8] sm:$0xff]
    %v1862 = vld [vmem:[%s6 + $0x4b0] sm:$0xff]
    %v1863 = vld [vmem:[%s6 + $0x4b8] sm:$0xff]
    %v1864 = vld [vmem:[%s6 + $0x4c0] sm:$0xff]
    %v1865 = vld [vmem:[%s6 + $0x4c8] sm:$0xff]
    %v1866 = vld [vmem:[%s6 + $0x4d0] sm:$0xff]
    %v1867 = vld [vmem:[%s6 + $0x4d8] sm:$0xff]
    %v1868 = vld [vmem:[%s6 + $0x4e0] sm:$0xff]
    %v1869 = vld [vmem:[%s6 + $0x4e8] sm:$0xff]
    %v1870 = vld [vmem:[%s6 + $0x4f0] sm:$0xff]
    %v1871 = vld [vmem:[%s6 + $0x4f8] sm:$0xff]
    %v1872 = vld [vmem:[%s6 + $0x500] sm:$0xff]
    %v1873 = vld [vmem:[%s6 + $0x508] sm:$0xff]
    %v1874 = vld [vmem:[%s6 + $0x510] sm:$0xff]
    %v1875 = vld [vmem:[%s6 + $0x518] sm:$0xff]
    %v1876 = vld [vmem:[%s6 + $0x520] sm:$0xff]
    %v1877 = vld [vmem:[%s6 + $0x528] sm:$0xff]
    %v1878 = vld [vmem:[%s6 + $0x530] sm:$0xff]
    %v1879 = vld [vmem:[%s6 + $0x538] sm:$0xff]
    %v1880 = vld [vmem:[%s6 + $0x540] sm:$0xff]
    %v1881 = vld [vmem:[%s6 + $0x548] sm:$0xff]
    %v1882 = vld [vmem:[%s6 + $0x550] sm:$0xff]
    %v1883 = vld [vmem:[%s6 + $0x558] sm:$0xff]
    %v1884 = vld [vmem:[%s6 + $0x560] sm:$0xff]
    %v1885 = vld [vmem:[%s6 + $0x568] sm:$0xff]
    %v1886 = vld [vmem:[%s6 + $0x570] sm:$0xff]
    %v1887 = vld [vmem:[%s6 + $0x578] sm:$0xff]
    %v1888 = vld [vmem:[%s6 + $0x580] sm:$0xff]
    %v1889 = vld [vmem:[%s6 + $0x588] sm:$0xff]
    %v1890 = vld [vmem:[%s6 + $0x590] sm:$0xff]
    %v1891 = vld [vmem:[%s6 + $0x598] sm:$0xff]
    %v1892 = vld [vmem:[%s6 + $0x5a0] sm:$0xff]
    %v1893 = vld [vmem:[%s6 + $0x5a8] sm:$0xff]
    %v1894 = vld [vmem:[%s6 + $0x5b0] sm:$0xff]
    %v1895 = vld [vmem:[%s6 + $0x5b8] sm:$0xff]
    %v1896 = vld [vmem:[%s6 + $0x5c0] sm:$0xff]
    %v1897 = vld [vmem:[%s6 + $0x5c8] sm:$0xff]
    %v1898 = vld [vmem:[%s6 + $0x5d0] sm:$0xff]
    %v1899 = vld [vmem:[%s6 + $0x5d8] sm:$0xff]
    %v1900 = vld [vmem:[%s6 + $0x5e0] sm:$0xff]
    %v1901 = vld [vmem:[%s6 + $0x5e8] sm:$0xff]
    %v1902 = vld [vmem:[%s6 + $0x5f0] sm:$0xff]
    %v1903 = vld [vmem:[%s6 + $0x5f8] sm:$0xff]
    %v1904 = vld [vmem:[%s6 + $0x600] sm:$0xff]
    %v1905 = vld [vmem:[%s6 + $0x608] sm:$0xff]
    %v1906 = vld [vmem:[%s6 + $0x610] sm:$0xff]
    %v1907 = vld [vmem:[%s6 + $0x618] sm:$0xff]
    %v1908 = vld [vmem:[%s6 + $0x620] sm:$0xff]
    %v1909 = vld [vmem:[%s6 + $0x628] sm:$0xff]
    %v1910 = vld [vmem:[%s6 + $0x630] sm:$0xff]
    %v1911 = vld [vmem:[%s6 + $0x638] sm:$0xff]
    %v1912 = vld [vmem:[%s6 + $0x640] sm:$0xff]
    %v1913 = vld [vmem:[%s6 + $0x648] sm:$0xff]
    %v1914 = vld [vmem:[%s6 + $0x650] sm:$0xff]
    %v1915 = vld [vmem:[%s6 + $0x658] sm:$0xff]
    %v1916 = vld [vmem:[%s6 + $0x660] sm:$0xff]
    %v1917 = vld [vmem:[%s6 + $0x668] sm:$0xff]
    %v1918 = vld [vmem:[%s6 + $0x670] sm:$0xff]
    %v1919 = vld [vmem:[%s6 + $0x678] sm:$0xff]
    %v1920 = vld [vmem:[%s6 + $0x680] sm:$0xff]
    %v1921 = vld [vmem:[%s6 + $0x688] sm:$0xff]
    %v1922 = vld [vmem:[%s6 + $0x690] sm:$0xff]
    %v1923 = vld [vmem:[%s6 + $0x698] sm:$0xff]
    %v1924 = vld [vmem:[%s6 + $0x6a0] sm:$0xff]
    %v1925 = vld [vmem:[%s6 + $0x6a8] sm:$0xff]
    %v1926 = vld [vmem:[%s6 + $0x6b0] sm:$0xff]
    %v1927 = vld [vmem:[%s6 + $0x6b8] sm:$0xff]
    %v1928 = vld [vmem:[%s6 + $0x6c0] sm:$0xff]
    %v1929 = vld [vmem:[%s6 + $0x6c8] sm:$0xff]
    %v1930 = vld [vmem:[%s6 + $0x6d0] sm:$0xff]
    %v1931 = vld [vmem:[%s6 + $0x6d8] sm:$0xff]
    %v1932 = vld [vmem:[%s6 + $0x6e0] sm:$0xff]
    %v1933 = vld [vmem:[%s6 + $0x6e8] sm:$0xff]
    %v1934 = vld [vmem:[%s6 + $0x6f0] sm:$0xff]
    %v1935 = vld [vmem:[%s6 + $0x6f8] sm:$0xff]
    %v1936 = vld [vmem:[%s6 + $0x700] sm:$0xff]
    %v1937 = vld [vmem:[%s6 + $0x708] sm:$0xff]
    %v1938 = vld [vmem:[%s6 + $0x710] sm:$0xff]
    %v1939 = vld [vmem:[%s6 + $0x718] sm:$0xff]
    %v1940 = vld [vmem:[%s6 + $0x720] sm:$0xff]
    %v1941 = vld [vmem:[%s6 + $0x728] sm:$0xff]
    %v1942 = vld [vmem:[%s6 + $0x730] sm:$0xff]
    %v1943 = vld [vmem:[%s6 + $0x738] sm:$0xff]
    %v1944 = vld [vmem:[%s6 + $0x740] sm:$0xff]
    %v1945 = vld [vmem:[%s6 + $0x748] sm:$0xff]
    %v1946 = vld [vmem:[%s6 + $0x750] sm:$0xff]
    %v1947 = vld [vmem:[%s6 + $0x758] sm:$0xff]
    %v1948 = vld [vmem:[%s6 + $0x760] sm:$0xff]
    %v1949 = vld [vmem:[%s6 + $0x768] sm:$0xff]
    %v1950 = vld [vmem:[%s6 + $0x770] sm:$0xff]
    %v1951 = vld [vmem:[%s6 + $0x778] sm:$0xff]
    %v1952 = vld [vmem:[%s6 + $0x780] sm:$0xff]
    %v1953 = vld [vmem:[%s6 + $0x788] sm:$0xff]
    %v1954 = vld [vmem:[%s6 + $0x790] sm:$0xff]
    %v1955 = vld [vmem:[%s6 + $0x798] sm:$0xff]
    %v1956 = vld [vmem:[%s6 + $0x7a0] sm:$0xff]
    %v1957 = vld [vmem:[%s6 + $0x7a8] sm:$0xff]
    %v1958 = vld [vmem:[%s6 + $0x7b0] sm:$0xff]
    %v1959 = vld [vmem:[%s6 + $0x7b8] sm:$0xff]
    %v1960 = vld [vmem:[%s6 + $0x7c0] sm:$0xff]
    %v1961 = vld [vmem:[%s6 + $0x7c8] sm:$0xff]
    %v1962 = vld [vmem:[%s6 + $0x7d0] sm:$0xff]
    %v1963 = vld [vmem:[%s6 + $0x7d8] sm:$0xff]
    %v1964 = vld [vmem:[%s6 + $0x7e0] sm:$0xff]
    %v1965 = vld [vmem:[%s6 + $0x7e8] sm:$0xff]
    %v1966 = vld [vmem:[%s6 + $0x7f0] sm:$0xff]
    %v1967 = vld [vmem:[%s6 + $0x7f8] sm:$0xff]
    %v1968 = vld [vmem:[#allocation5] sm:$0xf]
    %v1970 = vlaneseq
    %v1971 = vshrl.u32 %v1970, 7
    %v1972 = vsub.s32 0, %v1971
    %v1973 = vrot.slane %v1968, %v1972
    %v1974 = vlaneseq
    %v1975 = vshrl.u32 %v1974, 7
    %v1976 = vsub.s32 1, %v1975
    %v1977 = vrot.slane %v1968, %v1976
    %v1978 = vlaneseq
    %v1979 = vshrl.u32 %v1978, 7
    %v1980 = vsub.s32 2, %v1979
    %v1981 = vrot.slane %v1968, %v1980
    %v1982 = vlaneseq
    %v1983 = vshrl.u32 %v1982, 7
    %v1984 = vsub.s32 3, %v1983
    %v1985 = vrot.slane %v1968, %v1984
    %v2246 = vunpack.c.l.b16 %v1712
    %v2247 = vunpack.c.h.b16 %v1712
    %v2248 = vunpack.c.l.b16 %v1713
    %v2249 = vunpack.c.h.b16 %v1713
    %v2250 = vunpack.c.l.b16 %v1714
    %v2251 = vunpack.c.h.b16 %v1714
    %v2252 = vunpack.c.l.b16 %v1715
    %v2253 = vunpack.c.h.b16 %v1715
    %v2254 = vunpack.c.l.b16 %v1716
    %v2255 = vunpack.c.h.b16 %v1716
    %v2256 = vunpack.c.l.b16 %v1717
    %v2257 = vunpack.c.h.b16 %v1717
    %v2258 = vunpack.c.l.b16 %v1718
    %v2259 = vunpack.c.h.b16 %v1718
    %v2260 = vunpack.c.l.b16 %v1719
    %v2261 = vunpack.c.h.b16 %v1719
    %v2262 = vunpack.c.l.b16 %v1720
    %v2263 = vunpack.c.h.b16 %v1720
    %v2264 = vunpack.c.l.b16 %v1721
    %v2265 = vunpack.c.h.b16 %v1721
    %v2266 = vunpack.c.l.b16 %v1722
    %v2267 = vunpack.c.h.b16 %v1722
    %v2268 = vunpack.c.l.b16 %v1723
    %v2269 = vunpack.c.h.b16 %v1723
    %v2270 = vunpack.c.l.b16 %v1724
    %v2271 = vunpack.c.h.b16 %v1724
    %v2272 = vunpack.c.l.b16 %v1725
    %v2273 = vunpack.c.h.b16 %v1725
    %v2274 = vunpack.c.l.b16 %v1726
    %v2275 = vunpack.c.h.b16 %v1726
    %v2276 = vunpack.c.l.b16 %v1727
    %v2277 = vunpack.c.h.b16 %v1727
    %v2278 = vunpack.c.l.b16 %v1728
    %v2279 = vunpack.c.h.b16 %v1728
    %v2280 = vunpack.c.l.b16 %v1729
    %v2281 = vunpack.c.h.b16 %v1729
    %v2282 = vunpack.c.l.b16 %v1730
    %v2283 = vunpack.c.h.b16 %v1730
    %v2284 = vunpack.c.l.b16 %v1731
    %v2285 = vunpack.c.h.b16 %v1731
    %v2286 = vunpack.c.l.b16 %v1732
    %v2287 = vunpack.c.h.b16 %v1732
    %v2288 = vunpack.c.l.b16 %v1733
    %v2289 = vunpack.c.h.b16 %v1733
    %v2290 = vunpack.c.l.b16 %v1734
    %v2291 = vunpack.c.h.b16 %v1734
    %v2292 = vunpack.c.l.b16 %v1735
    %v2293 = vunpack.c.h.b16 %v1735
    %v2294 = vunpack.c.l.b16 %v1736
    %v2295 = vunpack.c.h.b16 %v1736
    %v2296 = vunpack.c.l.b16 %v1737
    %v2297 = vunpack.c.h.b16 %v1737
    %v2298 = vunpack.c.l.b16 %v1738
    %v2299 = vunpack.c.h.b16 %v1738
    %v2300 = vunpack.c.l.b16 %v1739
    %v2301 = vunpack.c.h.b16 %v1739
    %v2302 = vunpack.c.l.b16 %v1740
    %v2303 = vunpack.c.h.b16 %v1740
    %v2304 = vunpack.c.l.b16 %v1741
    %v2305 = vunpack.c.h.b16 %v1741
    %v2306 = vunpack.c.l.b16 %v1742
    %v2307 = vunpack.c.h.b16 %v1742
    %v2308 = vunpack.c.l.b16 %v1743
    %v2309 = vunpack.c.h.b16 %v1743
    %v2310 = vunpack.c.l.b16 %v1744
    %v2311 = vunpack.c.h.b16 %v1744
    %v2312 = vunpack.c.l.b16 %v1745
    %v2313 = vunpack.c.h.b16 %v1745
    %v2314 = vunpack.c.l.b16 %v1746
    %v2315 = vunpack.c.h.b16 %v1746
    %v2316 = vunpack.c.l.b16 %v1747
    %v2317 = vunpack.c.h.b16 %v1747
    %v2318 = vunpack.c.l.b16 %v1748
    %v2319 = vunpack.c.h.b16 %v1748
    %v2320 = vunpack.c.l.b16 %v1749
    %v2321 = vunpack.c.h.b16 %v1749
    %v2322 = vunpack.c.l.b16 %v1750
    %v2323 = vunpack.c.h.b16 %v1750
    %v2324 = vunpack.c.l.b16 %v1751
    %v2325 = vunpack.c.h.b16 %v1751
    %v2326 = vunpack.c.l.b16 %v1752
    %v2327 = vunpack.c.h.b16 %v1752
    %v2328 = vunpack.c.l.b16 %v1753
    %v2329 = vunpack.c.h.b16 %v1753
    %v2330 = vunpack.c.l.b16 %v1754
    %v2331 = vunpack.c.h.b16 %v1754
    %v2332 = vunpack.c.l.b16 %v1755
    %v2333 = vunpack.c.h.b16 %v1755
    %v2334 = vunpack.c.l.b16 %v1756
    %v2335 = vunpack.c.h.b16 %v1756
    %v2336 = vunpack.c.l.b16 %v1757
    %v2337 = vunpack.c.h.b16 %v1757
    %v2338 = vunpack.c.l.b16 %v1758
    %v2339 = vunpack.c.h.b16 %v1758
    %v2340 = vunpack.c.l.b16 %v1759
    %v2341 = vunpack.c.h.b16 %v1759
    %v2342 = vunpack.c.l.b16 %v1760
    %v2343 = vunpack.c.h.b16 %v1760
    %v2344 = vunpack.c.l.b16 %v1761
    %v2345 = vunpack.c.h.b16 %v1761
    %v2346 = vunpack.c.l.b16 %v1762
    %v2347 = vunpack.c.h.b16 %v1762
    %v2348 = vunpack.c.l.b16 %v1763
    %v2349 = vunpack.c.h.b16 %v1763
    %v2350 = vunpack.c.l.b16 %v1764
    %v2351 = vunpack.c.h.b16 %v1764
    %v2352 = vunpack.c.l.b16 %v1765
    %v2353 = vunpack.c.h.b16 %v1765
    %v2354 = vunpack.c.l.b16 %v1766
    %v2355 = vunpack.c.h.b16 %v1766
    %v2356 = vunpack.c.l.b16 %v1767
    %v2357 = vunpack.c.h.b16 %v1767
    %v2358 = vunpack.c.l.b16 %v1768
    %v2359 = vunpack.c.h.b16 %v1768
    %v2360 = vunpack.c.l.b16 %v1769
    %v2361 = vunpack.c.h.b16 %v1769
    %v2362 = vunpack.c.l.b16 %v1770
    %v2363 = vunpack.c.h.b16 %v1770
    %v2364 = vunpack.c.l.b16 %v1771
    %v2365 = vunpack.c.h.b16 %v1771
    %v2366 = vunpack.c.l.b16 %v1772
    %v2367 = vunpack.c.h.b16 %v1772
    %v2368 = vunpack.c.l.b16 %v1773
    %v2369 = vunpack.c.h.b16 %v1773
    %v2370 = vunpack.c.l.b16 %v1774
    %v2371 = vunpack.c.h.b16 %v1774
    %v2372 = vunpack.c.l.b16 %v1775
    %v2373 = vunpack.c.h.b16 %v1775
    %v2374 = vunpack.c.l.b16 %v1776
    %v2375 = vunpack.c.h.b16 %v1776
    %v2376 = vunpack.c.l.b16 %v1777
    %v2377 = vunpack.c.h.b16 %v1777
    %v2378 = vunpack.c.l.b16 %v1778
    %v2379 = vunpack.c.h.b16 %v1778
    %v2380 = vunpack.c.l.b16 %v1779
    %v2381 = vunpack.c.h.b16 %v1779
    %v2382 = vunpack.c.l.b16 %v1780
    %v2383 = vunpack.c.h.b16 %v1780
    %v2384 = vunpack.c.l.b16 %v1781
    %v2385 = vunpack.c.h.b16 %v1781
    %v2386 = vunpack.c.l.b16 %v1782
    %v2387 = vunpack.c.h.b16 %v1782
    %v2388 = vunpack.c.l.b16 %v1783
    %v2389 = vunpack.c.h.b16 %v1783
    %v2390 = vunpack.c.l.b16 %v1784
    %v2391 = vunpack.c.h.b16 %v1784
    %v2392 = vunpack.c.l.b16 %v1785
    %v2393 = vunpack.c.h.b16 %v1785
    %v2394 = vunpack.c.l.b16 %v1786
    %v2395 = vunpack.c.h.b16 %v1786
    %v2396 = vunpack.c.l.b16 %v1787
    %v2397 = vunpack.c.h.b16 %v1787
    %v2398 = vunpack.c.l.b16 %v1788
    %v2399 = vunpack.c.h.b16 %v1788
    %v2400 = vunpack.c.l.b16 %v1789
    %v2401 = vunpack.c.h.b16 %v1789
    %v2402 = vunpack.c.l.b16 %v1790
    %v2403 = vunpack.c.h.b16 %v1790
    %v2404 = vunpack.c.l.b16 %v1791
    %v2405 = vunpack.c.h.b16 %v1791
    %v2406 = vunpack.c.l.b16 %v1792
    %v2407 = vunpack.c.h.b16 %v1792
    %v2408 = vunpack.c.l.b16 %v1793
    %v2409 = vunpack.c.h.b16 %v1793
    %v2410 = vunpack.c.l.b16 %v1794
    %v2411 = vunpack.c.h.b16 %v1794
    %v2412 = vunpack.c.l.b16 %v1795
    %v2413 = vunpack.c.h.b16 %v1795
    %v2414 = vunpack.c.l.b16 %v1796
    %v2415 = vunpack.c.h.b16 %v1796
    %v2416 = vunpack.c.l.b16 %v1797
    %v2417 = vunpack.c.h.b16 %v1797
    %v2418 = vunpack.c.l.b16 %v1798
    %v2419 = vunpack.c.h.b16 %v1798
    %v2420 = vunpack.c.l.b16 %v1799
    %v2421 = vunpack.c.h.b16 %v1799
    %v2422 = vunpack.c.l.b16 %v1800
    %v2423 = vunpack.c.h.b16 %v1800
    %v2424 = vunpack.c.l.b16 %v1801
    %v2425 = vunpack.c.h.b16 %v1801
    %v2426 = vunpack.c.l.b16 %v1802
    %v2427 = vunpack.c.h.b16 %v1802
    %v2428 = vunpack.c.l.b16 %v1803
    %v2429 = vunpack.c.h.b16 %v1803
    %v2430 = vunpack.c.l.b16 %v1804
    %v2431 = vunpack.c.h.b16 %v1804
    %v2432 = vunpack.c.l.b16 %v1805
    %v2433 = vunpack.c.h.b16 %v1805
    %v2434 = vunpack.c.l.b16 %v1806
    %v2435 = vunpack.c.h.b16 %v1806
    %v2436 = vunpack.c.l.b16 %v1807
    %v2437 = vunpack.c.h.b16 %v1807
    %v2438 = vunpack.c.l.b16 %v1808
    %v2439 = vunpack.c.h.b16 %v1808
    %v2440 = vunpack.c.l.b16 %v1809
    %v2441 = vunpack.c.h.b16 %v1809
    %v2442 = vunpack.c.l.b16 %v1810
    %v2443 = vunpack.c.h.b16 %v1810
    %v2444 = vunpack.c.l.b16 %v1811
    %v2445 = vunpack.c.h.b16 %v1811
    %v2446 = vunpack.c.l.b16 %v1812
    %v2447 = vunpack.c.h.b16 %v1812
    %v2448 = vunpack.c.l.b16 %v1813
    %v2449 = vunpack.c.h.b16 %v1813
    %v2450 = vunpack.c.l.b16 %v1814
    %v2451 = vunpack.c.h.b16 %v1814
    %v2452 = vunpack.c.l.b16 %v1815
    %v2453 = vunpack.c.h.b16 %v1815
    %v2454 = vunpack.c.l.b16 %v1816
    %v2455 = vunpack.c.h.b16 %v1816
    %v2456 = vunpack.c.l.b16 %v1817
    %v2457 = vunpack.c.h.b16 %v1817
    %v2458 = vunpack.c.l.b16 %v1818
    %v2459 = vunpack.c.h.b16 %v1818
    %v2460 = vunpack.c.l.b16 %v1819
    %v2461 = vunpack.c.h.b16 %v1819
    %v2462 = vunpack.c.l.b16 %v1820
    %v2463 = vunpack.c.h.b16 %v1820
    %v2464 = vunpack.c.l.b16 %v1821
    %v2465 = vunpack.c.h.b16 %v1821
    %v2466 = vunpack.c.l.b16 %v1822
    %v2467 = vunpack.c.h.b16 %v1822
    %v2468 = vunpack.c.l.b16 %v1823
    %v2469 = vunpack.c.h.b16 %v1823
    %v2470 = vunpack.c.l.b16 %v1824
    %v2471 = vunpack.c.h.b16 %v1824
    %v2472 = vunpack.c.l.b16 %v1825
    %v2473 = vunpack.c.h.b16 %v1825
    %v2474 = vunpack.c.l.b16 %v1826
    %v2475 = vunpack.c.h.b16 %v1826
    %v2476 = vunpack.c.l.b16 %v1827
    %v2477 = vunpack.c.h.b16 %v1827
    %v2478 = vunpack.c.l.b16 %v1828
    %v2479 = vunpack.c.h.b16 %v1828
    %v2480 = vunpack.c.l.b16 %v1829
    %v2481 = vunpack.c.h.b16 %v1829
    %v2482 = vunpack.c.l.b16 %v1830
    %v2483 = vunpack.c.h.b16 %v1830
    %v2484 = vunpack.c.l.b16 %v1831
    %v2485 = vunpack.c.h.b16 %v1831
    %v2486 = vunpack.c.l.b16 %v1832
    %v2487 = vunpack.c.h.b16 %v1832
    %v2488 = vunpack.c.l.b16 %v1833
    %v2489 = vunpack.c.h.b16 %v1833
    %v2490 = vunpack.c.l.b16 %v1834
    %v2491 = vunpack.c.h.b16 %v1834
    %v2492 = vunpack.c.l.b16 %v1835
    %v2493 = vunpack.c.h.b16 %v1835
    %v2494 = vunpack.c.l.b16 %v1836
    %v2495 = vunpack.c.h.b16 %v1836
    %v2496 = vunpack.c.l.b16 %v1837
    %v2497 = vunpack.c.h.b16 %v1837
    %v2498 = vunpack.c.l.b16 %v1838
    %v2499 = vunpack.c.h.b16 %v1838
    %v2500 = vunpack.c.l.b16 %v1839
    %v2501 = vunpack.c.h.b16 %v1839
    %v2502 = vunpack.c.l.b16 %v1840
    %v2503 = vunpack.c.h.b16 %v1840
    %v2504 = vunpack.c.l.b16 %v1841
    %v2505 = vunpack.c.h.b16 %v1841
    %v2506 = vunpack.c.l.b16 %v1842
    %v2507 = vunpack.c.h.b16 %v1842
    %v2508 = vunpack.c.l.b16 %v1843
    %v2509 = vunpack.c.h.b16 %v1843
    %v2510 = vunpack.c.l.b16 %v1844
    %v2511 = vunpack.c.h.b16 %v1844
    %v2512 = vunpack.c.l.b16 %v1845
    %v2513 = vunpack.c.h.b16 %v1845
    %v2514 = vunpack.c.l.b16 %v1846
    %v2515 = vunpack.c.h.b16 %v1846
    %v2516 = vunpack.c.l.b16 %v1847
    %v2517 = vunpack.c.h.b16 %v1847
    %v2518 = vunpack.c.l.b16 %v1848
    %v2519 = vunpack.c.h.b16 %v1848
    %v2520 = vunpack.c.l.b16 %v1849
    %v2521 = vunpack.c.h.b16 %v1849
    %v2522 = vunpack.c.l.b16 %v1850
    %v2523 = vunpack.c.h.b16 %v1850
    %v2524 = vunpack.c.l.b16 %v1851
    %v2525 = vunpack.c.h.b16 %v1851
    %v2526 = vunpack.c.l.b16 %v1852
    %v2527 = vunpack.c.h.b16 %v1852
    %v2528 = vunpack.c.l.b16 %v1853
    %v2529 = vunpack.c.h.b16 %v1853
    %v2530 = vunpack.c.l.b16 %v1854
    %v2531 = vunpack.c.h.b16 %v1854
    %v2532 = vunpack.c.l.b16 %v1855
    %v2533 = vunpack.c.h.b16 %v1855
    %v2534 = vunpack.c.l.b16 %v1856
    %v2535 = vunpack.c.h.b16 %v1856
    %v2536 = vunpack.c.l.b16 %v1857
    %v2537 = vunpack.c.h.b16 %v1857
    %v2538 = vunpack.c.l.b16 %v1858
    %v2539 = vunpack.c.h.b16 %v1858
    %v2540 = vunpack.c.l.b16 %v1859
    %v2541 = vunpack.c.h.b16 %v1859
    %v2542 = vunpack.c.l.b16 %v1860
    %v2543 = vunpack.c.h.b16 %v1860
    %v2544 = vunpack.c.l.b16 %v1861
    %v2545 = vunpack.c.h.b16 %v1861
    %v2546 = vunpack.c.l.b16 %v1862
    %v2547 = vunpack.c.h.b16 %v1862
    %v2548 = vunpack.c.l.b16 %v1863
    %v2549 = vunpack.c.h.b16 %v1863
    %v2550 = vunpack.c.l.b16 %v1864
    %v2551 = vunpack.c.h.b16 %v1864
    %v2552 = vunpack.c.l.b16 %v1865
    %v2553 = vunpack.c.h.b16 %v1865
    %v2554 = vunpack.c.l.b16 %v1866
    %v2555 = vunpack.c.h.b16 %v1866
    %v2556 = vunpack.c.l.b16 %v1867
    %v2557 = vunpack.c.h.b16 %v1867
    %v2558 = vunpack.c.l.b16 %v1868
    %v2559 = vunpack.c.h.b16 %v1868
    %v2560 = vunpack.c.l.b16 %v1869
    %v2561 = vunpack.c.h.b16 %v1869
    %v2562 = vunpack.c.l.b16 %v1870
    %v2563 = vunpack.c.h.b16 %v1870
    %v2564 = vunpack.c.l.b16 %v1871
    %v2565 = vunpack.c.h.b16 %v1871
    %v2566 = vunpack.c.l.b16 %v1872
    %v2567 = vunpack.c.h.b16 %v1872
    %v2568 = vunpack.c.l.b16 %v1873
    %v2569 = vunpack.c.h.b16 %v1873
    %v2570 = vunpack.c.l.b16 %v1874
    %v2571 = vunpack.c.h.b16 %v1874
    %v2572 = vunpack.c.l.b16 %v1875
    %v2573 = vunpack.c.h.b16 %v1875
    %v2574 = vunpack.c.l.b16 %v1876
    %v2575 = vunpack.c.h.b16 %v1876
    %v2576 = vunpack.c.l.b16 %v1877
    %v2577 = vunpack.c.h.b16 %v1877
    %v2578 = vunpack.c.l.b16 %v1878
    %v2579 = vunpack.c.h.b16 %v1878
    %v2580 = vunpack.c.l.b16 %v1879
    %v2581 = vunpack.c.h.b16 %v1879
    %v2582 = vunpack.c.l.b16 %v1880
    %v2583 = vunpack.c.h.b16 %v1880
    %v2584 = vunpack.c.l.b16 %v1881
    %v2585 = vunpack.c.h.b16 %v1881
    %v2586 = vunpack.c.l.b16 %v1882
    %v2587 = vunpack.c.h.b16 %v1882
    %v2588 = vunpack.c.l.b16 %v1883
    %v2589 = vunpack.c.h.b16 %v1883
    %v2590 = vunpack.c.l.b16 %v1884
    %v2591 = vunpack.c.h.b16 %v1884
    %v2592 = vunpack.c.l.b16 %v1885
    %v2593 = vunpack.c.h.b16 %v1885
    %v2594 = vunpack.c.l.b16 %v1886
    %v2595 = vunpack.c.h.b16 %v1886
    %v2596 = vunpack.c.l.b16 %v1887
    %v2597 = vunpack.c.h.b16 %v1887
    %v2598 = vunpack.c.l.b16 %v1888
    %v2599 = vunpack.c.h.b16 %v1888
    %v2600 = vunpack.c.l.b16 %v1889
    %v2601 = vunpack.c.h.b16 %v1889
    %v2602 = vunpack.c.l.b16 %v1890
    %v2603 = vunpack.c.h.b16 %v1890
    %v2604 = vunpack.c.l.b16 %v1891
    %v2605 = vunpack.c.h.b16 %v1891
    %v2606 = vunpack.c.l.b16 %v1892
    %v2607 = vunpack.c.h.b16 %v1892
    %v2608 = vunpack.c.l.b16 %v1893
    %v2609 = vunpack.c.h.b16 %v1893
    %v2610 = vunpack.c.l.b16 %v1894
    %v2611 = vunpack.c.h.b16 %v1894
    %v2612 = vunpack.c.l.b16 %v1895
    %v2613 = vunpack.c.h.b16 %v1895
    %v2614 = vunpack.c.l.b16 %v1896
    %v2615 = vunpack.c.h.b16 %v1896
    %v2616 = vunpack.c.l.b16 %v1897
    %v2617 = vunpack.c.h.b16 %v1897
    %v2618 = vunpack.c.l.b16 %v1898
    %v2619 = vunpack.c.h.b16 %v1898
    %v2620 = vunpack.c.l.b16 %v1899
    %v2621 = vunpack.c.h.b16 %v1899
    %v2622 = vunpack.c.l.b16 %v1900
    %v2623 = vunpack.c.h.b16 %v1900
    %v2624 = vunpack.c.l.b16 %v1901
    %v2625 = vunpack.c.h.b16 %v1901
    %v2626 = vunpack.c.l.b16 %v1902
    %v2627 = vunpack.c.h.b16 %v1902
    %v2628 = vunpack.c.l.b16 %v1903
    %v2629 = vunpack.c.h.b16 %v1903
    %v2630 = vunpack.c.l.b16 %v1904
    %v2631 = vunpack.c.h.b16 %v1904
    %v2632 = vunpack.c.l.b16 %v1905
    %v2633 = vunpack.c.h.b16 %v1905
    %v2634 = vunpack.c.l.b16 %v1906
    %v2635 = vunpack.c.h.b16 %v1906
    %v2636 = vunpack.c.l.b16 %v1907
    %v2637 = vunpack.c.h.b16 %v1907
    %v2638 = vunpack.c.l.b16 %v1908
    %v2639 = vunpack.c.h.b16 %v1908
    %v2640 = vunpack.c.l.b16 %v1909
    %v2641 = vunpack.c.h.b16 %v1909
    %v2642 = vunpack.c.l.b16 %v1910
    %v2643 = vunpack.c.h.b16 %v1910
    %v2644 = vunpack.c.l.b16 %v1911
    %v2645 = vunpack.c.h.b16 %v1911
    %v2646 = vunpack.c.l.b16 %v1912
    %v2647 = vunpack.c.h.b16 %v1912
    %v2648 = vunpack.c.l.b16 %v1913
    %v2649 = vunpack.c.h.b16 %v1913
    %v2650 = vunpack.c.l.b16 %v1914
    %v2651 = vunpack.c.h.b16 %v1914
    %v2652 = vunpack.c.l.b16 %v1915
    %v2653 = vunpack.c.h.b16 %v1915
    %v2654 = vunpack.c.l.b16 %v1916
    %v2655 = vunpack.c.h.b16 %v1916
    %v2656 = vunpack.c.l.b16 %v1917
    %v2657 = vunpack.c.h.b16 %v1917
    %v2658 = vunpack.c.l.b16 %v1918
    %v2659 = vunpack.c.h.b16 %v1918
    %v2660 = vunpack.c.l.b16 %v1919
    %v2661 = vunpack.c.h.b16 %v1919
    %v2662 = vunpack.c.l.b16 %v1920
    %v2663 = vunpack.c.h.b16 %v1920
    %v2664 = vunpack.c.l.b16 %v1921
    %v2665 = vunpack.c.h.b16 %v1921
    %v2666 = vunpack.c.l.b16 %v1922
    %v2667 = vunpack.c.h.b16 %v1922
    %v2668 = vunpack.c.l.b16 %v1923
    %v2669 = vunpack.c.h.b16 %v1923
    %v2670 = vunpack.c.l.b16 %v1924
    %v2671 = vunpack.c.h.b16 %v1924
    %v2672 = vunpack.c.l.b16 %v1925
    %v2673 = vunpack.c.h.b16 %v1925
    %v2674 = vunpack.c.l.b16 %v1926
    %v2675 = vunpack.c.h.b16 %v1926
    %v2676 = vunpack.c.l.b16 %v1927
    %v2677 = vunpack.c.h.b16 %v1927
    %v2678 = vunpack.c.l.b16 %v1928
    %v2679 = vunpack.c.h.b16 %v1928
    %v2680 = vunpack.c.l.b16 %v1929
    %v2681 = vunpack.c.h.b16 %v1929
    %v2682 = vunpack.c.l.b16 %v1930
    %v2683 = vunpack.c.h.b16 %v1930
    %v2684 = vunpack.c.l.b16 %v1931
    %v2685 = vunpack.c.h.b16 %v1931
    %v2686 = vunpack.c.l.b16 %v1932
    %v2687 = vunpack.c.h.b16 %v1932
    %v2688 = vunpack.c.l.b16 %v1933
    %v2689 = vunpack.c.h.b16 %v1933
    %v2690 = vunpack.c.l.b16 %v1934
    %v2691 = vunpack.c.h.b16 %v1934
    %v2692 = vunpack.c.l.b16 %v1935
    %v2693 = vunpack.c.h.b16 %v1935
    %v2694 = vunpack.c.l.b16 %v1936
    %v2695 = vunpack.c.h.b16 %v1936
    %v2696 = vunpack.c.l.b16 %v1937
    %v2697 = vunpack.c.h.b16 %v1937
    %v2698 = vunpack.c.l.b16 %v1938
    %v2699 = vunpack.c.h.b16 %v1938
    %v2700 = vunpack.c.l.b16 %v1939
    %v2701 = vunpack.c.h.b16 %v1939
    %v2702 = vunpack.c.l.b16 %v1940
    %v2703 = vunpack.c.h.b16 %v1940
    %v2704 = vunpack.c.l.b16 %v1941
    %v2705 = vunpack.c.h.b16 %v1941
    %v2706 = vunpack.c.l.b16 %v1942
    %v2707 = vunpack.c.h.b16 %v1942
    %v2708 = vunpack.c.l.b16 %v1943
    %v2709 = vunpack.c.h.b16 %v1943
    %v2710 = vunpack.c.l.b16 %v1944
    %v2711 = vunpack.c.h.b16 %v1944
    %v2712 = vunpack.c.l.b16 %v1945
    %v2713 = vunpack.c.h.b16 %v1945
    %v2714 = vunpack.c.l.b16 %v1946
    %v2715 = vunpack.c.h.b16 %v1946
    %v2716 = vunpack.c.l.b16 %v1947
    %v2717 = vunpack.c.h.b16 %v1947
    %v2718 = vunpack.c.l.b16 %v1948
    %v2719 = vunpack.c.h.b16 %v1948
    %v2720 = vunpack.c.l.b16 %v1949
    %v2721 = vunpack.c.h.b16 %v1949
    %v2722 = vunpack.c.l.b16 %v1950
    %v2723 = vunpack.c.h.b16 %v1950
    %v2724 = vunpack.c.l.b16 %v1951
    %v2725 = vunpack.c.h.b16 %v1951
    %v2726 = vunpack.c.l.b16 %v1952
    %v2727 = vunpack.c.h.b16 %v1952
    %v2728 = vunpack.c.l.b16 %v1953
    %v2729 = vunpack.c.h.b16 %v1953
    %v2730 = vunpack.c.l.b16 %v1954
    %v2731 = vunpack.c.h.b16 %v1954
    %v2732 = vunpack.c.l.b16 %v1955
    %v2733 = vunpack.c.h.b16 %v1955
    %v2734 = vunpack.c.l.b16 %v1956
    %v2735 = vunpack.c.h.b16 %v1956
    %v2736 = vunpack.c.l.b16 %v1957
    %v2737 = vunpack.c.h.b16 %v1957
    %v2738 = vunpack.c.l.b16 %v1958
    %v2739 = vunpack.c.h.b16 %v1958
    %v2740 = vunpack.c.l.b16 %v1959
    %v2741 = vunpack.c.h.b16 %v1959
    %v2742 = vunpack.c.l.b16 %v1960
    %v2743 = vunpack.c.h.b16 %v1960
    %v2744 = vunpack.c.l.b16 %v1961
    %v2745 = vunpack.c.h.b16 %v1961
    %v2746 = vunpack.c.l.b16 %v1962
    %v2747 = vunpack.c.h.b16 %v1962
    %v2748 = vunpack.c.l.b16 %v1963
    %v2749 = vunpack.c.h.b16 %v1963
    %v2750 = vunpack.c.l.b16 %v1964
    %v2751 = vunpack.c.h.b16 %v1964
    %v2752 = vunpack.c.l.b16 %v1965
    %v2753 = vunpack.c.h.b16 %v1965
    %v2754 = vunpack.c.l.b16 %v1966
    %v2755 = vunpack.c.h.b16 %v1966
    %v2756 = vunpack.c.l.b16 %v1967
    %v2757 = vunpack.c.h.b16 %v1967
    %v2758 = vpack.c.b16 %v2250, %v2246
    %v2759 = vpack.c.b16 %v2251, %v2247
    %v2760 = vpack.c.b16 %v2252, %v2248
    %v2761 = vpack.c.b16 %v2253, %v2249
    %v2762 = vpack.c.b16 %v2258, %v2254
    %v2763 = vpack.c.b16 %v2259, %v2255
    %v2764 = vpack.c.b16 %v2260, %v2256
    %v2765 = vpack.c.b16 %v2261, %v2257
    %v2766 = vpack.c.b16 %v2266, %v2262
    %v2767 = vpack.c.b16 %v2267, %v2263
    %v2768 = vpack.c.b16 %v2268, %v2264
    %v2769 = vpack.c.b16 %v2269, %v2265
    %v2770 = vpack.c.b16 %v2274, %v2270
    %v2771 = vpack.c.b16 %v2275, %v2271
    %v2772 = vpack.c.b16 %v2276, %v2272
    %v2773 = vpack.c.b16 %v2277, %v2273
    %v2774 = vpack.c.b16 %v2282, %v2278
    %v2775 = vpack.c.b16 %v2283, %v2279
    %v2776 = vpack.c.b16 %v2284, %v2280
    %v2777 = vpack.c.b16 %v2285, %v2281
    %v2778 = vpack.c.b16 %v2290, %v2286
    %v2779 = vpack.c.b16 %v2291, %v2287
    %v2780 = vpack.c.b16 %v2292, %v2288
    %v2781 = vpack.c.b16 %v2293, %v2289
    %v2782 = vpack.c.b16 %v2298, %v2294
    %v2783 = vpack.c.b16 %v2299, %v2295
    %v2784 = vpack.c.b16 %v2300, %v2296
    %v2785 = vpack.c.b16 %v2301, %v2297
    %v2786 = vpack.c.b16 %v2306, %v2302
    %v2787 = vpack.c.b16 %v2307, %v2303
    %v2788 = vpack.c.b16 %v2308, %v2304
    %v2789 = vpack.c.b16 %v2309, %v2305
    %v2790 = vpack.c.b16 %v2314, %v2310
    %v2791 = vpack.c.b16 %v2315, %v2311
    %v2792 = vpack.c.b16 %v2316, %v2312
    %v2793 = vpack.c.b16 %v2317, %v2313
    %v2794 = vpack.c.b16 %v2322, %v2318
    %v2795 = vpack.c.b16 %v2323, %v2319
    %v2796 = vpack.c.b16 %v2324, %v2320
    %v2797 = vpack.c.b16 %v2325, %v2321
    %v2798 = vpack.c.b16 %v2330, %v2326
    %v2799 = vpack.c.b16 %v2331, %v2327
    %v2800 = vpack.c.b16 %v2332, %v2328
    %v2801 = vpack.c.b16 %v2333, %v2329
    %v2802 = vpack.c.b16 %v2338, %v2334
    %v2803 = vpack.c.b16 %v2339, %v2335
    %v2804 = vpack.c.b16 %v2340, %v2336
    %v2805 = vpack.c.b16 %v2341, %v2337
    %v2806 = vpack.c.b16 %v2346, %v2342
    %v2807 = vpack.c.b16 %v2347, %v2343
    %v2808 = vpack.c.b16 %v2348, %v2344
    %v2809 = vpack.c.b16 %v2349, %v2345
    %v2810 = vpack.c.b16 %v2354, %v2350
    %v2811 = vpack.c.b16 %v2355, %v2351
    %v2812 = vpack.c.b16 %v2356, %v2352
    %v2813 = vpack.c.b16 %v2357, %v2353
    %v2814 = vpack.c.b16 %v2362, %v2358
    %v2815 = vpack.c.b16 %v2363, %v2359
    %v2816 = vpack.c.b16 %v2364, %v2360
    %v2817 = vpack.c.b16 %v2365, %v2361
    %v2818 = vpack.c.b16 %v2370, %v2366
    %v2819 = vpack.c.b16 %v2371, %v2367
    %v2820 = vpack.c.b16 %v2372, %v2368
    %v2821 = vpack.c.b16 %v2373, %v2369
    %v2822 = vpack.c.b16 %v2378, %v2374
    %v2823 = vpack.c.b16 %v2379, %v2375
    %v2824 = vpack.c.b16 %v2380, %v2376
    %v2825 = vpack.c.b16 %v2381, %v2377
    %v2826 = vpack.c.b16 %v2386, %v2382
    %v2827 = vpack.c.b16 %v2387, %v2383
    %v2828 = vpack.c.b16 %v2388, %v2384
    %v2829 = vpack.c.b16 %v2389, %v2385
    %v2830 = vpack.c.b16 %v2394, %v2390
    %v2831 = vpack.c.b16 %v2395, %v2391
    %v2832 = vpack.c.b16 %v2396, %v2392
    %v2833 = vpack.c.b16 %v2397, %v2393
    %v2834 = vpack.c.b16 %v2402, %v2398
    %v2835 = vpack.c.b16 %v2403, %v2399
    %v2836 = vpack.c.b16 %v2404, %v2400
    %v2837 = vpack.c.b16 %v2405, %v2401
    %v2838 = vpack.c.b16 %v2410, %v2406
    %v2839 = vpack.c.b16 %v2411, %v2407
    %v2840 = vpack.c.b16 %v2412, %v2408
    %v2841 = vpack.c.b16 %v2413, %v2409
    %v2842 = vpack.c.b16 %v2418, %v2414
    %v2843 = vpack.c.b16 %v2419, %v2415
    %v2844 = vpack.c.b16 %v2420, %v2416
    %v2845 = vpack.c.b16 %v2421, %v2417
    %v2846 = vpack.c.b16 %v2426, %v2422
    %v2847 = vpack.c.b16 %v2427, %v2423
    %v2848 = vpack.c.b16 %v2428, %v2424
    %v2849 = vpack.c.b16 %v2429, %v2425
    %v2850 = vpack.c.b16 %v2434, %v2430
    %v2851 = vpack.c.b16 %v2435, %v2431
    %v2852 = vpack.c.b16 %v2436, %v2432
    %v2853 = vpack.c.b16 %v2437, %v2433
    %v2854 = vpack.c.b16 %v2442, %v2438
    %v2855 = vpack.c.b16 %v2443, %v2439
    %v2856 = vpack.c.b16 %v2444, %v2440
    %v2857 = vpack.c.b16 %v2445, %v2441
    %v2858 = vpack.c.b16 %v2450, %v2446
    %v2859 = vpack.c.b16 %v2451, %v2447
    %v2860 = vpack.c.b16 %v2452, %v2448
    %v2861 = vpack.c.b16 %v2453, %v2449
    %v2862 = vpack.c.b16 %v2458, %v2454
    %v2863 = vpack.c.b16 %v2459, %v2455
    %v2864 = vpack.c.b16 %v2460, %v2456
    %v2865 = vpack.c.b16 %v2461, %v2457
    %v2866 = vpack.c.b16 %v2466, %v2462
    %v2867 = vpack.c.b16 %v2467, %v2463
    %v2868 = vpack.c.b16 %v2468, %v2464
    %v2869 = vpack.c.b16 %v2469, %v2465
    %v2870 = vpack.c.b16 %v2474, %v2470
    %v2871 = vpack.c.b16 %v2475, %v2471
    %v2872 = vpack.c.b16 %v2476, %v2472
    %v2873 = vpack.c.b16 %v2477, %v2473
    %v2874 = vpack.c.b16 %v2482, %v2478
    %v2875 = vpack.c.b16 %v2483, %v2479
    %v2876 = vpack.c.b16 %v2484, %v2480
    %v2877 = vpack.c.b16 %v2485, %v2481
    %v2878 = vpack.c.b16 %v2490, %v2486
    %v2879 = vpack.c.b16 %v2491, %v2487
    %v2880 = vpack.c.b16 %v2492, %v2488
    %v2881 = vpack.c.b16 %v2493, %v2489
    %v2882 = vpack.c.b16 %v2498, %v2494
    %v2883 = vpack.c.b16 %v2499, %v2495
    %v2884 = vpack.c.b16 %v2500, %v2496
    %v2885 = vpack.c.b16 %v2501, %v2497
    %v2886 = vpack.c.b16 %v2506, %v2502
    %v2887 = vpack.c.b16 %v2507, %v2503
    %v2888 = vpack.c.b16 %v2508, %v2504
    %v2889 = vpack.c.b16 %v2509, %v2505
    %v2890 = vpack.c.b16 %v2514, %v2510
    %v2891 = vpack.c.b16 %v2515, %v2511
    %v2892 = vpack.c.b16 %v2516, %v2512
    %v2893 = vpack.c.b16 %v2517, %v2513
    %v2894 = vpack.c.b16 %v2522, %v2518
    %v2895 = vpack.c.b16 %v2523, %v2519
    %v2896 = vpack.c.b16 %v2524, %v2520
    %v2897 = vpack.c.b16 %v2525, %v2521
    %v2898 = vpack.c.b16 %v2530, %v2526
    %v2899 = vpack.c.b16 %v2531, %v2527
    %v2900 = vpack.c.b16 %v2532, %v2528
    %v2901 = vpack.c.b16 %v2533, %v2529
    %v2902 = vpack.c.b16 %v2538, %v2534
    %v2903 = vpack.c.b16 %v2539, %v2535
    %v2904 = vpack.c.b16 %v2540, %v2536
    %v2905 = vpack.c.b16 %v2541, %v2537
    %v2906 = vpack.c.b16 %v2546, %v2542
    %v2907 = vpack.c.b16 %v2547, %v2543
    %v2908 = vpack.c.b16 %v2548, %v2544
    %v2909 = vpack.c.b16 %v2549, %v2545
    %v2910 = vpack.c.b16 %v2554, %v2550
    %v2911 = vpack.c.b16 %v2555, %v2551
    %v2912 = vpack.c.b16 %v2556, %v2552
    %v2913 = vpack.c.b16 %v2557, %v2553
    %v2914 = vpack.c.b16 %v2562, %v2558
    %v2915 = vpack.c.b16 %v2563, %v2559
    %v2916 = vpack.c.b16 %v2564, %v2560
    %v2917 = vpack.c.b16 %v2565, %v2561
    %v2918 = vpack.c.b16 %v2570, %v2566
    %v2919 = vpack.c.b16 %v2571, %v2567
    %v2920 = vpack.c.b16 %v2572, %v2568
    %v2921 = vpack.c.b16 %v2573, %v2569
    %v2922 = vpack.c.b16 %v2578, %v2574
    %v2923 = vpack.c.b16 %v2579, %v2575
    %v2924 = vpack.c.b16 %v2580, %v2576
    %v2925 = vpack.c.b16 %v2581, %v2577
    %v2926 = vpack.c.b16 %v2586, %v2582
    %v2927 = vpack.c.b16 %v2587, %v2583
    %v2928 = vpack.c.b16 %v2588, %v2584
    %v2929 = vpack.c.b16 %v2589, %v2585
    %v2930 = vpack.c.b16 %v2594, %v2590
    %v2931 = vpack.c.b16 %v2595, %v2591
    %v2932 = vpack.c.b16 %v2596, %v2592
    %v2933 = vpack.c.b16 %v2597, %v2593
    %v2934 = vpack.c.b16 %v2602, %v2598
    %v2935 = vpack.c.b16 %v2603, %v2599
    %v2936 = vpack.c.b16 %v2604, %v2600
    %v2937 = vpack.c.b16 %v2605, %v2601
    %v2938 = vpack.c.b16 %v2610, %v2606
    %v2939 = vpack.c.b16 %v2611, %v2607
    %v2940 = vpack.c.b16 %v2612, %v2608
    %v2941 = vpack.c.b16 %v2613, %v2609
    %v2942 = vpack.c.b16 %v2618, %v2614
    %v2943 = vpack.c.b16 %v2619, %v2615
    %v2944 = vpack.c.b16 %v2620, %v2616
    %v2945 = vpack.c.b16 %v2621, %v2617
    %v2946 = vpack.c.b16 %v2626, %v2622
    %v2947 = vpack.c.b16 %v2627, %v2623
    %v2948 = vpack.c.b16 %v2628, %v2624
    %v2949 = vpack.c.b16 %v2629, %v2625
    %v2950 = vpack.c.b16 %v2634, %v2630
    %v2951 = vpack.c.b16 %v2635, %v2631
    %v2952 = vpack.c.b16 %v2636, %v2632
    %v2953 = vpack.c.b16 %v2637, %v2633
    %v2954 = vpack.c.b16 %v2642, %v2638
    %v2955 = vpack.c.b16 %v2643, %v2639
    %v2956 = vpack.c.b16 %v2644, %v2640
    %v2957 = vpack.c.b16 %v2645, %v2641
    %v2958 = vpack.c.b16 %v2650, %v2646
    %v2959 = vpack.c.b16 %v2651, %v2647
    %v2960 = vpack.c.b16 %v2652, %v2648
    %v2961 = vpack.c.b16 %v2653, %v2649
    %v2962 = vpack.c.b16 %v2658, %v2654
    %v2963 = vpack.c.b16 %v2659, %v2655
    %v2964 = vpack.c.b16 %v2660, %v2656
    %v2965 = vpack.c.b16 %v2661, %v2657
    %v2966 = vpack.c.b16 %v2666, %v2662
    %v2967 = vpack.c.b16 %v2667, %v2663
    %v2968 = vpack.c.b16 %v2668, %v2664
    %v2969 = vpack.c.b16 %v2669, %v2665
    %v2970 = vpack.c.b16 %v2674, %v2670
    %v2971 = vpack.c.b16 %v2675, %v2671
    %v2972 = vpack.c.b16 %v2676, %v2672
    %v2973 = vpack.c.b16 %v2677, %v2673
    %v2974 = vpack.c.b16 %v2682, %v2678
    %v2975 = vpack.c.b16 %v2683, %v2679
    %v2976 = vpack.c.b16 %v2684, %v2680
    %v2977 = vpack.c.b16 %v2685, %v2681
    %v2978 = vpack.c.b16 %v2690, %v2686
    %v2979 = vpack.c.b16 %v2691, %v2687
    %v2980 = vpack.c.b16 %v2692, %v2688
    %v2981 = vpack.c.b16 %v2693, %v2689
    %v2982 = vpack.c.b16 %v2698, %v2694
    %v2983 = vpack.c.b16 %v2699, %v2695
    %v2984 = vpack.c.b16 %v2700, %v2696
    %v2985 = vpack.c.b16 %v2701, %v2697
    %v2986 = vpack.c.b16 %v2706, %v2702
    %v2987 = vpack.c.b16 %v2707, %v2703
    %v2988 = vpack.c.b16 %v2708, %v2704
    %v2989 = vpack.c.b16 %v2709, %v2705
    %v2990 = vpack.c.b16 %v2714, %v2710
    %v2991 = vpack.c.b16 %v2715, %v2711
    %v2992 = vpack.c.b16 %v2716, %v2712
    %v2993 = vpack.c.b16 %v2717, %v2713
    %v2994 = vpack.c.b16 %v2722, %v2718
    %v2995 = vpack.c.b16 %v2723, %v2719
    %v2996 = vpack.c.b16 %v2724, %v2720
    %v2997 = vpack.c.b16 %v2725, %v2721
    %v2998 = vpack.c.b16 %v2730, %v2726
    %v2999 = vpack.c.b16 %v2731, %v2727
    %v3000 = vpack.c.b16 %v2732, %v2728
    %v3001 = vpack.c.b16 %v2733, %v2729
    %v3002 = vpack.c.b16 %v2738, %v2734
    %v3003 = vpack.c.b16 %v2739, %v2735
    %v3004 = vpack.c.b16 %v2740, %v2736
    %v3005 = vpack.c.b16 %v2741, %v2737
    %v3006 = vpack.c.b16 %v2746, %v2742
    %v3007 = vpack.c.b16 %v2747, %v2743
    %v3008 = vpack.c.b16 %v2748, %v2744
    %v3009 = vpack.c.b16 %v2749, %v2745
    %v3010 = vpack.c.b16 %v2754, %v2750
    %v3011 = vpack.c.b16 %v2755, %v2751
    %v3012 = vpack.c.b16 %v2756, %v2752
    %v3013 = vpack.c.b16 %v2757, %v2753
    %3270 = vmatprep.subr.bf16.mxu0 %v2787
    %3271 = vmatpush1.bf16.msra.mxu0 %v2786
    %3272 = vmatprep.subr.bf16.mxu0 %v2783
    %3273 = vmatpush1.bf16.msra.mxu0 %v2782
    %3274 = vmatprep.subr.bf16.mxu0 %v2779
    %3275 = vmatpush1.bf16.msra.mxu0 %v2778
    %3276 = vmatprep.subr.bf16.mxu0 %v2775
    %3277 = vmatpush1.bf16.msra.mxu0 %v2774
    %3278 = vmatprep.subr.bf16.mxu0 %v2771
    %3279 = vmatpush1.bf16.msra.mxu0 %v2770
    %3280 = vmatprep.subr.bf16.mxu0 %v2767
    %3281 = vmatpush1.bf16.msra.mxu0 %v2766
    %3282 = vmatprep.subr.bf16.mxu0 %v2763
    %3283 = vmatpush1.bf16.msra.mxu0 %v2762
    %3284 = vmatprep.subr.bf16.mxu0 %v2759
    %3285 = vmatpush1.bf16.msra.mxu0 %v2758
    %3286 = vmatprep.subr.bf16.mxu0 %v2819
    %3287 = vmatpush2.bf16.msra.mxu0 %v2818
    %3288 = vmatprep.subr.bf16.mxu0 %v2815
    %3289 = vmatpush2.bf16.msra.mxu0 %v2814
    %3290 = vmatprep.subr.bf16.mxu0 %v2811
    %3291 = vmatpush2.bf16.msra.mxu0 %v2810
    %3292 = vmatprep.subr.bf16.mxu0 %v2807
    %3293 = vmatpush2.bf16.msra.mxu0 %v2806
    %3294 = vmatprep.subr.bf16.mxu0 %v2803
    %3295 = vmatpush2.bf16.msra.mxu0 %v2802
    %3296 = vmatprep.subr.bf16.mxu0 %v2799
    %3297 = vmatpush2.bf16.msra.mxu0 %v2798
    %3298 = vmatprep.subr.bf16.mxu0 %v2795
    %3299 = vmatpush2.bf16.msra.mxu0 %v2794
    %3300 = vmatprep.subr.bf16.mxu0 %v2791
    %3301 = vmatpush2.bf16.msra.mxu0 %v2790
    %3302 = vmatprep.mubr.bf16.mxu0 %v1649
    %3303 = vmatmul.mubr.bf16.gmra.mxu0 %v1648
    %v3304 = vpop.f32.mrf.mxu0
    %v3305 = vadd.f32 %v1973, %v3304
    %v3306 = vpop.f32.mrf.mxu0
    %v3307 = vadd.f32 %v1977, %v3306
    %v3308 = vpop.f32.mrf.mxu0
    %v3309 = vadd.f32 %v1973, %v3308
    %v3310 = vpop.f32.mrf.mxu0
    %v3311 = vadd.f32 %v1977, %v3310
    %3312 = vmatprep.mubr.bf16.mxu0 %v1657
    %3313 = vmatmul.mubr.bf16.gmra.mxu0 %v1656
    %v3314 = vpop.f32.mrf.mxu0
    %v3315 = vadd.f32 %v1973, %v3314
    %v3316 = vpop.f32.mrf.mxu0
    %v3317 = vadd.f32 %v1977, %v3316
    %v3318 = vpop.f32.mrf.mxu0
    %v3319 = vadd.f32 %v1973, %v3318
    %v3320 = vpop.f32.mrf.mxu0
    %v3321 = vadd.f32 %v1977, %v3320
    %3322 = vmatprep.mubr.bf16.mxu0 %v1665
    %3323 = vmatmul.mubr.bf16.gmra.mxu0 %v1664
    %v3324 = vpop.f32.mrf.mxu0
    %v3325 = vadd.f32 %v1973, %v3324
    %v3326 = vpop.f32.mrf.mxu0
    %v3327 = vadd.f32 %v1977, %v3326
    %v3328 = vpop.f32.mrf.mxu0
    %v3329 = vadd.f32 %v1973, %v3328
    %v3330 = vpop.f32.mrf.mxu0
    %v3331 = vadd.f32 %v1977, %v3330
    %3332 = vmatprep.mubr.bf16.mxu0 %v1673
    %3333 = vmatmul.mubr.bf16.gmra.mxu0 %v1672
    %v3334 = vpop.f32.mrf.mxu0
    %v3335 = vadd.f32 %v1973, %v3334
    %v3336 = vpop.f32.mrf.mxu0
    %v3337 = vadd.f32 %v1977, %v3336
    %v3338 = vpop.f32.mrf.mxu0
    %v3339 = vadd.f32 %v1973, %v3338
    %v3340 = vpop.f32.mrf.mxu0
    %v3341 = vadd.f32 %v1977, %v3340
    %3342 = vmatprep.mubr.bf16.mxu0 %v1681
    %3343 = vmatmul.mubr.bf16.gmra.mxu0 %v1680
    %v3344 = vpop.f32.mrf.mxu0
    %v3345 = vadd.f32 %v1973, %v3344
    %v3346 = vpop.f32.mrf.mxu0
    %v3347 = vadd.f32 %v1977, %v3346
    %v3348 = vpop.f32.mrf.mxu0
    %v3349 = vadd.f32 %v1973, %v3348
    %v3350 = vpop.f32.mrf.mxu0
    %v3351 = vadd.f32 %v1977, %v3350
    %3352 = vmatprep.mubr.bf16.mxu0 %v1689
    %3353 = vmatmul.mubr.bf16.gmra.mxu0 %v1688
    %v3354 = vpop.f32.mrf.mxu0
    %v3355 = vadd.f32 %v1973, %v3354
    %v3356 = vpop.f32.mrf.mxu0
    %v3357 = vadd.f32 %v1977, %v3356
    %v3358 = vpop.f32.mrf.mxu0
    %v3359 = vadd.f32 %v1973, %v3358
    %v3360 = vpop.f32.mrf.mxu0
    %v3361 = vadd.f32 %v1977, %v3360
    %3362 = vmatprep.mubr.bf16.mxu0 %v1697
    %3363 = vmatmul.mubr.bf16.gmra.mxu0 %v1696
    %v3364 = vpop.f32.mrf.mxu0
    %v3365 = vadd.f32 %v1973, %v3364
    %v3366 = vpop.f32.mrf.mxu0
    %v3367 = vadd.f32 %v1977, %v3366
    %v3368 = vpop.f32.mrf.mxu0
    %v3369 = vadd.f32 %v1973, %v3368
    %v3370 = vpop.f32.mrf.mxu0
    %v3371 = vadd.f32 %v1977, %v3370
    %3372 = vmatprep.mubr.bf16.mxu0 %v1705
    %3373 = vmatmul.mubr.bf16.gmra.mxu0 %v1704
    %v3374 = vpop.f32.mrf.mxu0
    %v3375 = vadd.f32 %v1973, %v3374
    %v3376 = vpop.f32.mrf.mxu0
    %v3377 = vadd.f32 %v1977, %v3376
    %v3378 = vpop.f32.mrf.mxu0
    %v3379 = vadd.f32 %v1973, %v3378
    %v3380 = vpop.f32.mrf.mxu0
    %v3381 = vadd.f32 %v1977, %v3380
    %3382 = vdwg.mxu0
    %3383 = vmatprep.subr.bf16.mxu0 %v2851
    %3384 = vmatpush1.bf16.msra.mxu0 %v2850
    %3385 = vmatprep.subr.bf16.mxu0 %v2847
    %3386 = vmatpush1.bf16.msra.mxu0 %v2846
    %3387 = vmatprep.subr.bf16.mxu0 %v2843
    %3388 = vmatpush1.bf16.msra.mxu0 %v2842
    %3389 = vmatprep.subr.bf16.mxu0 %v2839
    %3390 = vmatpush1.bf16.msra.mxu0 %v2838
    %3391 = vmatprep.subr.bf16.mxu0 %v2835
    %3392 = vmatpush1.bf16.msra.mxu0 %v2834
    %3393 = vmatprep.subr.bf16.mxu0 %v2831
    %3394 = vmatpush1.bf16.msra.mxu0 %v2830
    %3395 = vmatprep.subr.bf16.mxu0 %v2827
    %3396 = vmatpush1.bf16.msra.mxu0 %v2826
    %3397 = vmatprep.subr.bf16.mxu0 %v2823
    %3398 = vmatpush1.bf16.msra.mxu0 %v2822
    %3399 = vmatprep.subr.bf16.mxu0 %v2883
    %3400 = vmatpush2.bf16.msra.mxu0 %v2882
    %3401 = vmatprep.subr.bf16.mxu0 %v2879
    %3402 = vmatpush2.bf16.msra.mxu0 %v2878
    %3403 = vmatprep.subr.bf16.mxu0 %v2875
    %3404 = vmatpush2.bf16.msra.mxu0 %v2874
    %3405 = vmatprep.subr.bf16.mxu0 %v2871
    %3406 = vmatpush2.bf16.msra.mxu0 %v2870
    %3407 = vmatprep.subr.bf16.mxu0 %v2867
    %3408 = vmatpush2.bf16.msra.mxu0 %v2866
    %3409 = vmatprep.subr.bf16.mxu0 %v2863
    %3410 = vmatpush2.bf16.msra.mxu0 %v2862
    %3411 = vmatprep.subr.bf16.mxu0 %v2859
    %3412 = vmatpush2.bf16.msra.mxu0 %v2858
    %3413 = vmatprep.subr.bf16.mxu0 %v2855
    %3414 = vmatpush2.bf16.msra.mxu0 %v2854
    %3415 = vmatprep.mubr.bf16.mxu0 %v1651
    %3416 = vmatmul.mubr.bf16.gmra.mxu0 %v1650
    %v3417 = vpop.f32.mrf.mxu0
    %v3418 = vadd.f32 %v3305, %v3417
    %v3419 = vpop.f32.mrf.mxu0
    %v3420 = vadd.f32 %v3307, %v3419
    %v3421 = vpop.f32.mrf.mxu0
    %v3422 = vadd.f32 %v3309, %v3421
    %v3423 = vpop.f32.mrf.mxu0
    %v3424 = vadd.f32 %v3311, %v3423
    %3425 = vmatprep.mubr.bf16.mxu0 %v1659
    %3426 = vmatmul.mubr.bf16.gmra.mxu0 %v1658
    %v3427 = vpop.f32.mrf.mxu0
    %v3428 = vadd.f32 %v3315, %v3427
    %v3429 = vpop.f32.mrf.mxu0
    %v3430 = vadd.f32 %v3317, %v3429
    %v3431 = vpop.f32.mrf.mxu0
    %v3432 = vadd.f32 %v3319, %v3431
    %v3433 = vpop.f32.mrf.mxu0
    %v3434 = vadd.f32 %v3321, %v3433
    %3435 = vmatprep.mubr.bf16.mxu0 %v1667
    %3436 = vmatmul.mubr.bf16.gmra.mxu0 %v1666
    %v3437 = vpop.f32.mrf.mxu0
    %v3438 = vadd.f32 %v3325, %v3437
    %v3439 = vpop.f32.mrf.mxu0
    %v3440 = vadd.f32 %v3327, %v3439
    %v3441 = vpop.f32.mrf.mxu0
    %v3442 = vadd.f32 %v3329, %v3441
    %v3443 = vpop.f32.mrf.mxu0
    %v3444 = vadd.f32 %v3331, %v3443
    %3445 = vmatprep.mubr.bf16.mxu0 %v1675
    %3446 = vmatmul.mubr.bf16.gmra.mxu0 %v1674
    %v3447 = vpop.f32.mrf.mxu0
    %v3448 = vadd.f32 %v3335, %v3447
    %v3449 = vpop.f32.mrf.mxu0
    %v3450 = vadd.f32 %v3337, %v3449
    %v3451 = vpop.f32.mrf.mxu0
    %v3452 = vadd.f32 %v3339, %v3451
    %v3453 = vpop.f32.mrf.mxu0
    %v3454 = vadd.f32 %v3341, %v3453
    %3455 = vmatprep.mubr.bf16.mxu0 %v1683
    %3456 = vmatmul.mubr.bf16.gmra.mxu0 %v1682
    %v3457 = vpop.f32.mrf.mxu0
    %v3458 = vadd.f32 %v3345, %v3457
    %v3459 = vpop.f32.mrf.mxu0
    %v3460 = vadd.f32 %v3347, %v3459
    %v3461 = vpop.f32.mrf.mxu0
    %v3462 = vadd.f32 %v3349, %v3461
    %v3463 = vpop.f32.mrf.mxu0
    %v3464 = vadd.f32 %v3351, %v3463
    %3465 = vmatprep.mubr.bf16.mxu0 %v1691
    %3466 = vmatmul.mubr.bf16.gmra.mxu0 %v1690
    %v3467 = vpop.f32.mrf.mxu0
    %v3468 = vadd.f32 %v3355, %v3467
    %v3469 = vpop.f32.mrf.mxu0
    %v3470 = vadd.f32 %v3357, %v3469
    %v3471 = vpop.f32.mrf.mxu0
    %v3472 = vadd.f32 %v3359, %v3471
    %v3473 = vpop.f32.mrf.mxu0
    %v3474 = vadd.f32 %v3361, %v3473
    %3475 = vmatprep.mubr.bf16.mxu0 %v1699
    %3476 = vmatmul.mubr.bf16.gmra.mxu0 %v1698
    %v3477 = vpop.f32.mrf.mxu0
    %v3478 = vadd.f32 %v3365, %v3477
    %v3479 = vpop.f32.mrf.mxu0
    %v3480 = vadd.f32 %v3367, %v3479
    %v3481 = vpop.f32.mrf.mxu0
    %v3482 = vadd.f32 %v3369, %v3481
    %v3483 = vpop.f32.mrf.mxu0
    %v3484 = vadd.f32 %v3371, %v3483
    %3485 = vmatprep.mubr.bf16.mxu0 %v1707
    %3486 = vmatmul.mubr.bf16.gmra.mxu0 %v1706
    %v3487 = vpop.f32.mrf.mxu0
    %v3488 = vadd.f32 %v3375, %v3487
    %v3489 = vpop.f32.mrf.mxu0
    %v3490 = vadd.f32 %v3377, %v3489
    %v3491 = vpop.f32.mrf.mxu0
    %v3492 = vadd.f32 %v3379, %v3491
    %v3493 = vpop.f32.mrf.mxu0
    %v3494 = vadd.f32 %v3381, %v3493
    %3495 = vdwg.mxu0
    %3496 = vmatprep.subr.bf16.mxu0 %v2915
    %3497 = vmatpush1.bf16.msra.mxu0 %v2914
    %3498 = vmatprep.subr.bf16.mxu0 %v2911
    %3499 = vmatpush1.bf16.msra.mxu0 %v2910
    %3500 = vmatprep.subr.bf16.mxu0 %v2907
    %3501 = vmatpush1.bf16.msra.mxu0 %v2906
    %3502 = vmatprep.subr.bf16.mxu0 %v2903
    %3503 = vmatpush1.bf16.msra.mxu0 %v2902
    %3504 = vmatprep.subr.bf16.mxu0 %v2899
    %3505 = vmatpush1.bf16.msra.mxu0 %v2898
    %3506 = vmatprep.subr.bf16.mxu0 %v2895
    %3507 = vmatpush1.bf16.msra.mxu0 %v2894
    %3508 = vmatprep.subr.bf16.mxu0 %v2891
    %3509 = vmatpush1.bf16.msra.mxu0 %v2890
    %3510 = vmatprep.subr.bf16.mxu0 %v2887
    %3511 = vmatpush1.bf16.msra.mxu0 %v2886
    %3512 = vmatprep.subr.bf16.mxu0 %v2947
    %3513 = vmatpush2.bf16.msra.mxu0 %v2946
    %3514 = vmatprep.subr.bf16.mxu0 %v2943
    %3515 = vmatpush2.bf16.msra.mxu0 %v2942
    %3516 = vmatprep.subr.bf16.mxu0 %v2939
    %3517 = vmatpush2.bf16.msra.mxu0 %v2938
    %3518 = vmatprep.subr.bf16.mxu0 %v2935
    %3519 = vmatpush2.bf16.msra.mxu0 %v2934
    %3520 = vmatprep.subr.bf16.mxu0 %v2931
    %3521 = vmatpush2.bf16.msra.mxu0 %v2930
    %3522 = vmatprep.subr.bf16.mxu0 %v2927
    %3523 = vmatpush2.bf16.msra.mxu0 %v2926
    %3524 = vmatprep.subr.bf16.mxu0 %v2923
    %3525 = vmatpush2.bf16.msra.mxu0 %v2922
    %3526 = vmatprep.subr.bf16.mxu0 %v2919
    %3527 = vmatpush2.bf16.msra.mxu0 %v2918
    %3528 = vmatprep.mubr.bf16.mxu0 %v1653
    %3529 = vmatmul.mubr.bf16.gmra.mxu0 %v1652
    %v3530 = vpop.f32.mrf.mxu0
    %v3531 = vadd.f32 %v3418, %v3530
    %v3532 = vpop.f32.mrf.mxu0
    %v3533 = vadd.f32 %v3420, %v3532
    %v3534 = vpop.f32.mrf.mxu0
    %v3535 = vadd.f32 %v3422, %v3534
    %v3536 = vpop.f32.mrf.mxu0
    %v3537 = vadd.f32 %v3424, %v3536
    %3538 = vmatprep.mubr.bf16.mxu0 %v1661
    %3539 = vmatmul.mubr.bf16.gmra.mxu0 %v1660
    %v3540 = vpop.f32.mrf.mxu0
    %v3541 = vadd.f32 %v3428, %v3540
    %v3542 = vpop.f32.mrf.mxu0
    %v3543 = vadd.f32 %v3430, %v3542
    %v3544 = vpop.f32.mrf.mxu0
    %v3545 = vadd.f32 %v3432, %v3544
    %v3546 = vpop.f32.mrf.mxu0
    %v3547 = vadd.f32 %v3434, %v3546
    %3548 = vmatprep.mubr.bf16.mxu0 %v1669
    %3549 = vmatmul.mubr.bf16.gmra.mxu0 %v1668
    %v3550 = vpop.f32.mrf.mxu0
    %v3551 = vadd.f32 %v3438, %v3550
    %v3552 = vpop.f32.mrf.mxu0
    %v3553 = vadd.f32 %v3440, %v3552
    %v3554 = vpop.f32.mrf.mxu0
    %v3555 = vadd.f32 %v3442, %v3554
    %v3556 = vpop.f32.mrf.mxu0
    %v3557 = vadd.f32 %v3444, %v3556
    %3558 = vmatprep.mubr.bf16.mxu0 %v1677
    %3559 = vmatmul.mubr.bf16.gmra.mxu0 %v1676
    %v3560 = vpop.f32.mrf.mxu0
    %v3561 = vadd.f32 %v3448, %v3560
    %v3562 = vpop.f32.mrf.mxu0
    %v3563 = vadd.f32 %v3450, %v3562
    %v3564 = vpop.f32.mrf.mxu0
    %v3565 = vadd.f32 %v3452, %v3564
    %v3566 = vpop.f32.mrf.mxu0
    %v3567 = vadd.f32 %v3454, %v3566
    %3568 = vmatprep.mubr.bf16.mxu0 %v1685
    %3569 = vmatmul.mubr.bf16.gmra.mxu0 %v1684
    %v3570 = vpop.f32.mrf.mxu0
    %v3571 = vadd.f32 %v3458, %v3570
    %v3572 = vpop.f32.mrf.mxu0
    %v3573 = vadd.f32 %v3460, %v3572
    %v3574 = vpop.f32.mrf.mxu0
    %v3575 = vadd.f32 %v3462, %v3574
    %v3576 = vpop.f32.mrf.mxu0
    %v3577 = vadd.f32 %v3464, %v3576
    %3578 = vmatprep.mubr.bf16.mxu0 %v1693
    %3579 = vmatmul.mubr.bf16.gmra.mxu0 %v1692
    %v3580 = vpop.f32.mrf.mxu0
    %v3581 = vadd.f32 %v3468, %v3580
    %v3582 = vpop.f32.mrf.mxu0
    %v3583 = vadd.f32 %v3470, %v3582
    %v3584 = vpop.f32.mrf.mxu0
    %v3585 = vadd.f32 %v3472, %v3584
    %v3586 = vpop.f32.mrf.mxu0
    %v3587 = vadd.f32 %v3474, %v3586
    %3588 = vmatprep.mubr.bf16.mxu0 %v1701
    %3589 = vmatmul.mubr.bf16.gmra.mxu0 %v1700
    %v3590 = vpop.f32.mrf.mxu0
    %v3591 = vadd.f32 %v3478, %v3590
    %v3592 = vpop.f32.mrf.mxu0
    %v3593 = vadd.f32 %v3480, %v3592
    %v3594 = vpop.f32.mrf.mxu0
    %v3595 = vadd.f32 %v3482, %v3594
    %v3596 = vpop.f32.mrf.mxu0
    %v3597 = vadd.f32 %v3484, %v3596
    %3598 = vmatprep.mubr.bf16.mxu0 %v1709
    %3599 = vmatmul.mubr.bf16.gmra.mxu0 %v1708
    %v3600 = vpop.f32.mrf.mxu0
    %v3601 = vadd.f32 %v3488, %v3600
    %v3602 = vpop.f32.mrf.mxu0
    %v3603 = vadd.f32 %v3490, %v3602
    %v3604 = vpop.f32.mrf.mxu0
    %v3605 = vadd.f32 %v3492, %v3604
    %v3606 = vpop.f32.mrf.mxu0
    %v3607 = vadd.f32 %v3494, %v3606
    %3608 = vdwg.mxu0
    %3609 = vmatprep.subr.bf16.mxu0 %v2979
    %3610 = vmatpush1.bf16.msra.mxu0 %v2978
    %3611 = vmatprep.subr.bf16.mxu0 %v2975
    %3612 = vmatpush1.bf16.msra.mxu0 %v2974
    %3613 = vmatprep.subr.bf16.mxu0 %v2971
    %3614 = vmatpush1.bf16.msra.mxu0 %v2970
    %3615 = vmatprep.subr.bf16.mxu0 %v2967
    %3616 = vmatpush1.bf16.msra.mxu0 %v2966
    %3617 = vmatprep.subr.bf16.mxu0 %v2963
    %3618 = vmatpush1.bf16.msra.mxu0 %v2962
    %3619 = vmatprep.subr.bf16.mxu0 %v2959
    %3620 = vmatpush1.bf16.msra.mxu0 %v2958
    %3621 = vmatprep.subr.bf16.mxu0 %v2955
    %3622 = vmatpush1.bf16.msra.mxu0 %v2954
    %3623 = vmatprep.subr.bf16.mxu0 %v2951
    %3624 = vmatpush1.bf16.msra.mxu0 %v2950
    %3625 = vmatprep.subr.bf16.mxu0 %v3011
    %3626 = vmatpush2.bf16.msra.mxu0 %v3010
    %3627 = vmatprep.subr.bf16.mxu0 %v3007
    %3628 = vmatpush2.bf16.msra.mxu0 %v3006
    %3629 = vmatprep.subr.bf16.mxu0 %v3003
    %3630 = vmatpush2.bf16.msra.mxu0 %v3002
    %3631 = vmatprep.subr.bf16.mxu0 %v2999
    %3632 = vmatpush2.bf16.msra.mxu0 %v2998
    %3633 = vmatprep.subr.bf16.mxu0 %v2995
    %3634 = vmatpush2.bf16.msra.mxu0 %v2994
    %3635 = vmatprep.subr.bf16.mxu0 %v2991
    %3636 = vmatpush2.bf16.msra.mxu0 %v2990
    %3637 = vmatprep.subr.bf16.mxu0 %v2987
    %3638 = vmatpush2.bf16.msra.mxu0 %v2986
    %3639 = vmatprep.subr.bf16.mxu0 %v2983
    %3640 = vmatpush2.bf16.msra.mxu0 %v2982
    %3641 = vmatprep.mubr.bf16.mxu0 %v1655
    %3642 = vmatmul.mubr.bf16.gmra.mxu0 %v1654
    %v3643 = vpop.f32.mrf.mxu0
    %v3644 = vadd.f32 %v3531, %v3643
    %v3645 = vpop.f32.mrf.mxu0
    %v3646 = vadd.f32 %v3533, %v3645
    %v3647 = vpop.f32.mrf.mxu0
    %v3648 = vadd.f32 %v3535, %v3647
    %v3649 = vpop.f32.mrf.mxu0
    %v3650 = vadd.f32 %v3537, %v3649
    %3651 = vmatprep.mubr.bf16.mxu0 %v1663
    %3652 = vmatmul.mubr.bf16.gmra.mxu0 %v1662
    %v3653 = vpop.f32.mrf.mxu0
    %v3654 = vadd.f32 %v3541, %v3653
    %v3655 = vpop.f32.mrf.mxu0
    %v3656 = vadd.f32 %v3543, %v3655
    %v3657 = vpop.f32.mrf.mxu0
    %v3658 = vadd.f32 %v3545, %v3657
    %v3659 = vpop.f32.mrf.mxu0
    %v3660 = vadd.f32 %v3547, %v3659
    %3661 = vmatprep.mubr.bf16.mxu0 %v1671
    %3662 = vmatmul.mubr.bf16.gmra.mxu0 %v1670
    %v3663 = vpop.f32.mrf.mxu0
    %v3664 = vadd.f32 %v3551, %v3663
    %v3665 = vpop.f32.mrf.mxu0
    %v3666 = vadd.f32 %v3553, %v3665
    %v3667 = vpop.f32.mrf.mxu0
    %v3668 = vadd.f32 %v3555, %v3667
    %v3669 = vpop.f32.mrf.mxu0
    %v3670 = vadd.f32 %v3557, %v3669
    %3671 = vmatprep.mubr.bf16.mxu0 %v1679
    %3672 = vmatmul.mubr.bf16.gmra.mxu0 %v1678
    %v3673 = vpop.f32.mrf.mxu0
    %v3674 = vadd.f32 %v3561, %v3673
    %v3675 = vpop.f32.mrf.mxu0
    %v3676 = vadd.f32 %v3563, %v3675
    %v3677 = vpop.f32.mrf.mxu0
    %v3678 = vadd.f32 %v3565, %v3677
    %v3679 = vpop.f32.mrf.mxu0
    %v3680 = vadd.f32 %v3567, %v3679
    %3681 = vmatprep.mubr.bf16.mxu0 %v1687
    %3682 = vmatmul.mubr.bf16.gmra.mxu0 %v1686
    %v3683 = vpop.f32.mrf.mxu0
    %v3684 = vadd.f32 %v3571, %v3683
    %v3685 = vpop.f32.mrf.mxu0
    %v3686 = vadd.f32 %v3573, %v3685
    %v3687 = vpop.f32.mrf.mxu0
    %v3688 = vadd.f32 %v3575, %v3687
    %v3689 = vpop.f32.mrf.mxu0
    %v3690 = vadd.f32 %v3577, %v3689
    %3691 = vmatprep.mubr.bf16.mxu0 %v1695
    %3692 = vmatmul.mubr.bf16.gmra.mxu0 %v1694
    %v3693 = vpop.f32.mrf.mxu0
    %v3694 = vadd.f32 %v3581, %v3693
    %v3695 = vpop.f32.mrf.mxu0
    %v3696 = vadd.f32 %v3583, %v3695
    %v3697 = vpop.f32.mrf.mxu0
    %v3698 = vadd.f32 %v3585, %v3697
    %v3699 = vpop.f32.mrf.mxu0
    %v3700 = vadd.f32 %v3587, %v3699
    %3701 = vmatprep.mubr.bf16.mxu0 %v1703
    %3702 = vmatmul.mubr.bf16.gmra.mxu0 %v1702
    %v3703 = vpop.f32.mrf.mxu0
    %v3704 = vadd.f32 %v3591, %v3703
    %v3705 = vpop.f32.mrf.mxu0
    %v3706 = vadd.f32 %v3593, %v3705
    %v3707 = vpop.f32.mrf.mxu0
    %v3708 = vadd.f32 %v3595, %v3707
    %v3709 = vpop.f32.mrf.mxu0
    %v3710 = vadd.f32 %v3597, %v3709
    %3711 = vmatprep.mubr.bf16.mxu0 %v1711
    %3712 = vmatmul.mubr.bf16.gmra.mxu0 %v1710
    %v3713 = vpop.f32.mrf.mxu0
    %v3714 = vadd.f32 %v3601, %v3713
    %v3715 = vpop.f32.mrf.mxu0
    %v3716 = vadd.f32 %v3603, %v3715
    %v3717 = vpop.f32.mrf.mxu0
    %v3718 = vadd.f32 %v3605, %v3717
    %v3719 = vpop.f32.mrf.mxu0
    %v3720 = vadd.f32 %v3607, %v3719
    %3721 = vdwg.mxu0
    %3722 = vmatprep.subr.bf16.mxu0 %v2789
    %3723 = vmatpush1.bf16.msra.mxu0 %v2788
    %3724 = vmatprep.subr.bf16.mxu0 %v2785
    %3725 = vmatpush1.bf16.msra.mxu0 %v2784
    %3726 = vmatprep.subr.bf16.mxu0 %v2781
    %3727 = vmatpush1.bf16.msra.mxu0 %v2780
    %3728 = vmatprep.subr.bf16.mxu0 %v2777
    %3729 = vmatpush1.bf16.msra.mxu0 %v2776
    %3730 = vmatprep.subr.bf16.mxu0 %v2773
    %3731 = vmatpush1.bf16.msra.mxu0 %v2772
    %3732 = vmatprep.subr.bf16.mxu0 %v2769
    %3733 = vmatpush1.bf16.msra.mxu0 %v2768
    %3734 = vmatprep.subr.bf16.mxu0 %v2765
    %3735 = vmatpush1.bf16.msra.mxu0 %v2764
    %3736 = vmatprep.subr.bf16.mxu0 %v2761
    %3737 = vmatpush1.bf16.msra.mxu0 %v2760
    %3738 = vmatprep.subr.bf16.mxu0 %v2821
    %3739 = vmatpush2.bf16.msra.mxu0 %v2820
    %3740 = vmatprep.subr.bf16.mxu0 %v2817
    %3741 = vmatpush2.bf16.msra.mxu0 %v2816
    %3742 = vmatprep.subr.bf16.mxu0 %v2813
    %3743 = vmatpush2.bf16.msra.mxu0 %v2812
    %3744 = vmatprep.subr.bf16.mxu0 %v2809
    %3745 = vmatpush2.bf16.msra.mxu0 %v2808
    %3746 = vmatprep.subr.bf16.mxu0 %v2805
    %3747 = vmatpush2.bf16.msra.mxu0 %v2804
    %3748 = vmatprep.subr.bf16.mxu0 %v2801
    %3749 = vmatpush2.bf16.msra.mxu0 %v2800
    %3750 = vmatprep.subr.bf16.mxu0 %v2797
    %3751 = vmatpush2.bf16.msra.mxu0 %v2796
    %3752 = vmatprep.subr.bf16.mxu0 %v2793
    %3753 = vmatpush2.bf16.msra.mxu0 %v2792
    %3754 = vmatprep.mubr.bf16.mxu0 %v1649
    %3755 = vmatmul.mubr.bf16.gmra.mxu0 %v1648
    %v3756 = vpop.f32.mrf.mxu0
    %v3757 = vadd.f32 %v1981, %v3756
    %v3758 = vpop.f32.mrf.mxu0
    %v3759 = vadd.f32 %v1985, %v3758
    %v3760 = vpop.f32.mrf.mxu0
    %v3761 = vadd.f32 %v1981, %v3760
    %v3762 = vpop.f32.mrf.mxu0
    %v3763 = vadd.f32 %v1985, %v3762
    %3764 = vmatprep.mubr.bf16.mxu0 %v1657
    %3765 = vmatmul.mubr.bf16.gmra.mxu0 %v1656
    %v3766 = vpop.f32.mrf.mxu0
    %v3767 = vadd.f32 %v1981, %v3766
    %v3768 = vpop.f32.mrf.mxu0
    %v3769 = vadd.f32 %v1985, %v3768
    %v3770 = vpop.f32.mrf.mxu0
    %v3771 = vadd.f32 %v1981, %v3770
    %v3772 = vpop.f32.mrf.mxu0
    %v3773 = vadd.f32 %v1985, %v3772
    %3774 = vmatprep.mubr.bf16.mxu0 %v1665
    %3775 = vmatmul.mubr.bf16.gmra.mxu0 %v1664
    %v3776 = vpop.f32.mrf.mxu0
    %v3777 = vadd.f32 %v1981, %v3776
    %v3778 = vpop.f32.mrf.mxu0
    %v3779 = vadd.f32 %v1985, %v3778
    %v3780 = vpop.f32.mrf.mxu0
    %v3781 = vadd.f32 %v1981, %v3780
    %v3782 = vpop.f32.mrf.mxu0
    %v3783 = vadd.f32 %v1985, %v3782
    %3784 = vmatprep.mubr.bf16.mxu0 %v1673
    %3785 = vmatmul.mubr.bf16.gmra.mxu0 %v1672
    %v3786 = vpop.f32.mrf.mxu0
    %v3787 = vadd.f32 %v1981, %v3786
    %v3788 = vpop.f32.mrf.mxu0
    %v3789 = vadd.f32 %v1985, %v3788
    %v3790 = vpop.f32.mrf.mxu0
    %v3791 = vadd.f32 %v1981, %v3790
    %v3792 = vpop.f32.mrf.mxu0
    %v3793 = vadd.f32 %v1985, %v3792
    %3794 = vmatprep.mubr.bf16.mxu0 %v1681
    %3795 = vmatmul.mubr.bf16.gmra.mxu0 %v1680
    %v3796 = vpop.f32.mrf.mxu0
    %v3797 = vadd.f32 %v1981, %v3796
    %v3798 = vpop.f32.mrf.mxu0
    %v3799 = vadd.f32 %v1985, %v3798
    %v3800 = vpop.f32.mrf.mxu0
    %v3801 = vadd.f32 %v1981, %v3800
    %v3802 = vpop.f32.mrf.mxu0
    %v3803 = vadd.f32 %v1985, %v3802
    %3804 = vmatprep.mubr.bf16.mxu0 %v1689
    %3805 = vmatmul.mubr.bf16.gmra.mxu0 %v1688
    %v3806 = vpop.f32.mrf.mxu0
    %v3807 = vadd.f32 %v1981, %v3806
    %v3808 = vpop.f32.mrf.mxu0
    %v3809 = vadd.f32 %v1985, %v3808
    %v3810 = vpop.f32.mrf.mxu0
    %v3811 = vadd.f32 %v1981, %v3810
    %v3812 = vpop.f32.mrf.mxu0
    %v3813 = vadd.f32 %v1985, %v3812
    %3814 = vmatprep.mubr.bf16.mxu0 %v1697
    %3815 = vmatmul.mubr.bf16.gmra.mxu0 %v1696
    %v3816 = vpop.f32.mrf.mxu0
    %v3817 = vadd.f32 %v1981, %v3816
    %v3818 = vpop.f32.mrf.mxu0
    %v3819 = vadd.f32 %v1985, %v3818
    %v3820 = vpop.f32.mrf.mxu0
    %v3821 = vadd.f32 %v1981, %v3820
    %v3822 = vpop.f32.mrf.mxu0
    %v3823 = vadd.f32 %v1985, %v3822
    %3824 = vmatprep.mubr.bf16.mxu0 %v1705
    %3825 = vmatmul.mubr.bf16.gmra.mxu0 %v1704
    %v3826 = vpop.f32.mrf.mxu0
    %v3827 = vadd.f32 %v1981, %v3826
    %v3828 = vpop.f32.mrf.mxu0
    %v3829 = vadd.f32 %v1985, %v3828
    %v3830 = vpop.f32.mrf.mxu0
    %v3831 = vadd.f32 %v1981, %v3830
    %v3832 = vpop.f32.mrf.mxu0
    %v3833 = vadd.f32 %v1985, %v3832
    %3834 = vdwg.mxu0
    %3835 = vmatprep.subr.bf16.mxu0 %v2853
    %3836 = vmatpush1.bf16.msra.mxu0 %v2852
    %3837 = vmatprep.subr.bf16.mxu0 %v2849
    %3838 = vmatpush1.bf16.msra.mxu0 %v2848
    %3839 = vmatprep.subr.bf16.mxu0 %v2845
    %3840 = vmatpush1.bf16.msra.mxu0 %v2844
    %3841 = vmatprep.subr.bf16.mxu0 %v2841
    %3842 = vmatpush1.bf16.msra.mxu0 %v2840
    %3843 = vmatprep.subr.bf16.mxu0 %v2837
    %3844 = vmatpush1.bf16.msra.mxu0 %v2836
    %3845 = vmatprep.subr.bf16.mxu0 %v2833
    %3846 = vmatpush1.bf16.msra.mxu0 %v2832
    %3847 = vmatprep.subr.bf16.mxu0 %v2829
    %3848 = vmatpush1.bf16.msra.mxu0 %v2828
    %3849 = vmatprep.subr.bf16.mxu0 %v2825
    %3850 = vmatpush1.bf16.msra.mxu0 %v2824
    %3851 = vmatprep.subr.bf16.mxu0 %v2885
    %3852 = vmatpush2.bf16.msra.mxu0 %v2884
    %3853 = vmatprep.subr.bf16.mxu0 %v2881
    %3854 = vmatpush2.bf16.msra.mxu0 %v2880
    %3855 = vmatprep.subr.bf16.mxu0 %v2877
    %3856 = vmatpush2.bf16.msra.mxu0 %v2876
    %3857 = vmatprep.subr.bf16.mxu0 %v2873
    %3858 = vmatpush2.bf16.msra.mxu0 %v2872
    %3859 = vmatprep.subr.bf16.mxu0 %v2869
    %3860 = vmatpush2.bf16.msra.mxu0 %v2868
    %3861 = vmatprep.subr.bf16.mxu0 %v2865
    %3862 = vmatpush2.bf16.msra.mxu0 %v2864
    %3863 = vmatprep.subr.bf16.mxu0 %v2861
    %3864 = vmatpush2.bf16.msra.mxu0 %v2860
    %3865 = vmatprep.subr.bf16.mxu0 %v2857
    %3866 = vmatpush2.bf16.msra.mxu0 %v2856
    %3867 = vmatprep.mubr.bf16.mxu0 %v1651
    %3868 = vmatmul.mubr.bf16.gmra.mxu0 %v1650
    %v3869 = vpop.f32.mrf.mxu0
    %v3870 = vadd.f32 %v3757, %v3869
    %v3871 = vpop.f32.mrf.mxu0
    %v3872 = vadd.f32 %v3759, %v3871
    %v3873 = vpop.f32.mrf.mxu0
    %v3874 = vadd.f32 %v3761, %v3873
    %v3875 = vpop.f32.mrf.mxu0
    %v3876 = vadd.f32 %v3763, %v3875
    %3877 = vmatprep.mubr.bf16.mxu0 %v1659
    %3878 = vmatmul.mubr.bf16.gmra.mxu0 %v1658
    %v3879 = vpop.f32.mrf.mxu0
    %v3880 = vadd.f32 %v3767, %v3879
    %v3881 = vpop.f32.mrf.mxu0
    %v3882 = vadd.f32 %v3769, %v3881
    %v3883 = vpop.f32.mrf.mxu0
    %v3884 = vadd.f32 %v3771, %v3883
    %v3885 = vpop.f32.mrf.mxu0
    %v3886 = vadd.f32 %v3773, %v3885
    %3887 = vmatprep.mubr.bf16.mxu0 %v1667
    %3888 = vmatmul.mubr.bf16.gmra.mxu0 %v1666
    %v3889 = vpop.f32.mrf.mxu0
    %v3890 = vadd.f32 %v3777, %v3889
    %v3891 = vpop.f32.mrf.mxu0
    %v3892 = vadd.f32 %v3779, %v3891
    %v3893 = vpop.f32.mrf.mxu0
    %v3894 = vadd.f32 %v3781, %v3893
    %v3895 = vpop.f32.mrf.mxu0
    %v3896 = vadd.f32 %v3783, %v3895
    %3897 = vmatprep.mubr.bf16.mxu0 %v1675
    %3898 = vmatmul.mubr.bf16.gmra.mxu0 %v1674
    %v3899 = vpop.f32.mrf.mxu0
    %v3900 = vadd.f32 %v3787, %v3899
    %v3901 = vpop.f32.mrf.mxu0
    %v3902 = vadd.f32 %v3789, %v3901
    %v3903 = vpop.f32.mrf.mxu0
    %v3904 = vadd.f32 %v3791, %v3903
    %v3905 = vpop.f32.mrf.mxu0
    %v3906 = vadd.f32 %v3793, %v3905
    %3907 = vmatprep.mubr.bf16.mxu0 %v1683
    %3908 = vmatmul.mubr.bf16.gmra.mxu0 %v1682
    %v3909 = vpop.f32.mrf.mxu0
    %v3910 = vadd.f32 %v3797, %v3909
    %v3911 = vpop.f32.mrf.mxu0
    %v3912 = vadd.f32 %v3799, %v3911
    %v3913 = vpop.f32.mrf.mxu0
    %v3914 = vadd.f32 %v3801, %v3913
    %v3915 = vpop.f32.mrf.mxu0
    %v3916 = vadd.f32 %v3803, %v3915
    %3917 = vmatprep.mubr.bf16.mxu0 %v1691
    %3918 = vmatmul.mubr.bf16.gmra.mxu0 %v1690
    %v3919 = vpop.f32.mrf.mxu0
    %v3920 = vadd.f32 %v3807, %v3919
    %v3921 = vpop.f32.mrf.mxu0
    %v3922 = vadd.f32 %v3809, %v3921
    %v3923 = vpop.f32.mrf.mxu0
    %v3924 = vadd.f32 %v3811, %v3923
    %v3925 = vpop.f32.mrf.mxu0
    %v3926 = vadd.f32 %v3813, %v3925
    %3927 = vmatprep.mubr.bf16.mxu0 %v1699
    %3928 = vmatmul.mubr.bf16.gmra.mxu0 %v1698
    %v3929 = vpop.f32.mrf.mxu0
    %v3930 = vadd.f32 %v3817, %v3929
    %v3931 = vpop.f32.mrf.mxu0
    %v3932 = vadd.f32 %v3819, %v3931
    %v3933 = vpop.f32.mrf.mxu0
    %v3934 = vadd.f32 %v3821, %v3933
    %v3935 = vpop.f32.mrf.mxu0
    %v3936 = vadd.f32 %v3823, %v3935
    %3937 = vmatprep.mubr.bf16.mxu0 %v1707
    %3938 = vmatmul.mubr.bf16.gmra.mxu0 %v1706
    %v3939 = vpop.f32.mrf.mxu0
    %v3940 = vadd.f32 %v3827, %v3939
    %v3941 = vpop.f32.mrf.mxu0
    %v3942 = vadd.f32 %v3829, %v3941
    %v3943 = vpop.f32.mrf.mxu0
    %v3944 = vadd.f32 %v3831, %v3943
    %v3945 = vpop.f32.mrf.mxu0
    %v3946 = vadd.f32 %v3833, %v3945
    %3947 = vdwg.mxu0
    %3948 = vmatprep.subr.bf16.mxu0 %v2917
    %3949 = vmatpush1.bf16.msra.mxu0 %v2916
    %3950 = vmatprep.subr.bf16.mxu0 %v2913
    %3951 = vmatpush1.bf16.msra.mxu0 %v2912
    %3952 = vmatprep.subr.bf16.mxu0 %v2909
    %3953 = vmatpush1.bf16.msra.mxu0 %v2908
    %3954 = vmatprep.subr.bf16.mxu0 %v2905
    %3955 = vmatpush1.bf16.msra.mxu0 %v2904
    %3956 = vmatprep.subr.bf16.mxu0 %v2901
    %3957 = vmatpush1.bf16.msra.mxu0 %v2900
    %3958 = vmatprep.subr.bf16.mxu0 %v2897
    %3959 = vmatpush1.bf16.msra.mxu0 %v2896
    %3960 = vmatprep.subr.bf16.mxu0 %v2893
    %3961 = vmatpush1.bf16.msra.mxu0 %v2892
    %3962 = vmatprep.subr.bf16.mxu0 %v2889
    %3963 = vmatpush1.bf16.msra.mxu0 %v2888
    %3964 = vmatprep.subr.bf16.mxu0 %v2949
    %3965 = vmatpush2.bf16.msra.mxu0 %v2948
    %3966 = vmatprep.subr.bf16.mxu0 %v2945
    %3967 = vmatpush2.bf16.msra.mxu0 %v2944
    %3968 = vmatprep.subr.bf16.mxu0 %v2941
    %3969 = vmatpush2.bf16.msra.mxu0 %v2940
    %3970 = vmatprep.subr.bf16.mxu0 %v2937
    %3971 = vmatpush2.bf16.msra.mxu0 %v2936
    %3972 = vmatprep.subr.bf16.mxu0 %v2933
    %3973 = vmatpush2.bf16.msra.mxu0 %v2932
    %3974 = vmatprep.subr.bf16.mxu0 %v2929
    %3975 = vmatpush2.bf16.msra.mxu0 %v2928
    %3976 = vmatprep.subr.bf16.mxu0 %v2925
    %3977 = vmatpush2.bf16.msra.mxu0 %v2924
    %3978 = vmatprep.subr.bf16.mxu0 %v2921
    %3979 = vmatpush2.bf16.msra.mxu0 %v2920
    %3980 = vmatprep.mubr.bf16.mxu0 %v1653
    %3981 = vmatmul.mubr.bf16.gmra.mxu0 %v1652
    %v3982 = vpop.f32.mrf.mxu0
    %v3983 = vadd.f32 %v3870, %v3982
    %v3984 = vpop.f32.mrf.mxu0
    %v3985 = vadd.f32 %v3872, %v3984
    %v3986 = vpop.f32.mrf.mxu0
    %v3987 = vadd.f32 %v3874, %v3986
    %v3988 = vpop.f32.mrf.mxu0
    %v3989 = vadd.f32 %v3876, %v3988
    %3990 = vmatprep.mubr.bf16.mxu0 %v1661
    %3991 = vmatmul.mubr.bf16.gmra.mxu0 %v1660
    %v3992 = vpop.f32.mrf.mxu0
    %v3993 = vadd.f32 %v3880, %v3992
    %v3994 = vpop.f32.mrf.mxu0
    %v3995 = vadd.f32 %v3882, %v3994
    %v3996 = vpop.f32.mrf.mxu0
    %v3997 = vadd.f32 %v3884, %v3996
    %v3998 = vpop.f32.mrf.mxu0
    %v3999 = vadd.f32 %v3886, %v3998
    %4000 = vmatprep.mubr.bf16.mxu0 %v1669
    %4001 = vmatmul.mubr.bf16.gmra.mxu0 %v1668
    %v4002 = vpop.f32.mrf.mxu0
    %v4003 = vadd.f32 %v3890, %v4002
    %v4004 = vpop.f32.mrf.mxu0
    %v4005 = vadd.f32 %v3892, %v4004
    %v4006 = vpop.f32.mrf.mxu0
    %v4007 = vadd.f32 %v3894, %v4006
    %v4008 = vpop.f32.mrf.mxu0
    %v4009 = vadd.f32 %v3896, %v4008
    %4010 = vmatprep.mubr.bf16.mxu0 %v1677
    %4011 = vmatmul.mubr.bf16.gmra.mxu0 %v1676
    %v4012 = vpop.f32.mrf.mxu0
    %v4013 = vadd.f32 %v3900, %v4012
    %v4014 = vpop.f32.mrf.mxu0
    %v4015 = vadd.f32 %v3902, %v4014
    %v4016 = vpop.f32.mrf.mxu0
    %v4017 = vadd.f32 %v3904, %v4016
    %v4018 = vpop.f32.mrf.mxu0
    %v4019 = vadd.f32 %v3906, %v4018
    %4020 = vmatprep.mubr.bf16.mxu0 %v1685
    %4021 = vmatmul.mubr.bf16.gmra.mxu0 %v1684
    %v4022 = vpop.f32.mrf.mxu0
    %v4023 = vadd.f32 %v3910, %v4022
    %v4024 = vpop.f32.mrf.mxu0
    %v4025 = vadd.f32 %v3912, %v4024
    %v4026 = vpop.f32.mrf.mxu0
    %v4027 = vadd.f32 %v3914, %v4026
    %v4028 = vpop.f32.mrf.mxu0
    %v4029 = vadd.f32 %v3916, %v4028
    %4030 = vmatprep.mubr.bf16.mxu0 %v1693
    %4031 = vmatmul.mubr.bf16.gmra.mxu0 %v1692
    %v4032 = vpop.f32.mrf.mxu0
    %v4033 = vadd.f32 %v3920, %v4032
    %v4034 = vpop.f32.mrf.mxu0
    %v4035 = vadd.f32 %v3922, %v4034
    %v4036 = vpop.f32.mrf.mxu0
    %v4037 = vadd.f32 %v3924, %v4036
    %v4038 = vpop.f32.mrf.mxu0
    %v4039 = vadd.f32 %v3926, %v4038
    %4040 = vmatprep.mubr.bf16.mxu0 %v1701
    %4041 = vmatmul.mubr.bf16.gmra.mxu0 %v1700
    %v4042 = vpop.f32.mrf.mxu0
    %v4043 = vadd.f32 %v3930, %v4042
    %v4044 = vpop.f32.mrf.mxu0
    %v4045 = vadd.f32 %v3932, %v4044
    %v4046 = vpop.f32.mrf.mxu0
    %v4047 = vadd.f32 %v3934, %v4046
    %v4048 = vpop.f32.mrf.mxu0
    %v4049 = vadd.f32 %v3936, %v4048
    %4050 = vmatprep.mubr.bf16.mxu0 %v1709
    %4051 = vmatmul.mubr.bf16.gmra.mxu0 %v1708
    %v4052 = vpop.f32.mrf.mxu0
    %v4053 = vadd.f32 %v3940, %v4052
    %v4054 = vpop.f32.mrf.mxu0
    %v4055 = vadd.f32 %v3942, %v4054
    %v4056 = vpop.f32.mrf.mxu0
    %v4057 = vadd.f32 %v3944, %v4056
    %v4058 = vpop.f32.mrf.mxu0
    %v4059 = vadd.f32 %v3946, %v4058
    %4060 = vdwg.mxu0
    %4061 = vmatprep.subr.bf16.mxu0 %v2981
    %4062 = vmatpush1.bf16.msra.mxu0 %v2980
    %4063 = vmatprep.subr.bf16.mxu0 %v2977
    %4064 = vmatpush1.bf16.msra.mxu0 %v2976
    %4065 = vmatprep.subr.bf16.mxu0 %v2973
    %4066 = vmatpush1.bf16.msra.mxu0 %v2972
    %4067 = vmatprep.subr.bf16.mxu0 %v2969
    %4068 = vmatpush1.bf16.msra.mxu0 %v2968
    %4069 = vmatprep.subr.bf16.mxu0 %v2965
    %4070 = vmatpush1.bf16.msra.mxu0 %v2964
    %4071 = vmatprep.subr.bf16.mxu0 %v2961
    %4072 = vmatpush1.bf16.msra.mxu0 %v2960
    %4073 = vmatprep.subr.bf16.mxu0 %v2957
    %4074 = vmatpush1.bf16.msra.mxu0 %v2956
    %4075 = vmatprep.subr.bf16.mxu0 %v2953
    %4076 = vmatpush1.bf16.msra.mxu0 %v2952
    %4077 = vmatprep.subr.bf16.mxu0 %v3013
    %4078 = vmatpush2.bf16.msra.mxu0 %v3012
    %4079 = vmatprep.subr.bf16.mxu0 %v3009
    %4080 = vmatpush2.bf16.msra.mxu0 %v3008
    %4081 = vmatprep.subr.bf16.mxu0 %v3005
    %4082 = vmatpush2.bf16.msra.mxu0 %v3004
    %4083 = vmatprep.subr.bf16.mxu0 %v3001
    %4084 = vmatpush2.bf16.msra.mxu0 %v3000
    %4085 = vmatprep.subr.bf16.mxu0 %v2997
    %4086 = vmatpush2.bf16.msra.mxu0 %v2996
    %4087 = vmatprep.subr.bf16.mxu0 %v2993
    %4088 = vmatpush2.bf16.msra.mxu0 %v2992
    %4089 = vmatprep.subr.bf16.mxu0 %v2989
    %4090 = vmatpush2.bf16.msra.mxu0 %v2988
    %4091 = vmatprep.subr.bf16.mxu0 %v2985
    %4092 = vmatpush2.bf16.msra.mxu0 %v2984
    %4093 = vmatprep.mubr.bf16.mxu0 %v1655
    %4094 = vmatmul.mubr.bf16.gmra.mxu0 %v1654
    %v4095 = vpop.f32.mrf.mxu0
    %v4096 = vadd.f32 %v3983, %v4095
    %v4097 = vpop.f32.mrf.mxu0
    %v4098 = vadd.f32 %v3985, %v4097
    %v4099 = vpop.f32.mrf.mxu0
    %v4100 = vadd.f32 %v3987, %v4099
    %v4101 = vpop.f32.mrf.mxu0
    %v4102 = vadd.f32 %v3989, %v4101
    %4103 = vmatprep.mubr.bf16.mxu0 %v1663
    %4104 = vmatmul.mubr.bf16.gmra.mxu0 %v1662
    %v4105 = vpop.f32.mrf.mxu0
    %v4106 = vadd.f32 %v3993, %v4105
    %v4107 = vpop.f32.mrf.mxu0
    %v4108 = vadd.f32 %v3995, %v4107
    %v4109 = vpop.f32.mrf.mxu0
    %v4110 = vadd.f32 %v3997, %v4109
    %v4111 = vpop.f32.mrf.mxu0
    %v4112 = vadd.f32 %v3999, %v4111
    %4113 = vmatprep.mubr.bf16.mxu0 %v1671
    %4114 = vmatmul.mubr.bf16.gmra.mxu0 %v1670
    %v4115 = vpop.f32.mrf.mxu0
    %v4116 = vadd.f32 %v4003, %v4115
    %v4117 = vpop.f32.mrf.mxu0
    %v4118 = vadd.f32 %v4005, %v4117
    %v4119 = vpop.f32.mrf.mxu0
    %v4120 = vadd.f32 %v4007, %v4119
    %v4121 = vpop.f32.mrf.mxu0
    %v4122 = vadd.f32 %v4009, %v4121
    %4123 = vmatprep.mubr.bf16.mxu0 %v1679
    %4124 = vmatmul.mubr.bf16.gmra.mxu0 %v1678
    %v4125 = vpop.f32.mrf.mxu0
    %v4126 = vadd.f32 %v4013, %v4125
    %v4127 = vpop.f32.mrf.mxu0
    %v4128 = vadd.f32 %v4015, %v4127
    %v4129 = vpop.f32.mrf.mxu0
    %v4130 = vadd.f32 %v4017, %v4129
    %v4131 = vpop.f32.mrf.mxu0
    %v4132 = vadd.f32 %v4019, %v4131
    %4133 = vmatprep.mubr.bf16.mxu0 %v1687
    %4134 = vmatmul.mubr.bf16.gmra.mxu0 %v1686
    %v4135 = vpop.f32.mrf.mxu0
    %v4136 = vadd.f32 %v4023, %v4135
    %v4137 = vpop.f32.mrf.mxu0
    %v4138 = vadd.f32 %v4025, %v4137
    %v4139 = vpop.f32.mrf.mxu0
    %v4140 = vadd.f32 %v4027, %v4139
    %v4141 = vpop.f32.mrf.mxu0
    %v4142 = vadd.f32 %v4029, %v4141
    %4143 = vmatprep.mubr.bf16.mxu0 %v1695
    %4144 = vmatmul.mubr.bf16.gmra.mxu0 %v1694
    %v4145 = vpop.f32.mrf.mxu0
    %v4146 = vadd.f32 %v4033, %v4145
    %v4147 = vpop.f32.mrf.mxu0
    %v4148 = vadd.f32 %v4035, %v4147
    %v4149 = vpop.f32.mrf.mxu0
    %v4150 = vadd.f32 %v4037, %v4149
    %v4151 = vpop.f32.mrf.mxu0
    %v4152 = vadd.f32 %v4039, %v4151
    %4153 = vmatprep.mubr.bf16.mxu0 %v1703
    %4154 = vmatmul.mubr.bf16.gmra.mxu0 %v1702
    %v4155 = vpop.f32.mrf.mxu0
    %v4156 = vadd.f32 %v4043, %v4155
    %v4157 = vpop.f32.mrf.mxu0
    %v4158 = vadd.f32 %v4045, %v4157
    %v4159 = vpop.f32.mrf.mxu0
    %v4160 = vadd.f32 %v4047, %v4159
    %v4161 = vpop.f32.mrf.mxu0
    %v4162 = vadd.f32 %v4049, %v4161
    %4163 = vmatprep.mubr.bf16.mxu0 %v1711
    %4164 = vmatmul.mubr.bf16.gmra.mxu0 %v1710
    %v4165 = vpop.f32.mrf.mxu0
    %v4166 = vadd.f32 %v4053, %v4165
    %v4167 = vpop.f32.mrf.mxu0
    %v4168 = vadd.f32 %v4055, %v4167
    %v4169 = vpop.f32.mrf.mxu0
    %v4170 = vadd.f32 %v4057, %v4169
    %v4171 = vpop.f32.mrf.mxu0
    %v4172 = vadd.f32 %v4059, %v4171
    %4173 = vdwg.mxu0
    %vm4174 = vcmp.ge.f32.partialorder %v3644, 0.0
    %vm4175 = vcmp.ge.f32.partialorder %v3646, 0.0
    %vm4176 = vcmp.ge.f32.partialorder %v4096, 0.0
    %vm4177 = vcmp.ge.f32.partialorder %v4098, 0.0
    %vm4178 = vcmp.ge.f32.partialorder %v3648, 0.0
    %vm4179 = vcmp.ge.f32.partialorder %v3650, 0.0
    %vm4180 = vcmp.ge.f32.partialorder %v4100, 0.0
    %vm4181 = vcmp.ge.f32.partialorder %v4102, 0.0
    %vm4182 = vcmp.ge.f32.partialorder %v3654, 0.0
    %vm4183 = vcmp.ge.f32.partialorder %v3656, 0.0
    %vm4184 = vcmp.ge.f32.partialorder %v4106, 0.0
    %vm4185 = vcmp.ge.f32.partialorder %v4108, 0.0
    %vm4186 = vcmp.ge.f32.partialorder %v3658, 0.0
    %vm4187 = vcmp.ge.f32.partialorder %v3660, 0.0
    %vm4188 = vcmp.ge.f32.partialorder %v4110, 0.0
    %vm4189 = vcmp.ge.f32.partialorder %v4112, 0.0
    %vm4190 = vcmp.ge.f32.partialorder %v3664, 0.0
    %vm4191 = vcmp.ge.f32.partialorder %v3666, 0.0
    %vm4192 = vcmp.ge.f32.partialorder %v4116, 0.0
    %vm4193 = vcmp.ge.f32.partialorder %v4118, 0.0
    %vm4194 = vcmp.ge.f32.partialorder %v3668, 0.0
    %vm4195 = vcmp.ge.f32.partialorder %v3670, 0.0
    %vm4196 = vcmp.ge.f32.partialorder %v4120, 0.0
    %vm4197 = vcmp.ge.f32.partialorder %v4122, 0.0
    %vm4198 = vcmp.ge.f32.partialorder %v3674, 0.0
    %vm4199 = vcmp.ge.f32.partialorder %v3676, 0.0
    %vm4200 = vcmp.ge.f32.partialorder %v4126, 0.0
    %vm4201 = vcmp.ge.f32.partialorder %v4128, 0.0
    %vm4202 = vcmp.ge.f32.partialorder %v3678, 0.0
    %vm4203 = vcmp.ge.f32.partialorder %v3680, 0.0
    %vm4204 = vcmp.ge.f32.partialorder %v4130, 0.0
    %vm4205 = vcmp.ge.f32.partialorder %v4132, 0.0
    %vm4206 = vcmp.ge.f32.partialorder %v3684, 0.0
    %vm4207 = vcmp.ge.f32.partialorder %v3686, 0.0
    %vm4208 = vcmp.ge.f32.partialorder %v4136, 0.0
    %vm4209 = vcmp.ge.f32.partialorder %v4138, 0.0
    %vm4210 = vcmp.ge.f32.partialorder %v3688, 0.0
    %vm4211 = vcmp.ge.f32.partialorder %v3690, 0.0
    %vm4212 = vcmp.ge.f32.partialorder %v4140, 0.0
    %vm4213 = vcmp.ge.f32.partialorder %v4142, 0.0
    %vm4214 = vcmp.ge.f32.partialorder %v3694, 0.0
    %vm4215 = vcmp.ge.f32.partialorder %v3696, 0.0
    %vm4216 = vcmp.ge.f32.partialorder %v4146, 0.0
    %vm4217 = vcmp.ge.f32.partialorder %v4148, 0.0
    %vm4218 = vcmp.ge.f32.partialorder %v3698, 0.0
    %vm4219 = vcmp.ge.f32.partialorder %v3700, 0.0
    %vm4220 = vcmp.ge.f32.partialorder %v4150, 0.0
    %vm4221 = vcmp.ge.f32.partialorder %v4152, 0.0
    %vm4222 = vcmp.ge.f32.partialorder %v3704, 0.0
    %vm4223 = vcmp.ge.f32.partialorder %v3706, 0.0
    %vm4224 = vcmp.ge.f32.partialorder %v4156, 0.0
    %vm4225 = vcmp.ge.f32.partialorder %v4158, 0.0
    %vm4226 = vcmp.ge.f32.partialorder %v3708, 0.0
    %vm4227 = vcmp.ge.f32.partialorder %v3710, 0.0
    %vm4228 = vcmp.ge.f32.partialorder %v4160, 0.0
    %vm4229 = vcmp.ge.f32.partialorder %v4162, 0.0
    %vm4230 = vcmp.ge.f32.partialorder %v3714, 0.0
    %vm4231 = vcmp.ge.f32.partialorder %v3716, 0.0
    %vm4232 = vcmp.ge.f32.partialorder %v4166, 0.0
    %vm4233 = vcmp.ge.f32.partialorder %v4168, 0.0
    %vm4234 = vcmp.ge.f32.partialorder %v3718, 0.0
    %vm4235 = vcmp.ge.f32.partialorder %v3720, 0.0
    %vm4236 = vcmp.ge.f32.partialorder %v4170, 0.0
    %vm4237 = vcmp.ge.f32.partialorder %v4172, 0.0
    %v4238 = vmul.f32 %v3644, 0.2
    %v4239 = vmul.f32 %v3646, 0.2
    %v4240 = vmul.f32 %v4096, 0.2
    %v4241 = vmul.f32 %v4098, 0.2
    %v4242 = vmul.f32 %v3648, 0.2
    %v4243 = vmul.f32 %v3650, 0.2
    %v4244 = vmul.f32 %v4100, 0.2
    %v4245 = vmul.f32 %v4102, 0.2
    %v4246 = vmul.f32 %v3654, 0.2
    %v4247 = vmul.f32 %v3656, 0.2
    %v4248 = vmul.f32 %v4106, 0.2
    %v4249 = vmul.f32 %v4108, 0.2
    %v4250 = vmul.f32 %v3658, 0.2
    %v4251 = vmul.f32 %v3660, 0.2
    %v4252 = vmul.f32 %v4110, 0.2
    %v4253 = vmul.f32 %v4112, 0.2
    %v4254 = vmul.f32 %v3664, 0.2
    %v4255 = vmul.f32 %v3666, 0.2
    %v4256 = vmul.f32 %v4116, 0.2
    %v4257 = vmul.f32 %v4118, 0.2
    %v4258 = vmul.f32 %v3668, 0.2
    %v4259 = vmul.f32 %v3670, 0.2
    %v4260 = vmul.f32 %v4120, 0.2
    %v4261 = vmul.f32 %v4122, 0.2
    %v4262 = vmul.f32 %v3674, 0.2
    %v4263 = vmul.f32 %v3676, 0.2
    %v4264 = vmul.f32 %v4126, 0.2
    %v4265 = vmul.f32 %v4128, 0.2
    %v4266 = vmul.f32 %v3678, 0.2
    %v4267 = vmul.f32 %v3680, 0.2
    %v4268 = vmul.f32 %v4130, 0.2
    %v4269 = vmul.f32 %v4132, 0.2
    %v4270 = vmul.f32 %v3684, 0.2
    %v4271 = vmul.f32 %v3686, 0.2
    %v4272 = vmul.f32 %v4136, 0.2
    %v4273 = vmul.f32 %v4138, 0.2
    %v4274 = vmul.f32 %v3688, 0.2
    %v4275 = vmul.f32 %v3690, 0.2
    %v4276 = vmul.f32 %v4140, 0.2
    %v4277 = vmul.f32 %v4142, 0.2
    %v4278 = vmul.f32 %v3694, 0.2
    %v4279 = vmul.f32 %v3696, 0.2
    %v4280 = vmul.f32 %v4146, 0.2
    %v4281 = vmul.f32 %v4148, 0.2
    %v4282 = vmul.f32 %v3698, 0.2
    %v4283 = vmul.f32 %v3700, 0.2
    %v4284 = vmul.f32 %v4150, 0.2
    %v4285 = vmul.f32 %v4152, 0.2
    %v4286 = vmul.f32 %v3704, 0.2
    %v4287 = vmul.f32 %v3706, 0.2
    %v4288 = vmul.f32 %v4156, 0.2
    %v4289 = vmul.f32 %v4158, 0.2
    %v4290 = vmul.f32 %v3708, 0.2
    %v4291 = vmul.f32 %v3710, 0.2
    %v4292 = vmul.f32 %v4160, 0.2
    %v4293 = vmul.f32 %v4162, 0.2
    %v4294 = vmul.f32 %v3714, 0.2
    %v4295 = vmul.f32 %v3716, 0.2
    %v4296 = vmul.f32 %v4166, 0.2
    %v4297 = vmul.f32 %v4168, 0.2
    %v4298 = vmul.f32 %v3718, 0.2
    %v4299 = vmul.f32 %v3720, 0.2
    %v4300 = vmul.f32 %v4170, 0.2
    %v4301 = vmul.f32 %v4172, 0.2
    %v4302 = vsel %vm4174, %v3644, %v4238
    %v4303 = vsel %vm4175, %v3646, %v4239
    %v4304 = vsel %vm4176, %v4096, %v4240
    %v4305 = vsel %vm4177, %v4098, %v4241
    %v4306 = vsel %vm4178, %v3648, %v4242
    %v4307 = vsel %vm4179, %v3650, %v4243
    %v4308 = vsel %vm4180, %v4100, %v4244
    %v4309 = vsel %vm4181, %v4102, %v4245
    %v4310 = vsel %vm4182, %v3654, %v4246
    %v4311 = vsel %vm4183, %v3656, %v4247
    %v4312 = vsel %vm4184, %v4106, %v4248
    %v4313 = vsel %vm4185, %v4108, %v4249
    %v4314 = vsel %vm4186, %v3658, %v4250
    %v4315 = vsel %vm4187, %v3660, %v4251
    %v4316 = vsel %vm4188, %v4110, %v4252
    %v4317 = vsel %vm4189, %v4112, %v4253
    %v4318 = vsel %vm4190, %v3664, %v4254
    %v4319 = vsel %vm4191, %v3666, %v4255
    %v4320 = vsel %vm4192, %v4116, %v4256
    %v4321 = vsel %vm4193, %v4118, %v4257
    %v4322 = vsel %vm4194, %v3668, %v4258
    %v4323 = vsel %vm4195, %v3670, %v4259
    %v4324 = vsel %vm4196, %v4120, %v4260
    %v4325 = vsel %vm4197, %v4122, %v4261
    %v4326 = vsel %vm4198, %v3674, %v4262
    %v4327 = vsel %vm4199, %v3676, %v4263
    %v4328 = vsel %vm4200, %v4126, %v4264
    %v4329 = vsel %vm4201, %v4128, %v4265
    %v4330 = vsel %vm4202, %v3678, %v4266
    %v4331 = vsel %vm4203, %v3680, %v4267
    %v4332 = vsel %vm4204, %v4130, %v4268
    %v4333 = vsel %vm4205, %v4132, %v4269
    %v4334 = vsel %vm4206, %v3684, %v4270
    %v4335 = vsel %vm4207, %v3686, %v4271
    %v4336 = vsel %vm4208, %v4136, %v4272
    %v4337 = vsel %vm4209, %v4138, %v4273
    %v4338 = vsel %vm4210, %v3688, %v4274
    %v4339 = vsel %vm4211, %v3690, %v4275
    %v4340 = vsel %vm4212, %v4140, %v4276
    %v4341 = vsel %vm4213, %v4142, %v4277
    %v4342 = vsel %vm4214, %v3694, %v4278
    %v4343 = vsel %vm4215, %v3696, %v4279
    %v4344 = vsel %vm4216, %v4146, %v4280
    %v4345 = vsel %vm4217, %v4148, %v4281
    %v4346 = vsel %vm4218, %v3698, %v4282
    %v4347 = vsel %vm4219, %v3700, %v4283
    %v4348 = vsel %vm4220, %v4150, %v4284
    %v4349 = vsel %vm4221, %v4152, %v4285
    %v4350 = vsel %vm4222, %v3704, %v4286
    %v4351 = vsel %vm4223, %v3706, %v4287
    %v4352 = vsel %vm4224, %v4156, %v4288
    %v4353 = vsel %vm4225, %v4158, %v4289
    %v4354 = vsel %vm4226, %v3708, %v4290
    %v4355 = vsel %vm4227, %v3710, %v4291
    %v4356 = vsel %vm4228, %v4160, %v4292
    %v4357 = vsel %vm4229, %v4162, %v4293
    %v4358 = vsel %vm4230, %v3714, %v4294
    %v4359 = vsel %vm4231, %v3716, %v4295
    %v4360 = vsel %vm4232, %v4166, %v4296
    %v4361 = vsel %vm4233, %v4168, %v4297
    %v4362 = vsel %vm4234, %v3718, %v4298
    %v4363 = vsel %vm4235, %v3720, %v4299
    %v4364 = vsel %vm4236, %v4170, %v4300
    %v4365 = vsel %vm4237, %v4172, %v4301
    %v4366 = vld [vmem:[%s2] sm:$0xff]
    %v4367 = vld [vmem:[%s2 + $0x8] sm:$0xff]
    %v4368 = vld [vmem:[%s2 + $0x10] sm:$0xff]
    %v4369 = vld [vmem:[%s2 + $0x18] sm:$0xff]
    %v4370 = vld [vmem:[%s2 + $0x20] sm:$0xff]
    %v4371 = vld [vmem:[%s2 + $0x28] sm:$0xff]
    %v4372 = vld [vmem:[%s2 + $0x30] sm:$0xff]
    %v4373 = vld [vmem:[%s2 + $0x38] sm:$0xff]
    %v4374 = vld [vmem:[%s2 + $0x40] sm:$0xff]
    %v4375 = vld [vmem:[%s2 + $0x48] sm:$0xff]
    %v4376 = vld [vmem:[%s2 + $0x50] sm:$0xff]
    %v4377 = vld [vmem:[%s2 + $0x58] sm:$0xff]
    %v4378 = vld [vmem:[%s2 + $0x60] sm:$0xff]
    %v4379 = vld [vmem:[%s2 + $0x68] sm:$0xff]
    %v4380 = vld [vmem:[%s2 + $0x70] sm:$0xff]
    %v4381 = vld [vmem:[%s2 + $0x78] sm:$0xff]
    %v4382 = vld [vmem:[%s2 + $0x80] sm:$0xff]
    %v4383 = vld [vmem:[%s2 + $0x88] sm:$0xff]
    %v4384 = vld [vmem:[%s2 + $0x90] sm:$0xff]
    %v4385 = vld [vmem:[%s2 + $0x98] sm:$0xff]
    %v4386 = vld [vmem:[%s2 + $0xa0] sm:$0xff]
    %v4387 = vld [vmem:[%s2 + $0xa8] sm:$0xff]
    %v4388 = vld [vmem:[%s2 + $0xb0] sm:$0xff]
    %v4389 = vld [vmem:[%s2 + $0xb8] sm:$0xff]
    %v4390 = vld [vmem:[%s2 + $0xc0] sm:$0xff]
    %v4391 = vld [vmem:[%s2 + $0xc8] sm:$0xff]
    %v4392 = vld [vmem:[%s2 + $0xd0] sm:$0xff]
    %v4393 = vld [vmem:[%s2 + $0xd8] sm:$0xff]
    %v4394 = vld [vmem:[%s2 + $0xe0] sm:$0xff]
    %v4395 = vld [vmem:[%s2 + $0xe8] sm:$0xff]
    %v4396 = vld [vmem:[%s2 + $0xf0] sm:$0xff]
    %v4397 = vld [vmem:[%s2 + $0xf8] sm:$0xff]
    %v4398 = vld [vmem:[%s2 + $0x100] sm:$0xff]
    %v4399 = vld [vmem:[%s2 + $0x108] sm:$0xff]
    %v4400 = vld [vmem:[%s2 + $0x110] sm:$0xff]
    %v4401 = vld [vmem:[%s2 + $0x118] sm:$0xff]
    %v4402 = vld [vmem:[%s2 + $0x120] sm:$0xff]
    %v4403 = vld [vmem:[%s2 + $0x128] sm:$0xff]
    %v4404 = vld [vmem:[%s2 + $0x130] sm:$0xff]
    %v4405 = vld [vmem:[%s2 + $0x138] sm:$0xff]
    %v4406 = vld [vmem:[%s2 + $0x140] sm:$0xff]
    %v4407 = vld [vmem:[%s2 + $0x148] sm:$0xff]
    %v4408 = vld [vmem:[%s2 + $0x150] sm:$0xff]
    %v4409 = vld [vmem:[%s2 + $0x158] sm:$0xff]
    %v4410 = vld [vmem:[%s2 + $0x160] sm:$0xff]
    %v4411 = vld [vmem:[%s2 + $0x168] sm:$0xff]
    %v4412 = vld [vmem:[%s2 + $0x170] sm:$0xff]
    %v4413 = vld [vmem:[%s2 + $0x178] sm:$0xff]
    %v4414 = vld [vmem:[%s2 + $0x180] sm:$0xff]
    %v4415 = vld [vmem:[%s2 + $0x188] sm:$0xff]
    %v4416 = vld [vmem:[%s2 + $0x190] sm:$0xff]
    %v4417 = vld [vmem:[%s2 + $0x198] sm:$0xff]
    %v4418 = vld [vmem:[%s2 + $0x1a0] sm:$0xff]
    %v4419 = vld [vmem:[%s2 + $0x1a8] sm:$0xff]
    %v4420 = vld [vmem:[%s2 + $0x1b0] sm:$0xff]
    %v4421 = vld [vmem:[%s2 + $0x1b8] sm:$0xff]
    %v4422 = vld [vmem:[%s2 + $0x1c0] sm:$0xff]
    %v4423 = vld [vmem:[%s2 + $0x1c8] sm:$0xff]
    %v4424 = vld [vmem:[%s2 + $0x1d0] sm:$0xff]
    %v4425 = vld [vmem:[%s2 + $0x1d8] sm:$0xff]
    %v4426 = vld [vmem:[%s2 + $0x1e0] sm:$0xff]
    %v4427 = vld [vmem:[%s2 + $0x1e8] sm:$0xff]
    %v4428 = vld [vmem:[%s2 + $0x1f0] sm:$0xff]
    %v4429 = vld [vmem:[%s2 + $0x1f8] sm:$0xff]
    %v4430 = vmul.f32 %v4302, %v4366
    %v4431 = vmul.f32 %v4303, %v4367
    %v4432 = vmul.f32 %v4304, %v4368
    %v4433 = vmul.f32 %v4305, %v4369
    %v4434 = vmul.f32 %v4306, %v4370
    %v4435 = vmul.f32 %v4307, %v4371
    %v4436 = vmul.f32 %v4308, %v4372
    %v4437 = vmul.f32 %v4309, %v4373
    %v4438 = vmul.f32 %v4310, %v4374
    %v4439 = vmul.f32 %v4311, %v4375
    %v4440 = vmul.f32 %v4312, %v4376
    %v4441 = vmul.f32 %v4313, %v4377
    %v4442 = vmul.f32 %v4314, %v4378
    %v4443 = vmul.f32 %v4315, %v4379
    %v4444 = vmul.f32 %v4316, %v4380
    %v4445 = vmul.f32 %v4317, %v4381
    %v4446 = vmul.f32 %v4318, %v4382
    %v4447 = vmul.f32 %v4319, %v4383
    %v4448 = vmul.f32 %v4320, %v4384
    %v4449 = vmul.f32 %v4321, %v4385
    %v4450 = vmul.f32 %v4322, %v4386
    %v4451 = vmul.f32 %v4323, %v4387
    %v4452 = vmul.f32 %v4324, %v4388
    %v4453 = vmul.f32 %v4325, %v4389
    %v4454 = vmul.f32 %v4326, %v4390
    %v4455 = vmul.f32 %v4327, %v4391
    %v4456 = vmul.f32 %v4328, %v4392
    %v4457 = vmul.f32 %v4329, %v4393
    %v4458 = vmul.f32 %v4330, %v4394
    %v4459 = vmul.f32 %v4331, %v4395
    %v4460 = vmul.f32 %v4332, %v4396
    %v4461 = vmul.f32 %v4333, %v4397
    %v4462 = vmul.f32 %v4334, %v4398
    %v4463 = vmul.f32 %v4335, %v4399
    %v4464 = vmul.f32 %v4336, %v4400
    %v4465 = vmul.f32 %v4337, %v4401
    %v4466 = vmul.f32 %v4338, %v4402
    %v4467 = vmul.f32 %v4339, %v4403
    %v4468 = vmul.f32 %v4340, %v4404
    %v4469 = vmul.f32 %v4341, %v4405
    %v4470 = vmul.f32 %v4342, %v4406
    %v4471 = vmul.f32 %v4343, %v4407
    %v4472 = vmul.f32 %v4344, %v4408
    %v4473 = vmul.f32 %v4345, %v4409
    %v4474 = vmul.f32 %v4346, %v4410
    %v4475 = vmul.f32 %v4347, %v4411
    %v4476 = vmul.f32 %v4348, %v4412
    %v4477 = vmul.f32 %v4349, %v4413
    %v4478 = vmul.f32 %v4350, %v4414
    %v4479 = vmul.f32 %v4351, %v4415
    %v4480 = vmul.f32 %v4352, %v4416
    %v4481 = vmul.f32 %v4353, %v4417
    %v4482 = vmul.f32 %v4354, %v4418
    %v4483 = vmul.f32 %v4355, %v4419
    %v4484 = vmul.f32 %v4356, %v4420
    %v4485 = vmul.f32 %v4357, %v4421
    %v4486 = vmul.f32 %v4358, %v4422
    %v4487 = vmul.f32 %v4359, %v4423
    %v4488 = vmul.f32 %v4360, %v4424
    %v4489 = vmul.f32 %v4361, %v4425
    %v4490 = vmul.f32 %v4362, %v4426
    %v4491 = vmul.f32 %v4363, %v4427
    %v4492 = vmul.f32 %v4364, %v4428
    %v4493 = vmul.f32 %v4365, %v4429
    %v4494 = vpack.c.bf16 %v4434, %v4430
    %v4495 = vpack.c.bf16 %v4435, %v4431
    %v4496 = vpack.c.bf16 %v4436, %v4432
    %v4497 = vpack.c.bf16 %v4437, %v4433
    %v4498 = vpack.c.bf16 %v4442, %v4438
    %v4499 = vpack.c.bf16 %v4443, %v4439
    %v4500 = vpack.c.bf16 %v4444, %v4440
    %v4501 = vpack.c.bf16 %v4445, %v4441
    %v4502 = vpack.c.bf16 %v4450, %v4446
    %v4503 = vpack.c.bf16 %v4451, %v4447
    %v4504 = vpack.c.bf16 %v4452, %v4448
    %v4505 = vpack.c.bf16 %v4453, %v4449
    %v4506 = vpack.c.bf16 %v4458, %v4454
    %v4507 = vpack.c.bf16 %v4459, %v4455
    %v4508 = vpack.c.bf16 %v4460, %v4456
    %v4509 = vpack.c.bf16 %v4461, %v4457
    %v4510 = vpack.c.bf16 %v4466, %v4462
    %v4511 = vpack.c.bf16 %v4467, %v4463
    %v4512 = vpack.c.bf16 %v4468, %v4464
    %v4513 = vpack.c.bf16 %v4469, %v4465
    %v4514 = vpack.c.bf16 %v4474, %v4470
    %v4515 = vpack.c.bf16 %v4475, %v4471
    %v4516 = vpack.c.bf16 %v4476, %v4472
    %v4517 = vpack.c.bf16 %v4477, %v4473
    %v4518 = vpack.c.bf16 %v4482, %v4478
    %v4519 = vpack.c.bf16 %v4483, %v4479
    %v4520 = vpack.c.bf16 %v4484, %v4480
    %v4521 = vpack.c.bf16 %v4485, %v4481
    %v4522 = vpack.c.bf16 %v4490, %v4486
    %v4523 = vpack.c.bf16 %v4491, %v4487
    %v4524 = vpack.c.bf16 %v4492, %v4488
    %v4525 = vpack.c.bf16 %v4493, %v4489
    %v4526 = vld [vmem:[#allocation7] sm:$0xff]
    %v4527 = vld [vmem:[#allocation7 + $0x8] sm:$0xff]
    %v4528 = vld [vmem:[#allocation7 + $0x10] sm:$0xff]
    %v4529 = vld [vmem:[#allocation7 + $0x18] sm:$0xff]
    %v4530 = vld [vmem:[#allocation7 + $0x20] sm:$0xff]
    %v4531 = vld [vmem:[#allocation7 + $0x28] sm:$0xff]
    %v4532 = vld [vmem:[#allocation7 + $0x30] sm:$0xff]
    %v4533 = vld [vmem:[#allocation7 + $0x38] sm:$0xff]
    %v4534 = vld [vmem:[#allocation7 + $0x40] sm:$0xff]
    %v4535 = vld [vmem:[#allocation7 + $0x48] sm:$0xff]
    %v4536 = vld [vmem:[#allocation7 + $0x50] sm:$0xff]
    %v4537 = vld [vmem:[#allocation7 + $0x58] sm:$0xff]
    %v4538 = vld [vmem:[#allocation7 + $0x60] sm:$0xff]
    %v4539 = vld [vmem:[#allocation7 + $0x68] sm:$0xff]
    %v4540 = vld [vmem:[#allocation7 + $0x70] sm:$0xff]
    %v4541 = vld [vmem:[#allocation7 + $0x78] sm:$0xff]
    %v4542 = vld [vmem:[#allocation7 + $0x80] sm:$0xff]
    %v4543 = vld [vmem:[#allocation7 + $0x88] sm:$0xff]
    %v4544 = vld [vmem:[#allocation7 + $0x90] sm:$0xff]
    %v4545 = vld [vmem:[#allocation7 + $0x98] sm:$0xff]
    %v4546 = vld [vmem:[#allocation7 + $0xa0] sm:$0xff]
    %v4547 = vld [vmem:[#allocation7 + $0xa8] sm:$0xff]
    %v4548 = vld [vmem:[#allocation7 + $0xb0] sm:$0xff]
    %v4549 = vld [vmem:[#allocation7 + $0xb8] sm:$0xff]
    %v4550 = vld [vmem:[#allocation7 + $0xc0] sm:$0xff]
    %v4551 = vld [vmem:[#allocation7 + $0xc8] sm:$0xff]
    %v4552 = vld [vmem:[#allocation7 + $0xd0] sm:$0xff]
    %v4553 = vld [vmem:[#allocation7 + $0xd8] sm:$0xff]
    %v4554 = vld [vmem:[#allocation7 + $0xe0] sm:$0xff]
    %v4555 = vld [vmem:[#allocation7 + $0xe8] sm:$0xff]
    %v4556 = vld [vmem:[#allocation7 + $0xf0] sm:$0xff]
    %v4557 = vld [vmem:[#allocation7 + $0xf8] sm:$0xff]
    %v4558 = vld [vmem:[#allocation7 + $0x100] sm:$0xff]
    %v4559 = vld [vmem:[#allocation7 + $0x108] sm:$0xff]
    %v4560 = vld [vmem:[#allocation7 + $0x110] sm:$0xff]
    %v4561 = vld [vmem:[#allocation7 + $0x118] sm:$0xff]
    %v4562 = vld [vmem:[#allocation7 + $0x120] sm:$0xff]
    %v4563 = vld [vmem:[#allocation7 + $0x128] sm:$0xff]
    %v4564 = vld [vmem:[#allocation7 + $0x130] sm:$0xff]
    %v4565 = vld [vmem:[#allocation7 + $0x138] sm:$0xff]
    %v4566 = vld [vmem:[#allocation7 + $0x140] sm:$0xff]
    %v4567 = vld [vmem:[#allocation7 + $0x148] sm:$0xff]
    %v4568 = vld [vmem:[#allocation7 + $0x150] sm:$0xff]
    %v4569 = vld [vmem:[#allocation7 + $0x158] sm:$0xff]
    %v4570 = vld [vmem:[#allocation7 + $0x160] sm:$0xff]
    %v4571 = vld [vmem:[#allocation7 + $0x168] sm:$0xff]
    %v4572 = vld [vmem:[#allocation7 + $0x170] sm:$0xff]
    %v4573 = vld [vmem:[#allocation7 + $0x178] sm:$0xff]
    %v4574 = vld [vmem:[#allocation7 + $0x180] sm:$0xff]
    %v4575 = vld [vmem:[#allocation7 + $0x188] sm:$0xff]
    %v4576 = vld [vmem:[#allocation7 + $0x190] sm:$0xff]
    %v4577 = vld [vmem:[#allocation7 + $0x198] sm:$0xff]
    %v4578 = vld [vmem:[#allocation7 + $0x1a0] sm:$0xff]
    %v4579 = vld [vmem:[#allocation7 + $0x1a8] sm:$0xff]
    %v4580 = vld [vmem:[#allocation7 + $0x1b0] sm:$0xff]
    %v4581 = vld [vmem:[#allocation7 + $0x1b8] sm:$0xff]
    %v4582 = vld [vmem:[#allocation7 + $0x1c0] sm:$0xff]
    %v4583 = vld [vmem:[#allocation7 + $0x1c8] sm:$0xff]
    %v4584 = vld [vmem:[#allocation7 + $0x1d0] sm:$0xff]
    %v4585 = vld [vmem:[#allocation7 + $0x1d8] sm:$0xff]
    %v4586 = vld [vmem:[#allocation7 + $0x1e0] sm:$0xff]
    %v4587 = vld [vmem:[#allocation7 + $0x1e8] sm:$0xff]
    %v4588 = vld [vmem:[#allocation7 + $0x1f0] sm:$0xff]
    %v4589 = vld [vmem:[#allocation7 + $0x1f8] sm:$0xff]
    %v4590 = vld [vmem:[#allocation8] sm:$0x3]
    %v4592 = vlaneseq
    %v4593 = vshrl.u32 %v4592, 7
    %v4594 = vsub.s32 0, %v4593
    %v4595 = vrot.slane %v4590, %v4594
    %v4596 = vlaneseq
    %v4597 = vshrl.u32 %v4596, 7
    %v4598 = vsub.s32 1, %v4597
    %v4599 = vrot.slane %v4590, %v4598
    %v4666 = vunpack.c.l.b16 %v4526
    %v4667 = vunpack.c.h.b16 %v4526
    %v4668 = vunpack.c.l.b16 %v4527
    %v4669 = vunpack.c.h.b16 %v4527
    %v4670 = vunpack.c.l.b16 %v4528
    %v4671 = vunpack.c.h.b16 %v4528
    %v4672 = vunpack.c.l.b16 %v4529
    %v4673 = vunpack.c.h.b16 %v4529
    %v4674 = vunpack.c.l.b16 %v4530
    %v4675 = vunpack.c.h.b16 %v4530
    %v4676 = vunpack.c.l.b16 %v4531
    %v4677 = vunpack.c.h.b16 %v4531
    %v4678 = vunpack.c.l.b16 %v4532
    %v4679 = vunpack.c.h.b16 %v4532
    %v4680 = vunpack.c.l.b16 %v4533
    %v4681 = vunpack.c.h.b16 %v4533
    %v4682 = vunpack.c.l.b16 %v4534
    %v4683 = vunpack.c.h.b16 %v4534
    %v4684 = vunpack.c.l.b16 %v4535
    %v4685 = vunpack.c.h.b16 %v4535
    %v4686 = vunpack.c.l.b16 %v4536
    %v4687 = vunpack.c.h.b16 %v4536
    %v4688 = vunpack.c.l.b16 %v4537
    %v4689 = vunpack.c.h.b16 %v4537
    %v4690 = vunpack.c.l.b16 %v4538
    %v4691 = vunpack.c.h.b16 %v4538
    %v4692 = vunpack.c.l.b16 %v4539
    %v4693 = vunpack.c.h.b16 %v4539
    %v4694 = vunpack.c.l.b16 %v4540
    %v4695 = vunpack.c.h.b16 %v4540
    %v4696 = vunpack.c.l.b16 %v4541
    %v4697 = vunpack.c.h.b16 %v4541
    %v4698 = vunpack.c.l.b16 %v4542
    %v4699 = vunpack.c.h.b16 %v4542
    %v4700 = vunpack.c.l.b16 %v4543
    %v4701 = vunpack.c.h.b16 %v4543
    %v4702 = vunpack.c.l.b16 %v4544
    %v4703 = vunpack.c.h.b16 %v4544
    %v4704 = vunpack.c.l.b16 %v4545
    %v4705 = vunpack.c.h.b16 %v4545
    %v4706 = vunpack.c.l.b16 %v4546
    %v4707 = vunpack.c.h.b16 %v4546
    %v4708 = vunpack.c.l.b16 %v4547
    %v4709 = vunpack.c.h.b16 %v4547
    %v4710 = vunpack.c.l.b16 %v4548
    %v4711 = vunpack.c.h.b16 %v4548
    %v4712 = vunpack.c.l.b16 %v4549
    %v4713 = vunpack.c.h.b16 %v4549
    %v4714 = vunpack.c.l.b16 %v4550
    %v4715 = vunpack.c.h.b16 %v4550
    %v4716 = vunpack.c.l.b16 %v4551
    %v4717 = vunpack.c.h.b16 %v4551
    %v4718 = vunpack.c.l.b16 %v4552
    %v4719 = vunpack.c.h.b16 %v4552
    %v4720 = vunpack.c.l.b16 %v4553
    %v4721 = vunpack.c.h.b16 %v4553
    %v4722 = vunpack.c.l.b16 %v4554
    %v4723 = vunpack.c.h.b16 %v4554
    %v4724 = vunpack.c.l.b16 %v4555
    %v4725 = vunpack.c.h.b16 %v4555
    %v4726 = vunpack.c.l.b16 %v4556
    %v4727 = vunpack.c.h.b16 %v4556
    %v4728 = vunpack.c.l.b16 %v4557
    %v4729 = vunpack.c.h.b16 %v4557
    %v4730 = vunpack.c.l.b16 %v4558
    %v4731 = vunpack.c.h.b16 %v4558
    %v4732 = vunpack.c.l.b16 %v4559
    %v4733 = vunpack.c.h.b16 %v4559
    %v4734 = vunpack.c.l.b16 %v4560
    %v4735 = vunpack.c.h.b16 %v4560
    %v4736 = vunpack.c.l.b16 %v4561
    %v4737 = vunpack.c.h.b16 %v4561
    %v4738 = vunpack.c.l.b16 %v4562
    %v4739 = vunpack.c.h.b16 %v4562
    %v4740 = vunpack.c.l.b16 %v4563
    %v4741 = vunpack.c.h.b16 %v4563
    %v4742 = vunpack.c.l.b16 %v4564
    %v4743 = vunpack.c.h.b16 %v4564
    %v4744 = vunpack.c.l.b16 %v4565
    %v4745 = vunpack.c.h.b16 %v4565
    %v4746 = vunpack.c.l.b16 %v4566
    %v4747 = vunpack.c.h.b16 %v4566
    %v4748 = vunpack.c.l.b16 %v4567
    %v4749 = vunpack.c.h.b16 %v4567
    %v4750 = vunpack.c.l.b16 %v4568
    %v4751 = vunpack.c.h.b16 %v4568
    %v4752 = vunpack.c.l.b16 %v4569
    %v4753 = vunpack.c.h.b16 %v4569
    %v4754 = vunpack.c.l.b16 %v4570
    %v4755 = vunpack.c.h.b16 %v4570
    %v4756 = vunpack.c.l.b16 %v4571
    %v4757 = vunpack.c.h.b16 %v4571
    %v4758 = vunpack.c.l.b16 %v4572
    %v4759 = vunpack.c.h.b16 %v4572
    %v4760 = vunpack.c.l.b16 %v4573
    %v4761 = vunpack.c.h.b16 %v4573
    %v4762 = vunpack.c.l.b16 %v4574
    %v4763 = vunpack.c.h.b16 %v4574
    %v4764 = vunpack.c.l.b16 %v4575
    %v4765 = vunpack.c.h.b16 %v4575
    %v4766 = vunpack.c.l.b16 %v4576
    %v4767 = vunpack.c.h.b16 %v4576
    %v4768 = vunpack.c.l.b16 %v4577
    %v4769 = vunpack.c.h.b16 %v4577
    %v4770 = vunpack.c.l.b16 %v4578
    %v4771 = vunpack.c.h.b16 %v4578
    %v4772 = vunpack.c.l.b16 %v4579
    %v4773 = vunpack.c.h.b16 %v4579
    %v4774 = vunpack.c.l.b16 %v4580
    %v4775 = vunpack.c.h.b16 %v4580
    %v4776 = vunpack.c.l.b16 %v4581
    %v4777 = vunpack.c.h.b16 %v4581
    %v4778 = vunpack.c.l.b16 %v4582
    %v4779 = vunpack.c.h.b16 %v4582
    %v4780 = vunpack.c.l.b16 %v4583
    %v4781 = vunpack.c.h.b16 %v4583
    %v4782 = vunpack.c.l.b16 %v4584
    %v4783 = vunpack.c.h.b16 %v4584
    %v4784 = vunpack.c.l.b16 %v4585
    %v4785 = vunpack.c.h.b16 %v4585
    %v4786 = vunpack.c.l.b16 %v4586
    %v4787 = vunpack.c.h.b16 %v4586
    %v4788 = vunpack.c.l.b16 %v4587
    %v4789 = vunpack.c.h.b16 %v4587
    %v4790 = vunpack.c.l.b16 %v4588
    %v4791 = vunpack.c.h.b16 %v4588
    %v4792 = vunpack.c.l.b16 %v4589
    %v4793 = vunpack.c.h.b16 %v4589
    %v4794 = vpack.c.b16 %v4668, %v4666
    %v4795 = vpack.c.b16 %v4669, %v4667
    %v4796 = vpack.c.b16 %v4672, %v4670
    %v4797 = vpack.c.b16 %v4673, %v4671
    %v4798 = vpack.c.b16 %v4676, %v4674
    %v4799 = vpack.c.b16 %v4677, %v4675
    %v4800 = vpack.c.b16 %v4680, %v4678
    %v4801 = vpack.c.b16 %v4681, %v4679
    %v4802 = vpack.c.b16 %v4684, %v4682
    %v4803 = vpack.c.b16 %v4685, %v4683
    %v4804 = vpack.c.b16 %v4688, %v4686
    %v4805 = vpack.c.b16 %v4689, %v4687
    %v4806 = vpack.c.b16 %v4692, %v4690
    %v4807 = vpack.c.b16 %v4693, %v4691
    %v4808 = vpack.c.b16 %v4696, %v4694
    %v4809 = vpack.c.b16 %v4697, %v4695
    %v4810 = vpack.c.b16 %v4700, %v4698
    %v4811 = vpack.c.b16 %v4701, %v4699
    %v4812 = vpack.c.b16 %v4704, %v4702
    %v4813 = vpack.c.b16 %v4705, %v4703
    %v4814 = vpack.c.b16 %v4708, %v4706
    %v4815 = vpack.c.b16 %v4709, %v4707
    %v4816 = vpack.c.b16 %v4712, %v4710
    %v4817 = vpack.c.b16 %v4713, %v4711
    %v4818 = vpack.c.b16 %v4716, %v4714
    %v4819 = vpack.c.b16 %v4717, %v4715
    %v4820 = vpack.c.b16 %v4720, %v4718
    %v4821 = vpack.c.b16 %v4721, %v4719
    %v4822 = vpack.c.b16 %v4724, %v4722
    %v4823 = vpack.c.b16 %v4725, %v4723
    %v4824 = vpack.c.b16 %v4728, %v4726
    %v4825 = vpack.c.b16 %v4729, %v4727
    %v4826 = vpack.c.b16 %v4732, %v4730
    %v4827 = vpack.c.b16 %v4733, %v4731
    %v4828 = vpack.c.b16 %v4736, %v4734
    %v4829 = vpack.c.b16 %v4737, %v4735
    %v4830 = vpack.c.b16 %v4740, %v4738
    %v4831 = vpack.c.b16 %v4741, %v4739
    %v4832 = vpack.c.b16 %v4744, %v4742
    %v4833 = vpack.c.b16 %v4745, %v4743
    %v4834 = vpack.c.b16 %v4748, %v4746
    %v4835 = vpack.c.b16 %v4749, %v4747
    %v4836 = vpack.c.b16 %v4752, %v4750
    %v4837 = vpack.c.b16 %v4753, %v4751
    %v4838 = vpack.c.b16 %v4756, %v4754
    %v4839 = vpack.c.b16 %v4757, %v4755
    %v4840 = vpack.c.b16 %v4760, %v4758
    %v4841 = vpack.c.b16 %v4761, %v4759
    %v4842 = vpack.c.b16 %v4764, %v4762
    %v4843 = vpack.c.b16 %v4765, %v4763
    %v4844 = vpack.c.b16 %v4768, %v4766
    %v4845 = vpack.c.b16 %v4769, %v4767
    %v4846 = vpack.c.b16 %v4772, %v4770
    %v4847 = vpack.c.b16 %v4773, %v4771
    %v4848 = vpack.c.b16 %v4776, %v4774
    %v4849 = vpack.c.b16 %v4777, %v4775
    %v4850 = vpack.c.b16 %v4780, %v4778
    %v4851 = vpack.c.b16 %v4781, %v4779
    %v4852 = vpack.c.b16 %v4784, %v4782
    %v4853 = vpack.c.b16 %v4785, %v4783
    %v4854 = vpack.c.b16 %v4788, %v4786
    %v4855 = vpack.c.b16 %v4789, %v4787
    %v4856 = vpack.c.b16 %v4792, %v4790
    %v4857 = vpack.c.b16 %v4793, %v4791
    %4922 = vmatprep.subr.bf16.mxu0 %v4809
    %4923 = vmatpush1.bf16.msra.mxu0 %v4808
    %4924 = vmatprep.subr.bf16.mxu0 %v4807
    %4925 = vmatpush1.bf16.msra.mxu0 %v4806
    %4926 = vmatprep.subr.bf16.mxu0 %v4805
    %4927 = vmatpush1.bf16.msra.mxu0 %v4804
    %4928 = vmatprep.subr.bf16.mxu0 %v4803
    %4929 = vmatpush1.bf16.msra.mxu0 %v4802
    %4930 = vmatprep.subr.bf16.mxu0 %v4801
    %4931 = vmatpush1.bf16.msra.mxu0 %v4800
    %4932 = vmatprep.subr.bf16.mxu0 %v4799
    %4933 = vmatpush1.bf16.msra.mxu0 %v4798
    %4934 = vmatprep.subr.bf16.mxu0 %v4797
    %4935 = vmatpush1.bf16.msra.mxu0 %v4796
    %4936 = vmatprep.subr.bf16.mxu0 %v4795
    %4937 = vmatpush1.bf16.msra.mxu0 %v4794
    %4938 = vmatprep.subr.bf16.mxu0 %v4825
    %4939 = vmatpush2.bf16.msra.mxu0 %v4824
    %4940 = vmatprep.subr.bf16.mxu0 %v4823
    %4941 = vmatpush2.bf16.msra.mxu0 %v4822
    %4942 = vmatprep.subr.bf16.mxu0 %v4821
    %4943 = vmatpush2.bf16.msra.mxu0 %v4820
    %4944 = vmatprep.subr.bf16.mxu0 %v4819
    %4945 = vmatpush2.bf16.msra.mxu0 %v4818
    %4946 = vmatprep.subr.bf16.mxu0 %v4817
    %4947 = vmatpush2.bf16.msra.mxu0 %v4816
    %4948 = vmatprep.subr.bf16.mxu0 %v4815
    %4949 = vmatpush2.bf16.msra.mxu0 %v4814
    %4950 = vmatprep.subr.bf16.mxu0 %v4813
    %4951 = vmatpush2.bf16.msra.mxu0 %v4812
    %4952 = vmatprep.subr.bf16.mxu0 %v4811
    %4953 = vmatpush2.bf16.msra.mxu0 %v4810
    %4954 = vmatprep.mubr.bf16.mxu0 %v4495
    %4955 = vmatmul.mubr.bf16.gmra.mxu0 %v4494
    %v4956 = vpop.f32.mrf.mxu0
    %v4957 = vadd.f32 %v4595, %v4956
    %v4958 = vpop.f32.mrf.mxu0
    %v4959 = vadd.f32 %v4599, %v4958
    %v4960 = vpop.f32.mrf.mxu0
    %v4961 = vadd.f32 %v4595, %v4960
    %v4962 = vpop.f32.mrf.mxu0
    %v4963 = vadd.f32 %v4599, %v4962
    %4964 = vmatprep.mubr.bf16.mxu0 %v4499
    %4965 = vmatmul.mubr.bf16.gmra.mxu0 %v4498
    %v4966 = vpop.f32.mrf.mxu0
    %v4967 = vadd.f32 %v4595, %v4966
    %v4968 = vpop.f32.mrf.mxu0
    %v4969 = vadd.f32 %v4599, %v4968
    %v4970 = vpop.f32.mrf.mxu0
    %v4971 = vadd.f32 %v4595, %v4970
    %v4972 = vpop.f32.mrf.mxu0
    %v4973 = vadd.f32 %v4599, %v4972
    %4974 = vmatprep.mubr.bf16.mxu0 %v4503
    %4975 = vmatmul.mubr.bf16.gmra.mxu0 %v4502
    %v4976 = vpop.f32.mrf.mxu0
    %v4977 = vadd.f32 %v4595, %v4976
    %v4978 = vpop.f32.mrf.mxu0
    %v4979 = vadd.f32 %v4599, %v4978
    %v4980 = vpop.f32.mrf.mxu0
    %v4981 = vadd.f32 %v4595, %v4980
    %v4982 = vpop.f32.mrf.mxu0
    %v4983 = vadd.f32 %v4599, %v4982
    %4984 = vmatprep.mubr.bf16.mxu0 %v4507
    %4985 = vmatmul.mubr.bf16.gmra.mxu0 %v4506
    %v4986 = vpop.f32.mrf.mxu0
    %v4987 = vadd.f32 %v4595, %v4986
    %v4988 = vpop.f32.mrf.mxu0
    %v4989 = vadd.f32 %v4599, %v4988
    %v4990 = vpop.f32.mrf.mxu0
    %v4991 = vadd.f32 %v4595, %v4990
    %v4992 = vpop.f32.mrf.mxu0
    %v4993 = vadd.f32 %v4599, %v4992
    %4994 = vmatprep.mubr.bf16.mxu0 %v4511
    %4995 = vmatmul.mubr.bf16.gmra.mxu0 %v4510
    %v4996 = vpop.f32.mrf.mxu0
    %v4997 = vadd.f32 %v4595, %v4996
    %v4998 = vpop.f32.mrf.mxu0
    %v4999 = vadd.f32 %v4599, %v4998
    %v5000 = vpop.f32.mrf.mxu0
    %v5001 = vadd.f32 %v4595, %v5000
    %v5002 = vpop.f32.mrf.mxu0
    %v5003 = vadd.f32 %v4599, %v5002
    %5004 = vmatprep.mubr.bf16.mxu0 %v4515
    %5005 = vmatmul.mubr.bf16.gmra.mxu0 %v4514
    %v5006 = vpop.f32.mrf.mxu0
    %v5007 = vadd.f32 %v4595, %v5006
    %v5008 = vpop.f32.mrf.mxu0
    %v5009 = vadd.f32 %v4599, %v5008
    %v5010 = vpop.f32.mrf.mxu0
    %v5011 = vadd.f32 %v4595, %v5010
    %v5012 = vpop.f32.mrf.mxu0
    %v5013 = vadd.f32 %v4599, %v5012
    %5014 = vmatprep.mubr.bf16.mxu0 %v4519
    %5015 = vmatmul.mubr.bf16.gmra.mxu0 %v4518
    %v5016 = vpop.f32.mrf.mxu0
    %v5017 = vadd.f32 %v4595, %v5016
    %v5018 = vpop.f32.mrf.mxu0
    %v5019 = vadd.f32 %v4599, %v5018
    %v5020 = vpop.f32.mrf.mxu0
    %v5021 = vadd.f32 %v4595, %v5020
    %v5022 = vpop.f32.mrf.mxu0
    %v5023 = vadd.f32 %v4599, %v5022
    %5024 = vmatprep.mubr.bf16.mxu0 %v4523
    %5025 = vmatmul.mubr.bf16.gmra.mxu0 %v4522
    %v5026 = vpop.f32.mrf.mxu0
    %v5027 = vadd.f32 %v4595, %v5026
    %v5028 = vpop.f32.mrf.mxu0
    %v5029 = vadd.f32 %v4599, %v5028
    %v5030 = vpop.f32.mrf.mxu0
    %v5031 = vadd.f32 %v4595, %v5030
    %v5032 = vpop.f32.mrf.mxu0
    %v5033 = vadd.f32 %v4599, %v5032
    %5034 = vdwg.mxu0
    %5035 = vmatprep.subr.bf16.mxu0 %v4841
    %5036 = vmatpush1.bf16.msra.mxu0 %v4840
    %5037 = vmatprep.subr.bf16.mxu0 %v4839
    %5038 = vmatpush1.bf16.msra.mxu0 %v4838
    %5039 = vmatprep.subr.bf16.mxu0 %v4837
    %5040 = vmatpush1.bf16.msra.mxu0 %v4836
    %5041 = vmatprep.subr.bf16.mxu0 %v4835
    %5042 = vmatpush1.bf16.msra.mxu0 %v4834
    %5043 = vmatprep.subr.bf16.mxu0 %v4833
    %5044 = vmatpush1.bf16.msra.mxu0 %v4832
    %5045 = vmatprep.subr.bf16.mxu0 %v4831
    %5046 = vmatpush1.bf16.msra.mxu0 %v4830
    %5047 = vmatprep.subr.bf16.mxu0 %v4829
    %5048 = vmatpush1.bf16.msra.mxu0 %v4828
    %5049 = vmatprep.subr.bf16.mxu0 %v4827
    %5050 = vmatpush1.bf16.msra.mxu0 %v4826
    %5051 = vmatprep.subr.bf16.mxu0 %v4857
    %5052 = vmatpush2.bf16.msra.mxu0 %v4856
    %5053 = vmatprep.subr.bf16.mxu0 %v4855
    %5054 = vmatpush2.bf16.msra.mxu0 %v4854
    %5055 = vmatprep.subr.bf16.mxu0 %v4853
    %5056 = vmatpush2.bf16.msra.mxu0 %v4852
    %5057 = vmatprep.subr.bf16.mxu0 %v4851
    %5058 = vmatpush2.bf16.msra.mxu0 %v4850
    %5059 = vmatprep.subr.bf16.mxu0 %v4849
    %5060 = vmatpush2.bf16.msra.mxu0 %v4848
    %5061 = vmatprep.subr.bf16.mxu0 %v4847
    %5062 = vmatpush2.bf16.msra.mxu0 %v4846
    %5063 = vmatprep.subr.bf16.mxu0 %v4845
    %5064 = vmatpush2.bf16.msra.mxu0 %v4844
    %5065 = vmatprep.subr.bf16.mxu0 %v4843
    %5066 = vmatpush2.bf16.msra.mxu0 %v4842
    %5067 = vmatprep.mubr.bf16.mxu0 %v4497
    %5068 = vmatmul.mubr.bf16.gmra.mxu0 %v4496
    %v5069 = vpop.f32.mrf.mxu0
    %v5070 = vadd.f32 %v4957, %v5069
    %v5071 = vpop.f32.mrf.mxu0
    %v5072 = vadd.f32 %v4959, %v5071
    %v5073 = vpop.f32.mrf.mxu0
    %v5074 = vadd.f32 %v4961, %v5073
    %v5075 = vpop.f32.mrf.mxu0
    %v5076 = vadd.f32 %v4963, %v5075
    %5077 = vmatprep.mubr.bf16.mxu0 %v4501
    %5078 = vmatmul.mubr.bf16.gmra.mxu0 %v4500
    %v5079 = vpop.f32.mrf.mxu0
    %v5080 = vadd.f32 %v4967, %v5079
    %v5081 = vpop.f32.mrf.mxu0
    %v5082 = vadd.f32 %v4969, %v5081
    %v5083 = vpop.f32.mrf.mxu0
    %v5084 = vadd.f32 %v4971, %v5083
    %v5085 = vpop.f32.mrf.mxu0
    %v5086 = vadd.f32 %v4973, %v5085
    %5087 = vmatprep.mubr.bf16.mxu0 %v4505
    %5088 = vmatmul.mubr.bf16.gmra.mxu0 %v4504
    %v5089 = vpop.f32.mrf.mxu0
    %v5090 = vadd.f32 %v4977, %v5089
    %v5091 = vpop.f32.mrf.mxu0
    %v5092 = vadd.f32 %v4979, %v5091
    %v5093 = vpop.f32.mrf.mxu0
    %v5094 = vadd.f32 %v4981, %v5093
    %v5095 = vpop.f32.mrf.mxu0
    %v5096 = vadd.f32 %v4983, %v5095
    %5097 = vmatprep.mubr.bf16.mxu0 %v4509
    %5098 = vmatmul.mubr.bf16.gmra.mxu0 %v4508
    %v5099 = vpop.f32.mrf.mxu0
    %v5100 = vadd.f32 %v4987, %v5099
    %v5101 = vpop.f32.mrf.mxu0
    %v5102 = vadd.f32 %v4989, %v5101
    %v5103 = vpop.f32.mrf.mxu0
    %v5104 = vadd.f32 %v4991, %v5103
    %v5105 = vpop.f32.mrf.mxu0
    %v5106 = vadd.f32 %v4993, %v5105
    %5107 = vmatprep.mubr.bf16.mxu0 %v4513
    %5108 = vmatmul.mubr.bf16.gmra.mxu0 %v4512
    %v5109 = vpop.f32.mrf.mxu0
    %v5110 = vadd.f32 %v4997, %v5109
    %v5111 = vpop.f32.mrf.mxu0
    %v5112 = vadd.f32 %v4999, %v5111
    %v5113 = vpop.f32.mrf.mxu0
    %v5114 = vadd.f32 %v5001, %v5113
    %v5115 = vpop.f32.mrf.mxu0
    %v5116 = vadd.f32 %v5003, %v5115
    %5117 = vmatprep.mubr.bf16.mxu0 %v4517
    %5118 = vmatmul.mubr.bf16.gmra.mxu0 %v4516
    %v5119 = vpop.f32.mrf.mxu0
    %v5120 = vadd.f32 %v5007, %v5119
    %v5121 = vpop.f32.mrf.mxu0
    %v5122 = vadd.f32 %v5009, %v5121
    %v5123 = vpop.f32.mrf.mxu0
    %v5124 = vadd.f32 %v5011, %v5123
    %v5125 = vpop.f32.mrf.mxu0
    %v5126 = vadd.f32 %v5013, %v5125
    %5127 = vmatprep.mubr.bf16.mxu0 %v4521
    %5128 = vmatmul.mubr.bf16.gmra.mxu0 %v4520
    %v5129 = vpop.f32.mrf.mxu0
    %v5130 = vadd.f32 %v5017, %v5129
    %v5131 = vpop.f32.mrf.mxu0
    %v5132 = vadd.f32 %v5019, %v5131
    %v5133 = vpop.f32.mrf.mxu0
    %v5134 = vadd.f32 %v5021, %v5133
    %v5135 = vpop.f32.mrf.mxu0
    %v5136 = vadd.f32 %v5023, %v5135
    %5137 = vmatprep.mubr.bf16.mxu0 %v4525
    %5138 = vmatmul.mubr.bf16.gmra.mxu0 %v4524
    %v5139 = vpop.f32.mrf.mxu0
    %v5140 = vadd.f32 %v5027, %v5139
    %v5141 = vpop.f32.mrf.mxu0
    %v5142 = vadd.f32 %v5029, %v5141
    %v5143 = vpop.f32.mrf.mxu0
    %v5144 = vadd.f32 %v5031, %v5143
    %v5145 = vpop.f32.mrf.mxu0
    %v5146 = vadd.f32 %v5033, %v5145
    %5147 = vdwg.mxu0
    %vm5148 = vcmp.ge.f32.partialorder %v5070, 0.0
    %vm5149 = vcmp.ge.f32.partialorder %v5072, 0.0
    %vm5150 = vcmp.ge.f32.partialorder %v5074, 0.0
    %vm5151 = vcmp.ge.f32.partialorder %v5076, 0.0
    %vm5152 = vcmp.ge.f32.partialorder %v5080, 0.0
    %vm5153 = vcmp.ge.f32.partialorder %v5082, 0.0
    %vm5154 = vcmp.ge.f32.partialorder %v5084, 0.0
    %vm5155 = vcmp.ge.f32.partialorder %v5086, 0.0
    %vm5156 = vcmp.ge.f32.partialorder %v5090, 0.0
    %vm5157 = vcmp.ge.f32.partialorder %v5092, 0.0
    %vm5158 = vcmp.ge.f32.partialorder %v5094, 0.0
    %vm5159 = vcmp.ge.f32.partialorder %v5096, 0.0
    %vm5160 = vcmp.ge.f32.partialorder %v5100, 0.0
    %vm5161 = vcmp.ge.f32.partialorder %v5102, 0.0
    %vm5162 = vcmp.ge.f32.partialorder %v5104, 0.0
    %vm5163 = vcmp.ge.f32.partialorder %v5106, 0.0
    %vm5164 = vcmp.ge.f32.partialorder %v5110, 0.0
    %vm5165 = vcmp.ge.f32.partialorder %v5112, 0.0
    %vm5166 = vcmp.ge.f32.partialorder %v5114, 0.0
    %vm5167 = vcmp.ge.f32.partialorder %v5116, 0.0
    %vm5168 = vcmp.ge.f32.partialorder %v5120, 0.0
    %vm5169 = vcmp.ge.f32.partialorder %v5122, 0.0
    %vm5170 = vcmp.ge.f32.partialorder %v5124, 0.0
    %vm5171 = vcmp.ge.f32.partialorder %v5126, 0.0
    %vm5172 = vcmp.ge.f32.partialorder %v5130, 0.0
    %vm5173 = vcmp.ge.f32.partialorder %v5132, 0.0
    %vm5174 = vcmp.ge.f32.partialorder %v5134, 0.0
    %vm5175 = vcmp.ge.f32.partialorder %v5136, 0.0
    %vm5176 = vcmp.ge.f32.partialorder %v5140, 0.0
    %vm5177 = vcmp.ge.f32.partialorder %v5142, 0.0
    %vm5178 = vcmp.ge.f32.partialorder %v5144, 0.0
    %vm5179 = vcmp.ge.f32.partialorder %v5146, 0.0
    %v5180 = vmul.f32 %v5070, 0.2
    %v5181 = vmul.f32 %v5072, 0.2
    %v5182 = vmul.f32 %v5074, 0.2
    %v5183 = vmul.f32 %v5076, 0.2
    %v5184 = vmul.f32 %v5080, 0.2
    %v5185 = vmul.f32 %v5082, 0.2
    %v5186 = vmul.f32 %v5084, 0.2
    %v5187 = vmul.f32 %v5086, 0.2
    %v5188 = vmul.f32 %v5090, 0.2
    %v5189 = vmul.f32 %v5092, 0.2
    %v5190 = vmul.f32 %v5094, 0.2
    %v5191 = vmul.f32 %v5096, 0.2
    %v5192 = vmul.f32 %v5100, 0.2
    %v5193 = vmul.f32 %v5102, 0.2
    %v5194 = vmul.f32 %v5104, 0.2
    %v5195 = vmul.f32 %v5106, 0.2
    %v5196 = vmul.f32 %v5110, 0.2
    %v5197 = vmul.f32 %v5112, 0.2
    %v5198 = vmul.f32 %v5114, 0.2
    %v5199 = vmul.f32 %v5116, 0.2
    %v5200 = vmul.f32 %v5120, 0.2
    %v5201 = vmul.f32 %v5122, 0.2
    %v5202 = vmul.f32 %v5124, 0.2
    %v5203 = vmul.f32 %v5126, 0.2
    %v5204 = vmul.f32 %v5130, 0.2
    %v5205 = vmul.f32 %v5132, 0.2
    %v5206 = vmul.f32 %v5134, 0.2
    %v5207 = vmul.f32 %v5136, 0.2
    %v5208 = vmul.f32 %v5140, 0.2
    %v5209 = vmul.f32 %v5142, 0.2
    %v5210 = vmul.f32 %v5144, 0.2
    %v5211 = vmul.f32 %v5146, 0.2
    %v5212 = vsel %vm5148, %v5070, %v5180
    %v5213 = vsel %vm5149, %v5072, %v5181
    %v5214 = vsel %vm5150, %v5074, %v5182
    %v5215 = vsel %vm5151, %v5076, %v5183
    %v5216 = vsel %vm5152, %v5080, %v5184
    %v5217 = vsel %vm5153, %v5082, %v5185
    %v5218 = vsel %vm5154, %v5084, %v5186
    %v5219 = vsel %vm5155, %v5086, %v5187
    %v5220 = vsel %vm5156, %v5090, %v5188
    %v5221 = vsel %vm5157, %v5092, %v5189
    %v5222 = vsel %vm5158, %v5094, %v5190
    %v5223 = vsel %vm5159, %v5096, %v5191
    %v5224 = vsel %vm5160, %v5100, %v5192
    %v5225 = vsel %vm5161, %v5102, %v5193
    %v5226 = vsel %vm5162, %v5104, %v5194
    %v5227 = vsel %vm5163, %v5106, %v5195
    %v5228 = vsel %vm5164, %v5110, %v5196
    %v5229 = vsel %vm5165, %v5112, %v5197
    %v5230 = vsel %vm5166, %v5114, %v5198
    %v5231 = vsel %vm5167, %v5116, %v5199
    %v5232 = vsel %vm5168, %v5120, %v5200
    %v5233 = vsel %vm5169, %v5122, %v5201
    %v5234 = vsel %vm5170, %v5124, %v5202
    %v5235 = vsel %vm5171, %v5126, %v5203
    %v5236 = vsel %vm5172, %v5130, %v5204
    %v5237 = vsel %vm5173, %v5132, %v5205
    %v5238 = vsel %vm5174, %v5134, %v5206
    %v5239 = vsel %vm5175, %v5136, %v5207
    %v5240 = vsel %vm5176, %v5140, %v5208
    %v5241 = vsel %vm5177, %v5142, %v5209
    %v5242 = vsel %vm5178, %v5144, %v5210
    %v5243 = vsel %vm5179, %v5146, %v5211
    %v5244 = vld [vmem:[%s3] sm:$0xff]
    %v5245 = vld [vmem:[%s3 + $0x8] sm:$0xff]
    %v5246 = vld [vmem:[%s3 + $0x10] sm:$0xff]
    %v5247 = vld [vmem:[%s3 + $0x18] sm:$0xff]
    %v5248 = vld [vmem:[%s3 + $0x20] sm:$0xff]
    %v5249 = vld [vmem:[%s3 + $0x28] sm:$0xff]
    %v5250 = vld [vmem:[%s3 + $0x30] sm:$0xff]
    %v5251 = vld [vmem:[%s3 + $0x38] sm:$0xff]
    %v5252 = vld [vmem:[%s3 + $0x40] sm:$0xff]
    %v5253 = vld [vmem:[%s3 + $0x48] sm:$0xff]
    %v5254 = vld [vmem:[%s3 + $0x50] sm:$0xff]
    %v5255 = vld [vmem:[%s3 + $0x58] sm:$0xff]
    %v5256 = vld [vmem:[%s3 + $0x60] sm:$0xff]
    %v5257 = vld [vmem:[%s3 + $0x68] sm:$0xff]
    %v5258 = vld [vmem:[%s3 + $0x70] sm:$0xff]
    %v5259 = vld [vmem:[%s3 + $0x78] sm:$0xff]
    %v5260 = vld [vmem:[%s3 + $0x80] sm:$0xff]
    %v5261 = vld [vmem:[%s3 + $0x88] sm:$0xff]
    %v5262 = vld [vmem:[%s3 + $0x90] sm:$0xff]
    %v5263 = vld [vmem:[%s3 + $0x98] sm:$0xff]
    %v5264 = vld [vmem:[%s3 + $0xa0] sm:$0xff]
    %v5265 = vld [vmem:[%s3 + $0xa8] sm:$0xff]
    %v5266 = vld [vmem:[%s3 + $0xb0] sm:$0xff]
    %v5267 = vld [vmem:[%s3 + $0xb8] sm:$0xff]
    %v5268 = vld [vmem:[%s3 + $0xc0] sm:$0xff]
    %v5269 = vld [vmem:[%s3 + $0xc8] sm:$0xff]
    %v5270 = vld [vmem:[%s3 + $0xd0] sm:$0xff]
    %v5271 = vld [vmem:[%s3 + $0xd8] sm:$0xff]
    %v5272 = vld [vmem:[%s3 + $0xe0] sm:$0xff]
    %v5273 = vld [vmem:[%s3 + $0xe8] sm:$0xff]
    %v5274 = vld [vmem:[%s3 + $0xf0] sm:$0xff]
    %v5275 = vld [vmem:[%s3 + $0xf8] sm:$0xff]
    %v5276 = vmul.f32 %v5212, %v5244
    %v5277 = vmul.f32 %v5213, %v5245
    %v5278 = vmul.f32 %v5214, %v5246
    %v5279 = vmul.f32 %v5215, %v5247
    %v5280 = vmul.f32 %v5216, %v5248
    %v5281 = vmul.f32 %v5217, %v5249
    %v5282 = vmul.f32 %v5218, %v5250
    %v5283 = vmul.f32 %v5219, %v5251
    %v5284 = vmul.f32 %v5220, %v5252
    %v5285 = vmul.f32 %v5221, %v5253
    %v5286 = vmul.f32 %v5222, %v5254
    %v5287 = vmul.f32 %v5223, %v5255
    %v5288 = vmul.f32 %v5224, %v5256
    %v5289 = vmul.f32 %v5225, %v5257
    %v5290 = vmul.f32 %v5226, %v5258
    %v5291 = vmul.f32 %v5227, %v5259
    %v5292 = vmul.f32 %v5228, %v5260
    %v5293 = vmul.f32 %v5229, %v5261
    %v5294 = vmul.f32 %v5230, %v5262
    %v5295 = vmul.f32 %v5231, %v5263
    %v5296 = vmul.f32 %v5232, %v5264
    %v5297 = vmul.f32 %v5233, %v5265
    %v5298 = vmul.f32 %v5234, %v5266
    %v5299 = vmul.f32 %v5235, %v5267
    %v5300 = vmul.f32 %v5236, %v5268
    %v5301 = vmul.f32 %v5237, %v5269
    %v5302 = vmul.f32 %v5238, %v5270
    %v5303 = vmul.f32 %v5239, %v5271
    %v5304 = vmul.f32 %v5240, %v5272
    %v5305 = vmul.f32 %v5241, %v5273
    %v5306 = vmul.f32 %v5242, %v5274
    %v5307 = vmul.f32 %v5243, %v5275
    %v5308 = vld [vmem:[#allocation10] sm:$0x3]
    %v5310 = vlaneseq
    %v5311 = vshrl.u32 %v5310, 7
    %v5312 = vsub.s32 0, %v5311
    %v5313 = vrot.slane %v5308, %v5312
    %v5314 = vlaneseq
    %v5315 = vshrl.u32 %v5314, 7
    %v5316 = vsub.s32 1, %v5315
    %v5317 = vrot.slane %v5308, %v5316
    %v5320 = vmul.f32 %v5276, %v5313
    %v5321 = vmul.f32 %v5277, %v5317
    %v5322 = vmul.f32 %v5278, %v5313
    %v5323 = vmul.f32 %v5279, %v5317
    %v5324 = vmul.f32 %v5280, %v5313
    %v5325 = vmul.f32 %v5281, %v5317
    %v5326 = vmul.f32 %v5282, %v5313
    %v5327 = vmul.f32 %v5283, %v5317
    %v5328 = vmul.f32 %v5284, %v5313
    %v5329 = vmul.f32 %v5285, %v5317
    %v5330 = vmul.f32 %v5286, %v5313
    %v5331 = vmul.f32 %v5287, %v5317
    %v5332 = vmul.f32 %v5288, %v5313
    %v5333 = vmul.f32 %v5289, %v5317
    %v5334 = vmul.f32 %v5290, %v5313
    %v5335 = vmul.f32 %v5291, %v5317
    %v5336 = vmul.f32 %v5292, %v5313
    %v5337 = vmul.f32 %v5293, %v5317
    %v5338 = vmul.f32 %v5294, %v5313
    %v5339 = vmul.f32 %v5295, %v5317
    %v5340 = vmul.f32 %v5296, %v5313
    %v5341 = vmul.f32 %v5297, %v5317
    %v5342 = vmul.f32 %v5298, %v5313
    %v5343 = vmul.f32 %v5299, %v5317
    %v5344 = vmul.f32 %v5300, %v5313
    %v5345 = vmul.f32 %v5301, %v5317
    %v5346 = vmul.f32 %v5302, %v5313
    %v5347 = vmul.f32 %v5303, %v5317
    %v5348 = vmul.f32 %v5304, %v5313
    %v5349 = vmul.f32 %v5305, %v5317
    %v5350 = vmul.f32 %v5306, %v5313
    %v5351 = vmul.f32 %v5307, %v5317
    %v5352 = vadd.f32 %v5320, %v5321
    %5353 = vadd.xlane.f32.xlu0 %v5352
    %v5354 = vpop.xlane.xlu0 %5353
    %v5355 = vadd.f32 %v5322, %v5323
    %5356 = vadd.xlane.f32.xlu0 %v5355
    %v5357 = vpop.xlane.xlu0 %5356
    %v5358 = vadd.f32 %v5324, %v5325
    %5359 = vadd.xlane.f32.xlu0 %v5358
    %v5360 = vpop.xlane.xlu0 %5359
    %v5361 = vadd.f32 %v5326, %v5327
    %5362 = vadd.xlane.f32.xlu0 %v5361
    %v5363 = vpop.xlane.xlu0 %5362
    %v5364 = vadd.f32 %v5328, %v5329
    %5365 = vadd.xlane.f32.xlu0 %v5364
    %v5366 = vpop.xlane.xlu0 %5365
    %v5367 = vadd.f32 %v5330, %v5331
    %5368 = vadd.xlane.f32.xlu0 %v5367
    %v5369 = vpop.xlane.xlu0 %5368
    %v5370 = vadd.f32 %v5332, %v5333
    %5371 = vadd.xlane.f32.xlu0 %v5370
    %v5372 = vpop.xlane.xlu0 %5371
    %v5373 = vadd.f32 %v5334, %v5335
    %5374 = vadd.xlane.f32.xlu0 %v5373
    %v5375 = vpop.xlane.xlu0 %5374
    %v5376 = vadd.f32 %v5336, %v5337
    %5377 = vadd.xlane.f32.xlu0 %v5376
    %v5378 = vpop.xlane.xlu0 %5377
    %v5379 = vadd.f32 %v5338, %v5339
    %5380 = vadd.xlane.f32.xlu0 %v5379
    %v5381 = vpop.xlane.xlu0 %5380
    %v5382 = vadd.f32 %v5340, %v5341
    %5383 = vadd.xlane.f32.xlu0 %v5382
    %v5384 = vpop.xlane.xlu0 %5383
    %v5385 = vadd.f32 %v5342, %v5343
    %5386 = vadd.xlane.f32.xlu0 %v5385
    %v5387 = vpop.xlane.xlu0 %5386
    %v5388 = vadd.f32 %v5344, %v5345
    %5389 = vadd.xlane.f32.xlu0 %v5388
    %v5390 = vpop.xlane.xlu0 %5389
    %v5391 = vadd.f32 %v5346, %v5347
    %5392 = vadd.xlane.f32.xlu0 %v5391
    %v5393 = vpop.xlane.xlu0 %5392
    %v5394 = vadd.f32 %v5348, %v5349
    %5395 = vadd.xlane.f32.xlu0 %v5394
    %v5396 = vpop.xlane.xlu0 %5395
    %v5397 = vadd.f32 %v5350, %v5351
    %5398 = vadd.xlane.f32.xlu0 %v5397
    %v5399 = vpop.xlane.xlu0 %5398
    %v5400 = vld [vmem:[#allocation2] sm:$0x1]
    %v5402 = vlaneseq
    %v5403 = vshrl.u32 %v5402, 7
    %v5404 = vsub.s32 0, %v5403
    %v5405 = vrot.slane %v5400, %v5404
    %v5407 = vadd.f32 %v5354, %v5405
    %v5408 = vadd.f32 %v5357, %v5405
    %v5409 = vadd.f32 %v5360, %v5405
    %v5410 = vadd.f32 %v5363, %v5405
    %v5411 = vadd.f32 %v5366, %v5405
    %v5412 = vadd.f32 %v5369, %v5405
    %v5413 = vadd.f32 %v5372, %v5405
    %v5414 = vadd.f32 %v5375, %v5405
    %v5415 = vadd.f32 %v5378, %v5405
    %v5416 = vadd.f32 %v5381, %v5405
    %v5417 = vadd.f32 %v5384, %v5405
    %v5418 = vadd.f32 %v5387, %v5405
    %v5419 = vadd.f32 %v5390, %v5405
    %v5420 = vadd.f32 %v5393, %v5405
    %v5421 = vadd.f32 %v5396, %v5405
    %v5422 = vadd.f32 %v5399, %v5405
    %v5423 = vxor.u32 %v5407, 2147483648
    %v5424 = vxor.u32 %v5408, 2147483648
    %v5425 = vxor.u32 %v5409, 2147483648
    %v5426 = vxor.u32 %v5410, 2147483648
    %v5427 = vxor.u32 %v5411, 2147483648
    %v5428 = vxor.u32 %v5412, 2147483648
    %v5429 = vxor.u32 %v5413, 2147483648
    %v5430 = vxor.u32 %v5414, 2147483648
    %v5431 = vxor.u32 %v5415, 2147483648
    %v5432 = vxor.u32 %v5416, 2147483648
    %v5433 = vxor.u32 %v5417, 2147483648
    %v5434 = vxor.u32 %v5418, 2147483648
    %v5435 = vxor.u32 %v5419, 2147483648
    %v5436 = vxor.u32 %v5420, 2147483648
    %v5437 = vxor.u32 %v5421, 2147483648
    %v5438 = vxor.u32 %v5422, 2147483648
    %v5439 = vmul.f32 %v5423, 1.442695
    %v5440 = vpow.pop %v5439
    %v5441 = vmul.f32 %v5424, 1.442695
    %v5442 = vpow.pop %v5441
    %v5443 = vmul.f32 %v5425, 1.442695
    %v5444 = vpow.pop %v5443
    %v5445 = vmul.f32 %v5426, 1.442695
    %v5446 = vpow.pop %v5445
    %v5447 = vmul.f32 %v5427, 1.442695
    %v5448 = vpow.pop %v5447
    %v5449 = vmul.f32 %v5428, 1.442695
    %v5450 = vpow.pop %v5449
    %v5451 = vmul.f32 %v5429, 1.442695
    %v5452 = vpow.pop %v5451
    %v5453 = vmul.f32 %v5430, 1.442695
    %v5454 = vpow.pop %v5453
    %v5455 = vmul.f32 %v5431, 1.442695
    %v5456 = vpow.pop %v5455
    %v5457 = vmul.f32 %v5432, 1.442695
    %v5458 = vpow.pop %v5457
    %v5459 = vmul.f32 %v5433, 1.442695
    %v5460 = vpow.pop %v5459
    %v5461 = vmul.f32 %v5434, 1.442695
    %v5462 = vpow.pop %v5461
    %v5463 = vmul.f32 %v5435, 1.442695
    %v5464 = vpow.pop %v5463
    %v5465 = vmul.f32 %v5436, 1.442695
    %v5466 = vpow.pop %v5465
    %v5467 = vmul.f32 %v5437, 1.442695
    %v5468 = vpow.pop %v5467
    %v5469 = vmul.f32 %v5438, 1.442695
    %v5470 = vpow.pop %v5469
    %v5471 = vadd.f32 %v5440, 1.0
    %v5472 = vadd.f32 %v5442, 1.0
    %v5473 = vadd.f32 %v5444, 1.0
    %v5474 = vadd.f32 %v5446, 1.0
    %v5475 = vadd.f32 %v5448, 1.0
    %v5476 = vadd.f32 %v5450, 1.0
    %v5477 = vadd.f32 %v5452, 1.0
    %v5478 = vadd.f32 %v5454, 1.0
    %v5479 = vadd.f32 %v5456, 1.0
    %v5480 = vadd.f32 %v5458, 1.0
    %v5481 = vadd.f32 %v5460, 1.0
    %v5482 = vadd.f32 %v5462, 1.0
    %v5483 = vadd.f32 %v5464, 1.0
    %v5484 = vadd.f32 %v5466, 1.0
    %v5485 = vadd.f32 %v5468, 1.0
    %v5486 = vadd.f32 %v5470, 1.0
    %v5487 = vrcp.pop %v5471
    %v5488 = vmul.f32 1.0, %v5487
    %v5489 = vrcp.pop %v5472
    %v5490 = vmul.f32 1.0, %v5489
    %v5491 = vrcp.pop %v5473
    %v5492 = vmul.f32 1.0, %v5491
    %v5493 = vrcp.pop %v5474
    %v5494 = vmul.f32 1.0, %v5493
    %v5495 = vrcp.pop %v5475
    %v5496 = vmul.f32 1.0, %v5495
    %v5497 = vrcp.pop %v5476
    %v5498 = vmul.f32 1.0, %v5497
    %v5499 = vrcp.pop %v5477
    %v5500 = vmul.f32 1.0, %v5499
    %v5501 = vrcp.pop %v5478
    %v5502 = vmul.f32 1.0, %v5501
    %v5503 = vrcp.pop %v5479
    %v5504 = vmul.f32 1.0, %v5503
    %v5505 = vrcp.pop %v5480
    %v5506 = vmul.f32 1.0, %v5505
    %v5507 = vrcp.pop %v5481
    %v5508 = vmul.f32 1.0, %v5507
    %v5509 = vrcp.pop %v5482
    %v5510 = vmul.f32 1.0, %v5509
    %v5511 = vrcp.pop %v5483
    %v5512 = vmul.f32 1.0, %v5511
    %v5513 = vrcp.pop %v5484
    %v5514 = vmul.f32 1.0, %v5513
    %v5515 = vrcp.pop %v5485
    %v5516 = vmul.f32 1.0, %v5515
    %v5517 = vrcp.pop %v5486
    %v5518 = vmul.f32 1.0, %v5517
    %5520 = vset.pattern.permute.xlu0 0
    %5521 = vperm.xlu0 %5520, %v5488
    %v5522 = vpop.permute.xlu0 %5521
    %5525 = vset.pattern.permute.xlu0 0
    %5526 = vperm.xlu0 %5525, %v5490
    %v5527 = vpop.permute.xlu0 %5526
    %5530 = vset.pattern.permute.xlu0 0
    %5531 = vperm.xlu0 %5530, %v5492
    %v5532 = vpop.permute.xlu0 %5531
    %5535 = vset.pattern.permute.xlu0 0
    %5536 = vperm.xlu0 %5535, %v5494
    %v5537 = vpop.permute.xlu0 %5536
    %5540 = vset.pattern.permute.xlu0 0
    %5541 = vperm.xlu0 %5540, %v5496
    %v5542 = vpop.permute.xlu0 %5541
    %5545 = vset.pattern.permute.xlu0 0
    %5546 = vperm.xlu0 %5545, %v5498
    %v5547 = vpop.permute.xlu0 %5546
    %5550 = vset.pattern.permute.xlu0 0
    %5551 = vperm.xlu0 %5550, %v5500
    %v5552 = vpop.permute.xlu0 %5551
    %5555 = vset.pattern.permute.xlu0 0
    %5556 = vperm.xlu0 %5555, %v5502
    %v5557 = vpop.permute.xlu0 %5556
    %5560 = vset.pattern.permute.xlu0 0
    %5561 = vperm.xlu0 %5560, %v5504
    %v5562 = vpop.permute.xlu0 %5561
    %5565 = vset.pattern.permute.xlu0 0
    %5566 = vperm.xlu0 %5565, %v5506
    %v5567 = vpop.permute.xlu0 %5566
    %5570 = vset.pattern.permute.xlu0 0
    %5571 = vperm.xlu0 %5570, %v5508
    %v5572 = vpop.permute.xlu0 %5571
    %5575 = vset.pattern.permute.xlu0 0
    %5576 = vperm.xlu0 %5575, %v5510
    %v5577 = vpop.permute.xlu0 %5576
    %5580 = vset.pattern.permute.xlu0 0
    %5581 = vperm.xlu0 %5580, %v5512
    %v5582 = vpop.permute.xlu0 %5581
    %5585 = vset.pattern.permute.xlu0 0
    %5586 = vperm.xlu0 %5585, %v5514
    %v5587 = vpop.permute.xlu0 %5586
    %5590 = vset.pattern.permute.xlu0 0
    %5591 = vperm.xlu0 %5590, %v5516
    %v5592 = vpop.permute.xlu0 %5591
    %5595 = vset.pattern.permute.xlu0 0
    %5596 = vperm.xlu0 %5595, %v5518
    %v5597 = vpop.permute.xlu0 %5596
    %5599 = vst [vmem:[%s12] sm:$0xff] %v5522
    %5600 = vst [vmem:[%s12 + $0x8] sm:$0xff] %v5527
    %5601 = vst [vmem:[%s12 + $0x10] sm:$0xff] %v5532
    %5602 = vst [vmem:[%s12 + $0x18] sm:$0xff] %v5537
    %5603 = vst [vmem:[%s12 + $0x20] sm:$0xff] %v5542
    %5604 = vst [vmem:[%s12 + $0x28] sm:$0xff] %v5547
    %5605 = vst [vmem:[%s12 + $0x30] sm:$0xff] %v5552
    %5606 = vst [vmem:[%s12 + $0x38] sm:$0xff] %v5557
    %5607 = vst [vmem:[%s12 + $0x40] sm:$0xff] %v5562
    %5608 = vst [vmem:[%s12 + $0x48] sm:$0xff] %v5567
    %5609 = vst [vmem:[%s12 + $0x50] sm:$0xff] %v5572
    %5610 = vst [vmem:[%s12 + $0x58] sm:$0xff] %v5577
    %5611 = vst [vmem:[%s12 + $0x60] sm:$0xff] %v5582
    %5612 = vst [vmem:[%s12 + $0x68] sm:$0xff] %v5587
    %5613 = vst [vmem:[%s12 + $0x70] sm:$0xff] %v5592
    %5614 = vst [vmem:[%s12 + $0x78] sm:$0xff] %v5597
    // Predicated region
    $region70: #{discriminator_forward.1} parent=1 // pred_check
      _
    $region71: #{discriminator_forward.1} parent=1 // pred_check_branch
      %5616 = sbr.rel (0) target = $region73
    $region72: #{discriminator_forward.1} parent=1 // pred_region
      _
    $region73: #{discriminator_forward.1} parent=1 // pred_fallthru
      _
    // Predicated region
    $region74: #{discriminator_forward.1} parent=1 // pred_check
      _
    $region75: #{discriminator_forward.1} parent=1 // pred_check_branch
      %5618 = sbr.rel (0) target = $region77
    $region76: #{discriminator_forward.1} parent=1 // pred_region
      _
    $region77: #{discriminator_forward.1} parent=1 // pred_fallthru
      _
    %5619 = vsyncpa [#allocation4], 1
    %5620 = vsyncpa [#allocation6], 1
    %5621 = vsyncpa [#allocation9], 1

</llo_original>
